<compile_context>
chip_gen: v5e
topology: v5e:2x2
jax: 0.10.0
libtpu: 0.0.40
codegen_flags: <defaults>
</compile_context>

<pallas_src>
import functools

import jax
import jax.numpy as jnp
from jax import lax
from jax.experimental import pallas as pl
from jax.experimental.pallas import tpu as pltpu


# ----------------------------- Pallas kernel ------------------------------- #

def _fused_residual_block_kernel(
        x_ref, w1_ref, b1_ref, w2_ref, b2_ref, scale_ref,    # inputs
        o_ref,                                               # output
        xpad_ref, ypad_ref, p1_ref, p2_ref,                  # VMEM scratch
        *, K, H, W, TH, Cin, Cmid, Cout):
    """Fused conv1(+ReLU) -> conv2 -> residual for one (image, row-tile) step.

    x_ref   : (1, H, W, Cin)        full image, resident across the row-tile axis
    w1_ref  : (K*K*Cin, Cmid)       im2col weight for conv1
    b1_ref  : (1, Cmid)
    w2_ref  : (K*K*Cmid, Cout)      im2col weight for conv2
    b2_ref  : (1, Cout)
    scale_ref: (1,) in SMEM         res_scale
    o_ref   : (1, TH, W, Cout)      output row tile
    xpad_ref: (H+2p, W+2p, Cin)     zero-padded input (built in-kernel, no jnp.pad)
    ypad_ref: (H+2p, W+2p, Cmid)    zero-padded conv1+ReLU output (never hits HBM)
    p1_ref  : (H, W, K*K*Cin)       im2col patches for conv1 (full image)
    p2_ref  : (TH, W, K*K*Cmid)     im2col patches for conv2 (current row tile)
    """
    p = K // 2
    h = pl.program_id(1)
    h0 = h * TH

    # ---- once per image (first row tile): conv1 + bias + ReLU over full image
    @pl.when(h == 0)
    def _():
        # Zero the padded scratches (handles SAME padding; done per image so the
        # kernel is correct even when the batch axis is split across cores).
        xpad_ref[...] = jnp.zeros_like(xpad_ref)
        ypad_ref[...] = jnp.zeros_like(ypad_ref)
        xpad_ref[p:p + H, p:p + W, :] = x_ref[0].astype(xpad_ref.dtype)

        # im2col: gather the K*K shifted windows once, then a single MXU matmul
        # with contraction K*K*Cin instead of K*K tiny matmuls of contraction Cin.
        for dy in range(K):
            for dx in range(K):
                t = dy * K + dx
                p1_ref[:, :, t * Cin:(t + 1) * Cin] = (
                    xpad_ref[dy:dy + H, dx:dx + W, :].astype(p1_ref.dtype))
        y = lax.dot_general(
            p1_ref[...], w1_ref[...],
            dimension_numbers=(((2,), (0,)), ((), ())),
            preferred_element_type=jnp.float32)              # (H, W, Cmid) f32
        y = jnp.maximum(y + b1_ref[0], 0.0)                  # bias + ReLU in f32
        ypad_ref[p:p + H, p:p + W, :] = y.astype(ypad_ref.dtype)

    # ---- every row tile: conv2 + bias + scaled residual add ------------------
    for dy in range(K):
        for dx in range(K):
            t = dy * K + dx
            p2_ref[:, :, t * Cmid:(t + 1) * Cmid] = (
                ypad_ref[pl.ds(h0 + dy, TH), dx:dx + W, :].astype(p2_ref.dtype))
    z = lax.dot_general(
        p2_ref[...], w2_ref[...],
        dimension_numbers=(((2,), (0,)), ((), ())),
        preferred_element_type=jnp.float32)                  # (TH, W, Cout) f32
    z = z + b2_ref[0]

    res = x_ref[0, pl.ds(h0, TH), :, :].astype(jnp.float32)  # residual slice
    out = res + z * scale_ref[0]                             # res_scale from SMEM

    # TODO(synk): with tiny Cout the last dim (<128) forces masked stores; a
    # lane-dense packed output slab would need a lane-merging reshape that is
    # not reliably lowered by Mosaic, so the natural NHWC layout is kept.
    o_ref[...] = out[None].astype(o_ref.dtype)


# ------------------------------ JAX wrapper -------------------------------- #

def residual_block(x_nchw, params, res_scale=1.0, *, tile_h=None,
                   mxu_dtype=jnp.float32):
    """Forward pass of ResidualBlock. Input/output in PyTorch NCHW layout.

    mxu_dtype=jnp.bfloat16 uses bf16 MXU operands (f32 accumulation + f32
    epilogue) — the fast path on v6e/v7x.  Default f32 matches PyTorch exactly.
    """
    w1, b1, w2, b2 = params
    K = w1.shape[0]
    assert K % 2 == 1, "only odd kernel_size matches PyTorch padding=K//2"
    N, C, H, W = x_nchw.shape
    Cin, Cmid = w1.shape[2], w1.shape[3]
    Cout = w2.shape[3]
    assert Cin == C and w2.shape[2] == Cmid
    assert Cout == Cin, "residual add requires in_channels == out_channels"
    p = K // 2

    if tile_h is None:
        tile_h = 8 if H % 8 == 0 else H       # row tile; sweep upward for big H
    assert H % tile_h == 0
    nh = H // tile_h

    x = jnp.transpose(x_nchw, (0, 2, 3, 1))   # NCHW -> NHWC (channels on lanes)

    # im2col weight layout: row index = (dy*K + dx)*Cin + ci  (row-major reshape)
    w1r = w1.reshape(K * K * Cin, Cmid).astype(mxu_dtype)
    w2r = w2.reshape(K * K * Cmid, Cout).astype(mxu_dtype)
    b1r = b1.reshape(1, Cmid).astype(jnp.float32)
    b2r = b2.reshape(1, Cout).astype(jnp.float32)
    scale = jnp.asarray([res_scale], jnp.float32)   # SMEM scalar -> no retrace

    kernel = functools.partial(
        _fused_residual_block_kernel,
        K=K, H=H, W=W, TH=tile_h, Cin=Cin, Cmid=Cmid, Cout=Cout)

    out = pl.pallas_call(
        kernel,
        out_shape=jax.ShapeDtypeStruct((N, H, W, Cout), x.dtype),
        grid=(N, nh),
        in_specs=[
            # Full image; index_map ignores the row-tile axis so the block stays
            # resident in VMEM across all row tiles of the same image.
            pl.BlockSpec((1, H, W, Cin), lambda n, h: (n, 0, 0, 0)),
            pl.BlockSpec((K * K * Cin, Cmid), lambda n, h: (0, 0)),
            pl.BlockSpec((1, Cmid), lambda n, h: (0, 0)),
            pl.BlockSpec((K * K * Cmid, Cout), lambda n, h: (0, 0)),
            pl.BlockSpec((1, Cout), lambda n, h: (0, 0)),
            pl.BlockSpec(memory_space=pltpu.MemorySpace.SMEM),   # res_scale
        ],
        out_specs=pl.BlockSpec((1, tile_h, W, Cout), lambda n, h: (n, h, 0, 0)),
        scratch_shapes=[
            pltpu.VMEM((H + 2 * p, W + 2 * p, Cin), jnp.float32),    # padded x
            pltpu.VMEM((H + 2 * p, W + 2 * p, Cmid), jnp.float32),   # padded y
            pltpu.VMEM((H, W, K * K * Cin), mxu_dtype),              # im2col conv1
            pltpu.VMEM((tile_h, W, K * K * Cmid), mxu_dtype),        # im2col conv2
        ],
        compiler_params=pltpu.CompilerParams(
            dimension_semantics=("parallel", "arbitrary"),
            vmem_limit_bytes=32 * 1024 * 1024),
    )(x, w1r, b1r, w2r, b2r, scale)

    # TODO(synk): for very large images, conv1 should also be row-tiled with
    # halo recompute so the full-image scratches do not grow with H.
    return jnp.transpose(out, (0, 3, 1, 2))   # NHWC -> NCHW


# --------------------------- init & reference ------------------------------ #

def init_params(key, in_channels, out_channels, kernel_size):
    """Deterministic init mimicking PyTorch Conv2d defaults (uniform ±1/sqrt(fan_in))."""
    k1, k2, k3, k4 = jax.random.split(key, 4)
    fan1 = in_channels * kernel_size * kernel_size
    fan2 = out_channels * kernel_size * kernel_size
    bd1 = 1.0 / jnp.sqrt(fan1)
    bd2 = 1.0 / jnp.sqrt(fan2)
    w1 = jax.random.uniform(k1, (kernel_size, kernel_size, in_channels, out_channels),
                            jnp.float32, -bd1, bd1)
    b1 = jax.random.uniform(k2, (out_channels,), jnp.float32, -bd1, bd1)
    w2 = jax.random.uniform(k3, (kernel_size, kernel_size, out_channels, out_channels),
                            jnp.float32, -bd2, bd2)
    b2 = jax.random.uniform(k4, (out_channels,), jnp.float32, -bd2, bd2)
    return (w1, b1, w2, b2)


def _reference(x_nchw, params, res_scale):
    """Pure-JAX reference (lax.conv) for verification."""
    w1, b1, w2, b2 = params
    x = jnp.transpose(x_nchw, (0, 2, 3, 1))
    dn = ("NHWC", "HWIO", "NHWC")
    y = lax.conv_general_dilated(x, w1, (1, 1), "SAME", dimension_numbers=dn) + b1
    y = jnp.maximum(y, 0.0)
    z = lax.conv_general_dilated(y, w2, (1, 1), "SAME", dimension_numbers=dn) + b2
    out = x + z * res_scale
    return jnp.transpose(out, (0, 3, 1, 2))


if __name__ == "__main__":
    key = jax.random.PRNGKey(0)
    kx, kp = jax.random.split(key)

    N, C, H, W = 2, 4, 16, 16          # in_channels == out_channels (residual add)
    kernel_size = 3
    res_scale = 0.5

    x = jax.random.normal(kx, (N, C, H, W), jnp.float32)
    params = init_params(kp, C, C, kernel_size)

    ref = _reference(x, params, res_scale)

    # f32 MXU path (default, numerically tight vs. the reference).
    out = jax.block_until_ready(residual_block(x, params, res_scale=res_scale))
    assert out.shape == (N, C, H, W)
    assert jnp.allclose(out, ref, rtol=1e-4, atol=1e-4)

    # bf16 MXU operands, f32 accumulation/epilogue (v6e / v7x fast path).
    out_bf16 = jax.block_until_ready(
        residual_block(x, params, res_scale=res_scale, mxu_dtype=jnp.bfloat16))
    assert jnp.allclose(out_bf16, ref, rtol=1e-1, atol=1e-1)

    print("KERNEL_OK")
</pallas_src>

<mosaic_0001>
module attributes {stable_mosaic.version = 11 : i64} {
  func.func @_fused_residual_block_kernel(%arg0: i32, %arg1: i32, %arg2: memref<1x16x16x4xf32, #tpu.memory_space<vmem>>, %arg3: memref<36x4xf32, #tpu.memory_space<vmem>>, %arg4: memref<1x4xf32, #tpu.memory_space<vmem>>, %arg5: memref<36x4xf32, #tpu.memory_space<vmem>>, %arg6: memref<1x4xf32, #tpu.memory_space<vmem>>, %arg7: memref<1xf32, #tpu.memory_space<smem>>, %arg8: memref<1x8x16x4xf32, #tpu.memory_space<vmem>>, %arg9: memref<18x18x4xf32, #tpu.memory_space<vmem>>, %arg10: memref<18x18x4xf32, #tpu.memory_space<vmem>>, %arg11: memref<16x16x36xf32, #tpu.memory_space<vmem>>, %arg12: memref<8x16x36xf32, #tpu.memory_space<vmem>>) attributes {dimension_semantics = [#tpu.dimension_semantics<parallel>, #tpu.dimension_semantics<arbitrary>], iteration_bounds = array<i64: 2, 2>, scalar_prefetch = 0 : i64, scratch_operands = 4 : i64, tpu.core_type = #tpu.core_type<tc>, window_params = [{transform_indices = @transform_0, window_bounds = array<i64: 1, 16, 16, 4>}, {pipeline_mode = #tpu.pipeline_mode<synchronous>, transform_indices = @transform_1, window_bounds = array<i64: 36, 4>}, {pipeline_mode = #tpu.pipeline_mode<synchronous>, transform_indices = @transform_2, window_bounds = array<i64: 1, 4>}, {pipeline_mode = #tpu.pipeline_mode<synchronous>, transform_indices = @transform_3, window_bounds = array<i64: 36, 4>}, {pipeline_mode = #tpu.pipeline_mode<synchronous>, transform_indices = @transform_4, window_bounds = array<i64: 1, 4>}, {transform_indices = @transform_5, window_bounds = array<i64: 1>}, {transform_indices = @transform_6, window_bounds = array<i64: 1, 8, 16, 4>}]} {
    %c8_i32 = arith.constant 8 : i32
    %0 = arith.muli %arg1, %c8_i32 : i32
    %c0_i32 = arith.constant 0 : i32
    %1 = arith.cmpi eq, %arg1, %c0_i32 : i32
    %2 = arith.extui %1 : i1 to i32
    %c0_i32_0 = arith.constant 0 : i32
    %3 = arith.cmpi ne, %2, %c0_i32_0 : i32
    scf.if %3 {
      %cst_57 = arith.constant 0.000000e+00 : f32
      %57 = vector.broadcast %cst_57 : f32 to vector<18x18x4xf32>
      %c0_58 = arith.constant 0 : index
      %c0_59 = arith.constant 0 : index
      %c0_60 = arith.constant 0 : index
      %58 = vector.load %arg9[%c0_58, %c0_59, %c0_60] : memref<18x18x4xf32, #tpu.memory_space<vmem>>, vector<18x18x4xf32>
      tpu.vector_store %arg9[%c0_58, %c0_59, %c0_60], %57 {strides = array<i32>} : memref<18x18x4xf32, #tpu.memory_space<vmem>>, vector<18x18x4xf32>,
      %cst_61 = arith.constant 0.000000e+00 : f32
      %59 = vector.broadcast %cst_61 : f32 to vector<18x18x4xf32>
      %c0_62 = arith.constant 0 : index
      %c0_63 = arith.constant 0 : index
      %c0_64 = arith.constant 0 : index
      %60 = vector.load %arg10[%c0_62, %c0_63, %c0_64] : memref<18x18x4xf32, #tpu.memory_space<vmem>>, vector<18x18x4xf32>
      tpu.vector_store %arg10[%c0_62, %c0_63, %c0_64], %59 {strides = array<i32>} : memref<18x18x4xf32, #tpu.memory_space<vmem>>, vector<18x18x4xf32>,
      %c0_65 = arith.constant 0 : index
      %c0_66 = arith.constant 0 : index
      %c0_67 = arith.constant 0 : index
      %c0_68 = arith.constant 0 : index
      %61 = vector.load %arg2[%c0_65, %c0_66, %c0_67, %c0_68] : memref<1x16x16x4xf32, #tpu.memory_space<vmem>>, vector<1x16x16x4xf32>
      %62 = vector.shape_cast %61 : vector<1x16x16x4xf32> to vector<16x16x4xf32>
      %c1_69 = arith.constant 1 : index
      %c1_70 = arith.constant 1 : index
      %c0_71 = arith.constant 0 : index
      %63 = vector.load %arg9[%c1_69, %c1_70, %c0_71] : memref<18x18x4xf32, #tpu.memory_space<vmem>>, vector<16x16x4xf32>
      tpu.vector_store %arg9[%c1_69, %c1_70, %c0_71], %62 {strides = array<i32>} : memref<18x18x4xf32, #tpu.memory_space<vmem>>, vector<16x16x4xf32>,
      %c0_72 = arith.constant 0 : index
      %c0_73 = arith.constant 0 : index
      %c0_74 = arith.constant 0 : index
      %64 = vector.load %arg9[%c0_72, %c0_73, %c0_74] : memref<18x18x4xf32, #tpu.memory_space<vmem>>, vector<16x16x4xf32>
      %c0_75 = arith.constant 0 : index
      %c0_76 = arith.constant 0 : index
      %c0_77 = arith.constant 0 : index
      %65 = vector.load %arg11[%c0_75, %c0_76, %c0_77] : memref<16x16x36xf32, #tpu.memory_space<vmem>>, vector<16x16x4xf32>
      tpu.vector_store %arg11[%c0_75, %c0_76, %c0_77], %64 {strides = array<i32>} : memref<16x16x36xf32, #tpu.memory_space<vmem>>, vector<16x16x4xf32>,
      %c0_78 = arith.constant 0 : index
      %c1_79 = arith.constant 1 : index
      %c0_80 = arith.constant 0 : index
      %66 = vector.load %arg9[%c0_78, %c1_79, %c0_80] : memref<18x18x4xf32, #tpu.memory_space<vmem>>, vector<16x16x4xf32>
      %c0_81 = arith.constant 0 : index
      %c0_82 = arith.constant 0 : index
      %c4_83 = arith.constant 4 : index
      %67 = vector.load %arg11[%c0_81, %c0_82, %c4_83] : memref<16x16x36xf32, #tpu.memory_space<vmem>>, vector<16x16x4xf32>
      tpu.vector_store %arg11[%c0_81, %c0_82, %c4_83], %66 {strides = array<i32>} : memref<16x16x36xf32, #tpu.memory_space<vmem>>, vector<16x16x4xf32>,
      %c0_84 = arith.constant 0 : index
      %c2_85 = arith.constant 2 : index
      %c0_86 = arith.constant 0 : index
      %68 = vector.load %arg9[%c0_84, %c2_85, %c0_86] : memref<18x18x4xf32, #tpu.memory_space<vmem>>, vector<16x16x4xf32>
      %c0_87 = arith.constant 0 : index
      %c0_88 = arith.constant 0 : index
      %c8_89 = arith.constant 8 : index
      %69 = vector.load %arg11[%c0_87, %c0_88, %c8_89] : memref<16x16x36xf32, #tpu.memory_space<vmem>>, vector<16x16x4xf32>
      tpu.vector_store %arg11[%c0_87, %c0_88, %c8_89], %68 {strides = array<i32>} : memref<16x16x36xf32, #tpu.memory_space<vmem>>, vector<16x16x4xf32>,
      %c1_90 = arith.constant 1 : index
      %c0_91 = arith.constant 0 : index
      %c0_92 = arith.constant 0 : index
      %70 = vector.load %arg9[%c1_90, %c0_91, %c0_92] : memref<18x18x4xf32, #tpu.memory_space<vmem>>, vector<16x16x4xf32>
      %c0_93 = arith.constant 0 : index
      %c0_94 = arith.constant 0 : index
      %c12_95 = arith.constant 12 : index
      %71 = vector.load %arg11[%c0_93, %c0_94, %c12_95] : memref<16x16x36xf32, #tpu.memory_space<vmem>>, vector<16x16x4xf32>
      tpu.vector_store %arg11[%c0_93, %c0_94, %c12_95], %70 {strides = array<i32>} : memref<16x16x36xf32, #tpu.memory_space<vmem>>, vector<16x16x4xf32>,
      %c1_96 = arith.constant 1 : index
      %c1_97 = arith.constant 1 : index
      %c0_98 = arith.constant 0 : index
      %72 = vector.load %arg9[%c1_96, %c1_97, %c0_98] : memref<18x18x4xf32, #tpu.memory_space<vmem>>, vector<16x16x4xf32>
      %c0_99 = arith.constant 0 : index
      %c0_100 = arith.constant 0 : index
      %c16_101 = arith.constant 16 : index
      %73 = vector.load %arg11[%c0_99, %c0_100, %c16_101] : memref<16x16x36xf32, #tpu.memory_space<vmem>>, vector<16x16x4xf32>
      tpu.vector_store %arg11[%c0_99, %c0_100, %c16_101], %72 {strides = array<i32>} : memref<16x16x36xf32, #tpu.memory_space<vmem>>, vector<16x16x4xf32>,
      %c1_102 = arith.constant 1 : index
      %c2_103 = arith.constant 2 : index
      %c0_104 = arith.constant 0 : index
      %74 = vector.load %arg9[%c1_102, %c2_103, %c0_104] : memref<18x18x4xf32, #tpu.memory_space<vmem>>, vector<16x16x4xf32>
      %c0_105 = arith.constant 0 : index
      %c0_106 = arith.constant 0 : index
      %c20_107 = arith.constant 20 : index
      %75 = vector.load %arg11[%c0_105, %c0_106, %c20_107] : memref<16x16x36xf32, #tpu.memory_space<vmem>>, vector<16x16x4xf32>
      tpu.vector_store %arg11[%c0_105, %c0_106, %c20_107], %74 {strides = array<i32>} : memref<16x16x36xf32, #tpu.memory_space<vmem>>, vector<16x16x4xf32>,
      %c2_108 = arith.constant 2 : index
      %c0_109 = arith.constant 0 : index
      %c0_110 = arith.constant 0 : index
      %76 = vector.load %arg9[%c2_108, %c0_109, %c0_110] : memref<18x18x4xf32, #tpu.memory_space<vmem>>, vector<16x16x4xf32>
      %c0_111 = arith.constant 0 : index
      %c0_112 = arith.constant 0 : index
      %c24_113 = arith.constant 24 : index
      %77 = vector.load %arg11[%c0_111, %c0_112, %c24_113] : memref<16x16x36xf32, #tpu.memory_space<vmem>>, vector<16x16x4xf32>
      tpu.vector_store %arg11[%c0_111, %c0_112, %c24_113], %76 {strides = array<i32>} : memref<16x16x36xf32, #tpu.memory_space<vmem>>, vector<16x16x4xf32>,
      %c2_114 = arith.constant 2 : index
      %c1_115 = arith.constant 1 : index
      %c0_116 = arith.constant 0 : index
      %78 = vector.load %arg9[%c2_114, %c1_115, %c0_116] : memref<18x18x4xf32, #tpu.memory_space<vmem>>, vector<16x16x4xf32>
      %c0_117 = arith.constant 0 : index
      %c0_118 = arith.constant 0 : index
      %c28_119 = arith.constant 28 : index
      %79 = vector.load %arg11[%c0_117, %c0_118, %c28_119] : memref<16x16x36xf32, #tpu.memory_space<vmem>>, vector<16x16x4xf32>
      tpu.vector_store %arg11[%c0_117, %c0_118, %c28_119], %78 {strides = array<i32>} : memref<16x16x36xf32, #tpu.memory_space<vmem>>, vector<16x16x4xf32>,
      %c2_120 = arith.constant 2 : index
      %c2_121 = arith.constant 2 : index
      %c0_122 = arith.constant 0 : index
      %80 = vector.load %arg9[%c2_120, %c2_121, %c0_122] : memref<18x18x4xf32, #tpu.memory_space<vmem>>, vector<16x16x4xf32>
      %c0_123 = arith.constant 0 : index
      %c0_124 = arith.constant 0 : index
      %c32_125 = arith.constant 32 : index
      %81 = vector.load %arg11[%c0_123, %c0_124, %c32_125] : memref<16x16x36xf32, #tpu.memory_space<vmem>>, vector<16x16x4xf32>
      tpu.vector_store %arg11[%c0_123, %c0_124, %c32_125], %80 {strides = array<i32>} : memref<16x16x36xf32, #tpu.memory_space<vmem>>, vector<16x16x4xf32>,
      %c0_126 = arith.constant 0 : index
      %c0_127 = arith.constant 0 : index
      %c0_128 = arith.constant 0 : index
      %82 = vector.load %arg11[%c0_126, %c0_127, %c0_128] : memref<16x16x36xf32, #tpu.memory_space<vmem>>, vector<16x16x36xf32>
      %c0_129 = arith.constant 0 : index
      %c0_130 = arith.constant 0 : index
      %83 = vector.load %arg3[%c0_129, %c0_130] : memref<36x4xf32, #tpu.memory_space<vmem>>, vector<36x4xf32>
      %cst_131 = arith.constant dense<0.000000e+00> : vector<16x16x4xf32>
      %84 = tpu.matmul %82, %83, %cst_131 {dimension_numbers = #tpu.dot_dimension_numbers<[2], [0], [0, 1], [1], [0, 0, 0, 1, 1, 1], [], []>} : vector<16x16x36xf32>, vector<36x4xf32>, vector<16x16x4xf32> -> vector<16x16x4xf32>
      %c0_132 = arith.constant 0 : index
      %c0_133 = arith.constant 0 : index
      %85 = vector.load %arg4[%c0_132, %c0_133] : memref<1x4xf32, #tpu.memory_space<vmem>>, vector<1x4xf32>
      %86 = vector.shape_cast %85 : vector<1x4xf32> to vector<4xf32>
      %87 = vector.shape_cast %86 : vector<4xf32> to vector<1x1x4xf32>
      %88 = vector.broadcast %87 : vector<1x1x4xf32> to vector<16x16x4xf32>
      %89 = arith.addf %84, %88 : vector<16x16x4xf32>
      %cst_134 = arith.constant 0.000000e+00 : f32
      %90 = vector.broadcast %cst_134 : f32 to vector<16x16x4xf32>
      %91 = arith.maximumf %89, %90 : vector<16x16x4xf32>
      %c1_135 = arith.constant 1 : index
      %c1_136 = arith.constant 1 : index
      %c0_137 = arith.constant 0 : index
      %92 = vector.load %arg10[%c1_135, %c1_136, %c0_137] : memref<18x18x4xf32, #tpu.memory_space<vmem>>, vector<16x16x4xf32>
      tpu.vector_store %arg10[%c1_135, %c1_136, %c0_137], %91 {strides = array<i32>} : memref<18x18x4xf32, #tpu.memory_space<vmem>>, vector<16x16x4xf32>,
    } else {
    }
    %c0_i32_1 = arith.constant 0 : i32
    %4 = arith.addi %0, %c0_i32_1 : i32
    %5 = arith.index_cast %4 : i32 to index
    %c0 = arith.constant 0 : index
    %c0_2 = arith.constant 0 : index
    %6 = vector.load %arg10[%5, %c0, %c0_2] : memref<18x18x4xf32, #tpu.memory_space<vmem>>, vector<8x16x4xf32>
    %c0_3 = arith.constant 0 : index
    %c0_4 = arith.constant 0 : index
    %c0_5 = arith.constant 0 : index
    %7 = vector.load %arg12[%c0_3, %c0_4, %c0_5] : memref<8x16x36xf32, #tpu.memory_space<vmem>>, vector<8x16x4xf32>
    tpu.vector_store %arg12[%c0_3, %c0_4, %c0_5], %6 {strides = array<i32>} : memref<8x16x36xf32, #tpu.memory_space<vmem>>, vector<8x16x4xf32>,
    %c0_i32_6 = arith.constant 0 : i32
    %8 = arith.addi %0, %c0_i32_6 : i32
    %9 = arith.index_cast %8 : i32 to index
    %c1 = arith.constant 1 : index
    %c0_7 = arith.constant 0 : index
    %10 = vector.load %arg10[%9, %c1, %c0_7] : memref<18x18x4xf32, #tpu.memory_space<vmem>>, vector<8x16x4xf32>
    %c0_8 = arith.constant 0 : index
    %c0_9 = arith.constant 0 : index
    %c4 = arith.constant 4 : index
    %11 = vector.load %arg12[%c0_8, %c0_9, %c4] : memref<8x16x36xf32, #tpu.memory_space<vmem>>, vector<8x16x4xf32>
    tpu.vector_store %arg12[%c0_8, %c0_9, %c4], %10 {strides = array<i32>} : memref<8x16x36xf32, #tpu.memory_space<vmem>>, vector<8x16x4xf32>,
    %c0_i32_10 = arith.constant 0 : i32
    %12 = arith.addi %0, %c0_i32_10 : i32
    %13 = arith.index_cast %12 : i32 to index
    %c2 = arith.constant 2 : index
    %c0_11 = arith.constant 0 : index
    %14 = vector.load %arg10[%13, %c2, %c0_11] : memref<18x18x4xf32, #tpu.memory_space<vmem>>, vector<8x16x4xf32>
    %c0_12 = arith.constant 0 : index
    %c0_13 = arith.constant 0 : index
    %c8 = arith.constant 8 : index
    %15 = vector.load %arg12[%c0_12, %c0_13, %c8] : memref<8x16x36xf32, #tpu.memory_space<vmem>>, vector<8x16x4xf32>
    tpu.vector_store %arg12[%c0_12, %c0_13, %c8], %14 {strides = array<i32>} : memref<8x16x36xf32, #tpu.memory_space<vmem>>, vector<8x16x4xf32>,
    %c1_i32 = arith.constant 1 : i32
    %16 = arith.addi %0, %c1_i32 : i32
    %17 = arith.index_cast %16 : i32 to index
    %c0_14 = arith.constant 0 : index
    %c0_15 = arith.constant 0 : index
    %18 = vector.load %arg10[%17, %c0_14, %c0_15] : memref<18x18x4xf32, #tpu.memory_space<vmem>>, vector<8x16x4xf32>
    %c0_16 = arith.constant 0 : index
    %c0_17 = arith.constant 0 : index
    %c12 = arith.constant 12 : index
    %19 = vector.load %arg12[%c0_16, %c0_17, %c12] : memref<8x16x36xf32, #tpu.memory_space<vmem>>, vector<8x16x4xf32>
    tpu.vector_store %arg12[%c0_16, %c0_17, %c12], %18 {strides = array<i32>} : memref<8x16x36xf32, #tpu.memory_space<vmem>>, vector<8x16x4xf32>,
    %c1_i32_18 = arith.constant 1 : i32
    %20 = arith.addi %0, %c1_i32_18 : i32
    %21 = arith.index_cast %20 : i32 to index
    %c1_19 = arith.constant 1 : index
    %c0_20 = arith.constant 0 : index
    %22 = vector.load %arg10[%21, %c1_19, %c0_20] : memref<18x18x4xf32, #tpu.memory_space<vmem>>, vector<8x16x4xf32>
    %c0_21 = arith.constant 0 : index
    %c0_22 = arith.constant 0 : index
    %c16 = arith.constant 16 : index
    %23 = vector.load %arg12[%c0_21, %c0_22, %c16] : memref<8x16x36xf32, #tpu.memory_space<vmem>>, vector<8x16x4xf32>
    tpu.vector_store %arg12[%c0_21, %c0_22, %c16], %22 {strides = array<i32>} : memref<8x16x36xf32, #tpu.memory_space<vmem>>, vector<8x16x4xf32>,
    %c1_i32_23 = arith.constant 1 : i32
    %24 = arith.addi %0, %c1_i32_23 : i32
    %25 = arith.index_cast %24 : i32 to index
    %c2_24 = arith.constant 2 : index
    %c0_25 = arith.constant 0 : index
    %26 = vector.load %arg10[%25, %c2_24, %c0_25] : memref<18x18x4xf32, #tpu.memory_space<vmem>>, vector<8x16x4xf32>
    %c0_26 = arith.constant 0 : index
    %c0_27 = arith.constant 0 : index
    %c20 = arith.constant 20 : index
    %27 = vector.load %arg12[%c0_26, %c0_27, %c20] : memref<8x16x36xf32, #tpu.memory_space<vmem>>, vector<8x16x4xf32>
    tpu.vector_store %arg12[%c0_26, %c0_27, %c20], %26 {strides = array<i32>} : memref<8x16x36xf32, #tpu.memory_space<vmem>>, vector<8x16x4xf32>,
    %c2_i32 = arith.constant 2 : i32
    %28 = arith.addi %0, %c2_i32 : i32
    %29 = arith.index_cast %28 : i32 to index
    %c0_28 = arith.constant 0 : index
    %c0_29 = arith.constant 0 : index
    %30 = vector.load %arg10[%29, %c0_28, %c0_29] : memref<18x18x4xf32, #tpu.memory_space<vmem>>, vector<8x16x4xf32>
    %c0_30 = arith.constant 0 : index
    %c0_31 = arith.constant 0 : index
    %c24 = arith.constant 24 : index
    %31 = vector.load %arg12[%c0_30, %c0_31, %c24] : memref<8x16x36xf32, #tpu.memory_space<vmem>>, vector<8x16x4xf32>
    tpu.vector_store %arg12[%c0_30, %c0_31, %c24], %30 {strides = array<i32>} : memref<8x16x36xf32, #tpu.memory_space<vmem>>, vector<8x16x4xf32>,
    %c2_i32_32 = arith.constant 2 : i32
    %32 = arith.addi %0, %c2_i32_32 : i32
    %33 = arith.index_cast %32 : i32 to index
    %c1_33 = arith.constant 1 : index
    %c0_34 = arith.constant 0 : index
    %34 = vector.load %arg10[%33, %c1_33, %c0_34] : memref<18x18x4xf32, #tpu.memory_space<vmem>>, vector<8x16x4xf32>
    %c0_35 = arith.constant 0 : index
    %c0_36 = arith.constant 0 : index
    %c28 = arith.constant 28 : index
    %35 = vector.load %arg12[%c0_35, %c0_36, %c28] : memref<8x16x36xf32, #tpu.memory_space<vmem>>, vector<8x16x4xf32>
    tpu.vector_store %arg12[%c0_35, %c0_36, %c28], %34 {strides = array<i32>} : memref<8x16x36xf32, #tpu.memory_space<vmem>>, vector<8x16x4xf32>,
    %c2_i32_37 = arith.constant 2 : i32
    %36 = arith.addi %0, %c2_i32_37 : i32
    %37 = arith.index_cast %36 : i32 to index
    %c2_38 = arith.constant 2 : index
    %c0_39 = arith.constant 0 : index
    %38 = vector.load %arg10[%37, %c2_38, %c0_39] : memref<18x18x4xf32, #tpu.memory_space<vmem>>, vector<8x16x4xf32>
    %c0_40 = arith.constant 0 : index
    %c0_41 = arith.constant 0 : index
    %c32 = arith.constant 32 : index
    %39 = vector.load %arg12[%c0_40, %c0_41, %c32] : memref<8x16x36xf32, #tpu.memory_space<vmem>>, vector<8x16x4xf32>
    tpu.vector_store %arg12[%c0_40, %c0_41, %c32], %38 {strides = array<i32>} : memref<8x16x36xf32, #tpu.memory_space<vmem>>, vector<8x16x4xf32>,
    %c0_42 = arith.constant 0 : index
    %c0_43 = arith.constant 0 : index
    %c0_44 = arith.constant 0 : index
    %40 = vector.load %arg12[%c0_42, %c0_43, %c0_44] : memref<8x16x36xf32, #tpu.memory_space<vmem>>, vector<8x16x36xf32>
    %c0_45 = arith.constant 0 : index
    %c0_46 = arith.constant 0 : index
    %41 = vector.load %arg5[%c0_45, %c0_46] : memref<36x4xf32, #tpu.memory_space<vmem>>, vector<36x4xf32>
    %cst = arith.constant dense<0.000000e+00> : vector<8x16x4xf32>
    %42 = tpu.matmul %40, %41, %cst {dimension_numbers = #tpu.dot_dimension_numbers<[2], [0], [0, 1], [1], [0, 0, 0, 1, 1, 1], [], []>} : vector<8x16x36xf32>, vector<36x4xf32>, vector<8x16x4xf32> -> vector<8x16x4xf32>
    %c0_47 = arith.constant 0 : index
    %c0_48 = arith.constant 0 : index
    %43 = vector.load %arg6[%c0_47, %c0_48] : memref<1x4xf32, #tpu.memory_space<vmem>>, vector<1x4xf32>
    %44 = vector.shape_cast %43 : vector<1x4xf32> to vector<4xf32>
    %45 = vector.shape_cast %44 : vector<4xf32> to vector<1x1x4xf32>
    %46 = vector.broadcast %45 : vector<1x1x4xf32> to vector<8x16x4xf32>
    %47 = arith.addf %42, %46 : vector<8x16x4xf32>
    %c0_49 = arith.constant 0 : index
    %48 = arith.index_cast %0 : i32 to index
    %c0_50 = arith.constant 0 : index
    %c0_51 = arith.constant 0 : index
    %49 = vector.load %arg2[%c0_49, %48, %c0_50, %c0_51] : memref<1x16x16x4xf32, #tpu.memory_space<vmem>>, vector<1x8x16x4xf32>
    %50 = vector.shape_cast %49 : vector<1x8x16x4xf32> to vector<8x16x4xf32>
    %c0_52 = arith.constant 0 : index
    %51 = memref.load %arg7[%c0_52] : memref<1xf32, #tpu.memory_space<smem>>
    %52 = vector.broadcast %51 : f32 to vector<8x16x4xf32>
    %53 = arith.mulf %47, %52 : vector<8x16x4xf32>
    %54 = arith.addf %50, %53 : vector<8x16x4xf32>
    %55 = vector.shape_cast %54 : vector<8x16x4xf32> to vector<1x8x16x4xf32>
    %c0_53 = arith.constant 0 : index
    %c0_54 = arith.constant 0 : index
    %c0_55 = arith.constant 0 : index
    %c0_56 = arith.constant 0 : index
    %56 = vector.load %arg8[%c0_53, %c0_54, %c0_55, %c0_56] : memref<1x8x16x4xf32, #tpu.memory_space<vmem>>, vector<1x8x16x4xf32>
    tpu.vector_store %arg8[%c0_53, %c0_54, %c0_55, %c0_56], %55 {strides = array<i32>} : memref<1x8x16x4xf32, #tpu.memory_space<vmem>>, vector<1x8x16x4xf32>,
    return
  }
  func.func @transform_0(%arg0: i32, %arg1: i32) -> (i32, i32, i32, i32) {
    %c0_i32 = arith.constant 0 : i32
    %c0_i32_0 = arith.constant 0 : i32
    %c0_i32_1 = arith.constant 0 : i32
    %c0_i32_2 = arith.constant 0 : i32
    return %arg0, %c0_i32, %c0_i32_0, %c0_i32_1 : i32, i32, i32, i32
  }
  func.func @transform_1(%arg0: i32, %arg1: i32) -> (i32, i32) {
    %c0_i32 = arith.constant 0 : i32
    %c0_i32_0 = arith.constant 0 : i32
    %c0_i32_1 = arith.constant 0 : i32
    return %c0_i32, %c0_i32_0 : i32, i32
  }
  func.func @transform_2(%arg0: i32, %arg1: i32) -> (i32, i32) {
    %c0_i32 = arith.constant 0 : i32
    %c0_i32_0 = arith.constant 0 : i32
    %c0_i32_1 = arith.constant 0 : i32
    return %c0_i32, %c0_i32_0 : i32, i32
  }
  func.func @transform_3(%arg0: i32, %arg1: i32) -> (i32, i32) {
    %c0_i32 = arith.constant 0 : i32
    %c0_i32_0 = arith.constant 0 : i32
    %c0_i32_1 = arith.constant 0 : i32
    return %c0_i32, %c0_i32_0 : i32, i32
  }
  func.func @transform_4(%arg0: i32, %arg1: i32) -> (i32, i32) {
    %c0_i32 = arith.constant 0 : i32
    %c0_i32_0 = arith.constant 0 : i32
    %c0_i32_1 = arith.constant 0 : i32
    return %c0_i32, %c0_i32_0 : i32, i32
  }
  func.func @transform_5(%arg0: i32, %arg1: i32) -> i32 {
    %c0_i32 = arith.constant 0 : i32
    %c0_i32_0 = arith.constant 0 : i32
    return %c0_i32 : i32
  }
  func.func @transform_6(%arg0: i32, %arg1: i32) -> (i32, i32, i32, i32) {
    %c0_i32 = arith.constant 0 : i32
    %c0_i32_0 = arith.constant 0 : i32
    %c0_i32_1 = arith.constant 0 : i32
    return %arg0, %arg1, %c0_i32, %c0_i32_0 : i32, i32, i32, i32
  }
}

</mosaic_0001>

<llo_original>
// kernel: tpu_custom_call.1
$region0: #{tpu_custom_call.1}
  #allocation0 [shape = 'u32[]', space=smem, size = 0x4, offset = 0x4, fixed_abs, tag = 'smem constant byte address 0x4 - core index']
  #allocation1 [shape = 'u32[72,128]{1,0:T(1,128)}', space=vmem, size = 0x9000, scoped, tag = 'internal scratch']
  #allocation2 [shape = 'f32[18,18,4]{2,1,0:T(8,128)}', space=vmem, size = 0x36000, scoped, tag = 'scratch operand']
  #allocation3 [shape = 'f32[18,18,4]{2,1,0:T(8,128)}', space=vmem, size = 0x36000, scoped, tag = 'scratch operand']
  #allocation4 [shape = 'f32[16,16,36]{2,1,0:T(8,128)}', space=vmem, size = 0x20000, scoped, tag = 'scratch operand']
  #allocation5 [shape = 'f32[8,16,36]{2,1,0:T(8,128)}', space=vmem, size = 0x10000, scoped, tag = 'scratch operand']
  #allocation6 [shape = 'f32[1]{0:T(128)S(6)}', space=smem, size = 0x200, scoped, tag = 'scoped memory for tpu_custom_call.1']
  %s0 = inlined_call_operand.vmem [shape: f32[2,16,16,4], index: 0, kind: input, shape index: {}]
  %s1 = inlined_call_operand.vmem [shape: f32[36,4], index: 1, kind: input, shape index: {}]
  %s2 = inlined_call_operand.vmem [shape: f32[1,4], index: 2, kind: input, shape index: {}]
  %s3 = inlined_call_operand.vmem [shape: f32[36,4], index: 3, kind: input, shape index: {}]
  %s4 = inlined_call_operand.vmem [shape: f32[1,4], index: 4, kind: input, shape index: {}]
  %s5 = inlined_call_operand.<no memory space> [shape: f32[1], index: 5, kind: input, shape index: {}]
  %s6 = inlined_call_operand.vmem [shape: f32[2,16,16,4], index: 6, kind: output, shape index: {}]
  %s7 = sld [smem:[#allocation0]]
  $region61: #{tpu_custom_call.1} parent=0
    _
  %s9 = ssub.s32 1, %s7
  %s10 = scalar_select 0, %s9, %s7
  %11 = sst [smem:[#allocation6]] %s5
  loop: start=0, step=1, limit=6
  $region2: #{tpu_custom_call.1} parent=0 // loop_pre_header
    _
  $region3: #{tpu_custom_call.1} parent=0 // loop_header
    %s13 = sphi 0, %s17
    %p14 = scmp.ge.s32.totalorder %s13, 6
    %s20 = sphi 0, %s32
    %s21 = sphi 0, %s28
    %s22 = sphi 0, %s20
    %s23 = sphi 0, %s21
    %s24 = sphi 0, %s22
    %s25 = sphi 0, %s23
    %s35 = sphi 0, %s37
    %s38 = sphi 0, %s35
    %s39 = sphi 0, %s38
    %s55 = sphi 0, %s39
    %s59 = sphi 0, %s59
    %s61 = sphi 0, %s59
    %s62 = sphi 0, %s61
    %s76 = sphi 0, %s62
    %s80 = sphi 0, %s80
    %s82 = sphi 0, %s80
    %s83 = sphi 0, %s82
    %s97 = sphi 0, %s83
    %s101 = sphi 0, %s101
    %s103 = sphi 0, %s101
    %s104 = sphi 0, %s103
    %s118 = sphi 0, %s104
    %s122 = sphi 0, %s122
    %s124 = sphi 0, %s122
    %s125 = sphi 0, %s124
    %s139 = sphi 0, %s125
    %s143 = sphi 0, %s143
    %s145 = sphi 0, %s143
    %s146 = sphi 0, %s145
    %s160 = sphi 0, %s146
    %s168 = sphi 0, %s170
    %s171 = sphi 0, %s168
    %s172 = sphi 0, %s171
    %s188 = sphi 0, %s172
  $region4: #{tpu_custom_call.1} parent=0 // loop_header_branch
    %16 = sbr.rel (%p14) target = $region8
  $region5: #{tpu_custom_call.1} parent=0 // loop_body
    %s18 = ssub.s32 %s13, 1
    %s19 = ssub.s32 %s13, 2
    %s26 = sadd.s32 1, %s21
    %p27 = scmp.ge.s32.totalorder %s26, 2
    %s28 = scalar_select %p27, 0, %s26
    %s29 = sadd.s32 1, %s20
    %s30 = scalar_select %p27, %s29, %s20
    %p31 = scmp.ge.s32.totalorder %s30, 2
    %s32 = scalar_select %p31, 0, %s30
    %s33 = ssub.s32 %s20, %s32
    %p34 = scmp.eq.s32.totalorder %s33, 0
    %s36 = sadd.s32 %s35, 1
    %s37 = scalar_select %p34, %s35, %s36
    %p40 = pneg %p34
    %p41 = scmp.eq.s32.totalorder %s13, 3
    %p42 = por %p40, %p41
    %p43 = scmp.ne.s32.totalorder %s35, %s38
    %p44 = scmp.eq.s32.totalorder %s13, 0
    %p45 = por %p43, %p44
    %p46 = scmp.ne.s32.totalorder %s35, %s38
    %p47 = scmp.eq.s32.totalorder %s18, 3
    %p48 = por %p46, %p47
    %p49 = scmp.ne.s32.totalorder %s38, %s39
    %p50 = scmp.eq.s32.totalorder %s18, 0
    %p51 = por %p49, %p50
    %p52 = scmp.ne.s32.totalorder %s38, %s39
    %p53 = scmp.eq.s32.totalorder %s19, 3
    %p54 = por %p52, %p53
    %p56 = scmp.ne.s32.totalorder %s39, %s55
    %p57 = scmp.eq.s32.totalorder %s19, 0
    %p58 = por %p56, %p57
    %s60 = sadd.s32 %s59, 1
    %p63 = scmp.eq.s32.totalorder %s13, 3
    %p64 = scmp.ne.s32.totalorder %s59, %s61
    %p65 = scmp.eq.s32.totalorder %s13, 0
    %p66 = por %p64, %p65
    %p67 = scmp.ne.s32.totalorder %s59, %s61
    %p68 = scmp.eq.s32.totalorder %s18, 3
    %p69 = por %p67, %p68
    %p70 = scmp.ne.s32.totalorder %s61, %s62
    %p71 = scmp.eq.s32.totalorder %s18, 0
    %p72 = por %p70, %p71
    %p73 = scmp.ne.s32.totalorder %s61, %s62
    %p74 = scmp.eq.s32.totalorder %s19, 3
    %p75 = por %p73, %p74
    %p77 = scmp.ne.s32.totalorder %s62, %s76
    %p78 = scmp.eq.s32.totalorder %s19, 0
    %p79 = por %p77, %p78
    %s81 = sadd.s32 %s80, 1
    %p84 = scmp.eq.s32.totalorder %s13, 3
    %p85 = scmp.ne.s32.totalorder %s80, %s82
    %p86 = scmp.eq.s32.totalorder %s13, 0
    %p87 = por %p85, %p86
    %p88 = scmp.ne.s32.totalorder %s80, %s82
    %p89 = scmp.eq.s32.totalorder %s18, 3
    %p90 = por %p88, %p89
    %p91 = scmp.ne.s32.totalorder %s82, %s83
    %p92 = scmp.eq.s32.totalorder %s18, 0
    %p93 = por %p91, %p92
    %p94 = scmp.ne.s32.totalorder %s82, %s83
    %p95 = scmp.eq.s32.totalorder %s19, 3
    %p96 = por %p94, %p95
    %p98 = scmp.ne.s32.totalorder %s83, %s97
    %p99 = scmp.eq.s32.totalorder %s19, 0
    %p100 = por %p98, %p99
    %s102 = sadd.s32 %s101, 1
    %p105 = scmp.eq.s32.totalorder %s13, 3
    %p106 = scmp.ne.s32.totalorder %s101, %s103
    %p107 = scmp.eq.s32.totalorder %s13, 0
    %p108 = por %p106, %p107
    %p109 = scmp.ne.s32.totalorder %s101, %s103
    %p110 = scmp.eq.s32.totalorder %s18, 3
    %p111 = por %p109, %p110
    %p112 = scmp.ne.s32.totalorder %s103, %s104
    %p113 = scmp.eq.s32.totalorder %s18, 0
    %p114 = por %p112, %p113
    %p115 = scmp.ne.s32.totalorder %s103, %s104
    %p116 = scmp.eq.s32.totalorder %s19, 3
    %p117 = por %p115, %p116
    %p119 = scmp.ne.s32.totalorder %s104, %s118
    %p120 = scmp.eq.s32.totalorder %s19, 0
    %p121 = por %p119, %p120
    %s123 = sadd.s32 %s122, 1
    %p126 = scmp.eq.s32.totalorder %s13, 3
    %p127 = scmp.ne.s32.totalorder %s122, %s124
    %p128 = scmp.eq.s32.totalorder %s13, 0
    %p129 = por %p127, %p128
    %p130 = scmp.ne.s32.totalorder %s122, %s124
    %p131 = scmp.eq.s32.totalorder %s18, 3
    %p132 = por %p130, %p131
    %p133 = scmp.ne.s32.totalorder %s124, %s125
    %p134 = scmp.eq.s32.totalorder %s18, 0
    %p135 = por %p133, %p134
    %p136 = scmp.ne.s32.totalorder %s124, %s125
    %p137 = scmp.eq.s32.totalorder %s19, 3
    %p138 = por %p136, %p137
    %p140 = scmp.ne.s32.totalorder %s125, %s139
    %p141 = scmp.eq.s32.totalorder %s19, 0
    %p142 = por %p140, %p141
    %s144 = sadd.s32 %s143, 1
    %p147 = scmp.eq.s32.totalorder %s13, 3
    %p148 = scmp.ne.s32.totalorder %s143, %s145
    %p149 = scmp.eq.s32.totalorder %s13, 0
    %p150 = por %p148, %p149
    %p151 = scmp.ne.s32.totalorder %s143, %s145
    %p152 = scmp.eq.s32.totalorder %s18, 3
    %p153 = por %p151, %p152
    %p154 = scmp.ne.s32.totalorder %s145, %s146
    %p155 = scmp.eq.s32.totalorder %s18, 0
    %p156 = por %p154, %p155
    %p157 = scmp.ne.s32.totalorder %s145, %s146
    %p158 = scmp.eq.s32.totalorder %s19, 3
    %p159 = por %p157, %p158
    %p161 = scmp.ne.s32.totalorder %s146, %s160
    %p162 = scmp.eq.s32.totalorder %s19, 0
    %p163 = por %p161, %p162
    %s164 = ssub.s32 %s20, %s32
    %s165 = ssub.s32 %s21, %s28
    %s166 = sor.u32 %s164, %s165
    %p167 = scmp.eq.s32.totalorder %s166, 0
    %s169 = sadd.s32 %s168, 1
    %s170 = scalar_select %p167, %s168, %s169
    %p173 = pneg %p167
    %p174 = scmp.eq.s32.totalorder %s13, 3
    %p175 = por %p173, %p174
    %p176 = scmp.ne.s32.totalorder %s168, %s171
    %p177 = scmp.eq.s32.totalorder %s13, 0
    %p178 = por %p176, %p177
    %p179 = scmp.ne.s32.totalorder %s168, %s171
    %p180 = scmp.eq.s32.totalorder %s18, 3
    %p181 = por %p179, %p180
    %p182 = scmp.ne.s32.totalorder %s171, %s172
    %p183 = scmp.eq.s32.totalorder %s18, 0
    %p184 = por %p182, %p183
    %p185 = scmp.ne.s32.totalorder %s171, %s172
    %p186 = scmp.eq.s32.totalorder %s19, 3
    %p187 = por %p185, %p186
    %p189 = scmp.ne.s32.totalorder %s172, %s188
    %p190 = scmp.eq.s32.totalorder %s19, 0
    %p191 = por %p189, %p190
    %p192 = scmp.le.s32.totalorder 1, %s13
    %p193 = scmp.lt.s32.totalorder %s13, 5
    %p194 = pnand %p192, %p193
    %p195 = pneg %p194
    // Predicated region
    $region9: #{tpu_custom_call.1} parent=5 // pred_check
      _
    $region10: #{tpu_custom_call.1} parent=5 // pred_check_branch
      %197 = sbr.rel (%p194) target = $region12
    $region11: #{tpu_custom_call.1} parent=5 // pred_region
      %s198 = ssub.s32 %s13, 1
      // Predicated region
      $region13: #{tpu_custom_call.1} parent=11 // pred_check
        %p199 = pneg %p72
      $region14: #{tpu_custom_call.1} parent=11 // pred_check_branch
        %201 = sbr.rel (%p199) target = $region16
      $region15: #{tpu_custom_call.1} parent=11 // pred_region
        _
      $region16: #{tpu_custom_call.1} parent=11 // pred_fallthru
        _
      // Predicated region
      $region17: #{tpu_custom_call.1} parent=11 // pred_check
        %p202 = pneg %p93
      $region18: #{tpu_custom_call.1} parent=11 // pred_check_branch
        %204 = sbr.rel (%p202) target = $region20
      $region19: #{tpu_custom_call.1} parent=11 // pred_region
        _
      $region20: #{tpu_custom_call.1} parent=11 // pred_fallthru
        _
      // Predicated region
      $region21: #{tpu_custom_call.1} parent=11 // pred_check
        %p205 = pneg %p114
      $region22: #{tpu_custom_call.1} parent=11 // pred_check_branch
        %207 = sbr.rel (%p205) target = $region24
      $region23: #{tpu_custom_call.1} parent=11 // pred_region
        _
      $region24: #{tpu_custom_call.1} parent=11 // pred_fallthru
        _
      // Predicated region
      $region25: #{tpu_custom_call.1} parent=11 // pred_check
        %p208 = pneg %p135
      $region26: #{tpu_custom_call.1} parent=11 // pred_check_branch
        %210 = sbr.rel (%p208) target = $region28
      $region27: #{tpu_custom_call.1} parent=11 // pred_region
        _
      $region28: #{tpu_custom_call.1} parent=11 // pred_fallthru
        _
      // Predicated region
      $region29: #{tpu_custom_call.1} parent=11 // pred_check
        %p211 = pneg %p156
      $region30: #{tpu_custom_call.1} parent=11 // pred_check_branch
        %213 = sbr.rel (%p211) target = $region32
      $region31: #{tpu_custom_call.1} parent=11 // pred_region
        _
      $region32: #{tpu_custom_call.1} parent=11 // pred_fallthru
        _
    $region12: #{tpu_custom_call.1} parent=5 // pred_fallthru
      _
    %p214 = scmp.lt.s32.totalorder %s13, 4
    // Predicated region
    $region33: #{tpu_custom_call.1} parent=5 // pred_check
      %p215 = pneg %p214
    $region34: #{tpu_custom_call.1} parent=5 // pred_check_branch
      %217 = sbr.rel (%p215) target = $region36
    $region35: #{tpu_custom_call.1} parent=5 // pred_region
      // Predicated region
      $region37: #{tpu_custom_call.1} parent=35 // pred_check
        %p218 = pneg %p45
      $region38: #{tpu_custom_call.1} parent=35 // pred_check_branch
        %220 = sbr.rel (%p218) target = $region40
      $region39: #{tpu_custom_call.1} parent=35 // pred_region
        %p221 = scmp.lt.s32.totalorder %s20, 1
        %s222 = scalar_select %p221, %s20, 1
        %s223 = smul.addr %s222, 32
        %s224 = smul.addr %s223, 8
        %s225 = scalar_lea.vmem %s0, %s224
      $region40: #{tpu_custom_call.1} parent=35 // pred_fallthru
        _
    $region36: #{tpu_custom_call.1} parent=5 // pred_fallthru
      _
    %p226 = scmp.le.s32.totalorder 1, %s13
    %p227 = scmp.lt.s32.totalorder %s13, 5
    %p228 = pnand %p226, %p227
    %p229 = pneg %p228
    // Predicated region
    $region41: #{tpu_custom_call.1} parent=5 // pred_check
      _
    $region42: #{tpu_custom_call.1} parent=5 // pred_check_branch
      %231 = sbr.rel (%p228) target = $region44
    $region43: #{tpu_custom_call.1} parent=5 // pred_region
      %s232 = ssub.s32 %s13, 1
      %p233 = scmp.lt.s32.totalorder %s22, 1
      %s234 = scalar_select %p233, %s22, 1
      %s235 = smul.addr %s234, 32
      %s236 = smul.addr %s235, 8
      %s237 = scalar_lea.vmem %s0, %s236
      %p238 = pneg %p51
      %p239 = pneg %p48
      %p240 = pneg %p72
      %p241 = pneg %p69
      %p242 = pneg %p93
      %p243 = pneg %p90
      %p244 = pneg %p114
      %p245 = pneg %p111
      %p246 = pneg %p135
      %p247 = pneg %p132
      %p248 = pneg %p156
      %p249 = pneg %p153
      %p250 = pneg %p184
      %p251 = pneg %p181
      %s252 = smul.u32 8, %s23
      %p253 = scmp.lt.s32.totalorder %s22, 1
      %s254 = scalar_select %p253, %s22, 1
      %p255 = scmp.lt.s32.totalorder %s252, 15
      %s256 = scalar_select %p255, %s252, 15
      %s257 = smul.addr %s256, 2
      %s258 = smul.addr %s254, 32
      %s259 = sadd.s32 %s257, %s258
      %s260 = smul.addr %s259, 8
      %s261 = scalar_lea.vmem %s6, %s260
      %p262 = scmp.lt.s32.totalorder %s22, 1
      %s263 = scalar_select %p262, %s22, 1
      %s264 = smul.addr %s263, 32
      %s265 = smul.addr %s264, 8
      %s266 = scalar_lea.vmem %s0, %s265
      %s267 = smul.u32 8, %s23
      %p268 = scmp.lt.s32.totalorder %s22, 1
      %s269 = scalar_select %p268, %s22, 1
      %p270 = scmp.lt.s32.totalorder %s267, 15
      %s271 = scalar_select %p270, %s267, 15
      %s272 = smul.addr %s271, 2
      %s273 = smul.addr %s269, 32
      %s274 = sadd.s32 %s272, %s273
      %s275 = smul.addr %s274, 8
      %s276 = scalar_lea.vmem %s6, %s275
      %s277 = smul.u32 8, %s23
      %s278 = smul.u32 %s23, 8
      %p279 = scmp.eq.s32.totalorder %s23, 0
      // Predicated region
      $region45: #{tpu_custom_call.1} parent=43 // pred_check
        %p280 = pneg %p279
      $region46: #{tpu_custom_call.1} parent=43 // pred_check_branch
        %282 = sbr.rel (%p280) target = $region48
      $region47: #{tpu_custom_call.1} parent=43 // pred_region
        %vm283 = vcmask 31744
        %284 = vst.msk [vmem:[#allocation2] sm:$0xff] %vm283, 0.0
        %285 = vst.msk [vmem:[#allocation2 + $0x8] sm:$0xff] %vm283, 0.0
        %vm286 = vcmask 25600
        %287 = vst.msk [vmem:[#allocation2 + $0x10] sm:$0x3] %vm286, 0.0
        %288 = vst.msk [vmem:[#allocation2 + $0x18] sm:$0xff] %vm283, 0.0
        %289 = vst.msk [vmem:[#allocation2 + $0x20] sm:$0xff] %vm283, 0.0
        %290 = vst.msk [vmem:[#allocation2 + $0x28] sm:$0x3] %vm286, 0.0
        %291 = vst.msk [vmem:[#allocation2 + $0x30] sm:$0xff] %vm283, 0.0
        %292 = vst.msk [vmem:[#allocation2 + $0x38] sm:$0xff] %vm283, 0.0
        %293 = vst.msk [vmem:[#allocation2 + $0x40] sm:$0x3] %vm286, 0.0
        %294 = vst.msk [vmem:[#allocation2 + $0x48] sm:$0xff] %vm283, 0.0
        %295 = vst.msk [vmem:[#allocation2 + $0x50] sm:$0xff] %vm283, 0.0
        %296 = vst.msk [vmem:[#allocation2 + $0x58] sm:$0x3] %vm286, 0.0
        %297 = vst.msk [vmem:[#allocation2 + $0x60] sm:$0xff] %vm283, 0.0
        %298 = vst.msk [vmem:[#allocation2 + $0x68] sm:$0xff] %vm283, 0.0
        %299 = vst.msk [vmem:[#allocation2 + $0x70] sm:$0x3] %vm286, 0.0
        %300 = vst.msk [vmem:[#allocation2 + $0x78] sm:$0xff] %vm283, 0.0
        %301 = vst.msk [vmem:[#allocation2 + $0x80] sm:$0xff] %vm283, 0.0
        %302 = vst.msk [vmem:[#allocation2 + $0x88] sm:$0x3] %vm286, 0.0
        %303 = vst.msk [vmem:[#allocation2 + $0x90] sm:$0xff] %vm283, 0.0
        %304 = vst.msk [vmem:[#allocation2 + $0x98] sm:$0xff] %vm283, 0.0
        %305 = vst.msk [vmem:[#allocation2 + $0xa0] sm:$0x3] %vm286, 0.0
        %306 = vst.msk [vmem:[#allocation2 + $0xa8] sm:$0xff] %vm283, 0.0
        %307 = vst.msk [vmem:[#allocation2 + $0xb0] sm:$0xff] %vm283, 0.0
        %308 = vst.msk [vmem:[#allocation2 + $0xb8] sm:$0x3] %vm286, 0.0
        %309 = vst.msk [vmem:[#allocation2 + $0xc0] sm:$0xff] %vm283, 0.0
        %310 = vst.msk [vmem:[#allocation2 + $0xc8] sm:$0xff] %vm283, 0.0
        %311 = vst.msk [vmem:[#allocation2 + $0xd0] sm:$0x3] %vm286, 0.0
        %312 = vst.msk [vmem:[#allocation2 + $0xd8] sm:$0xff] %vm283, 0.0
        %313 = vst.msk [vmem:[#allocation2 + $0xe0] sm:$0xff] %vm283, 0.0
        %314 = vst.msk [vmem:[#allocation2 + $0xe8] sm:$0x3] %vm286, 0.0
        %315 = vst.msk [vmem:[#allocation2 + $0xf0] sm:$0xff] %vm283, 0.0
        %316 = vst.msk [vmem:[#allocation2 + $0xf8] sm:$0xff] %vm283, 0.0
        %317 = vst.msk [vmem:[#allocation2 + $0x100] sm:$0x3] %vm286, 0.0
        %318 = vst.msk [vmem:[#allocation2 + $0x108] sm:$0xff] %vm283, 0.0
        %319 = vst.msk [vmem:[#allocation2 + $0x110] sm:$0xff] %vm283, 0.0
        %320 = vst.msk [vmem:[#allocation2 + $0x118] sm:$0x3] %vm286, 0.0
        %321 = vst.msk [vmem:[#allocation2 + $0x120] sm:$0xff] %vm283, 0.0
        %322 = vst.msk [vmem:[#allocation2 + $0x128] sm:$0xff] %vm283, 0.0
        %323 = vst.msk [vmem:[#allocation2 + $0x130] sm:$0x3] %vm286, 0.0
        %324 = vst.msk [vmem:[#allocation2 + $0x138] sm:$0xff] %vm283, 0.0
        %325 = vst.msk [vmem:[#allocation2 + $0x140] sm:$0xff] %vm283, 0.0
        %326 = vst.msk [vmem:[#allocation2 + $0x148] sm:$0x3] %vm286, 0.0
        %327 = vst.msk [vmem:[#allocation2 + $0x150] sm:$0xff] %vm283, 0.0
        %328 = vst.msk [vmem:[#allocation2 + $0x158] sm:$0xff] %vm283, 0.0
        %329 = vst.msk [vmem:[#allocation2 + $0x160] sm:$0x3] %vm286, 0.0
        %330 = vst.msk [vmem:[#allocation2 + $0x168] sm:$0xff] %vm283, 0.0
        %331 = vst.msk [vmem:[#allocation2 + $0x170] sm:$0xff] %vm283, 0.0
        %332 = vst.msk [vmem:[#allocation2 + $0x178] sm:$0x3] %vm286, 0.0
        %333 = vst.msk [vmem:[#allocation2 + $0x180] sm:$0xff] %vm283, 0.0
        %334 = vst.msk [vmem:[#allocation2 + $0x188] sm:$0xff] %vm283, 0.0
        %335 = vst.msk [vmem:[#allocation2 + $0x190] sm:$0x3] %vm286, 0.0
        %336 = vst.msk [vmem:[#allocation2 + $0x198] sm:$0xff] %vm283, 0.0
        %337 = vst.msk [vmem:[#allocation2 + $0x1a0] sm:$0xff] %vm283, 0.0
        %338 = vst.msk [vmem:[#allocation2 + $0x1a8] sm:$0x3] %vm286, 0.0
        %339 = vst.msk [vmem:[#allocation3] sm:$0xff] %vm283, 0.0
        %340 = vst.msk [vmem:[#allocation3 + $0x8] sm:$0xff] %vm283, 0.0
        %341 = vst.msk [vmem:[#allocation3 + $0x10] sm:$0x3] %vm286, 0.0
        %342 = vst.msk [vmem:[#allocation3 + $0x18] sm:$0xff] %vm283, 0.0
        %343 = vst.msk [vmem:[#allocation3 + $0x20] sm:$0xff] %vm283, 0.0
        %344 = vst.msk [vmem:[#allocation3 + $0x28] sm:$0x3] %vm286, 0.0
        %345 = vst.msk [vmem:[#allocation3 + $0x30] sm:$0xff] %vm283, 0.0
        %346 = vst.msk [vmem:[#allocation3 + $0x38] sm:$0xff] %vm283, 0.0
        %347 = vst.msk [vmem:[#allocation3 + $0x40] sm:$0x3] %vm286, 0.0
        %348 = vst.msk [vmem:[#allocation3 + $0x48] sm:$0xff] %vm283, 0.0
        %349 = vst.msk [vmem:[#allocation3 + $0x50] sm:$0xff] %vm283, 0.0
        %350 = vst.msk [vmem:[#allocation3 + $0x58] sm:$0x3] %vm286, 0.0
        %351 = vst.msk [vmem:[#allocation3 + $0x60] sm:$0xff] %vm283, 0.0
        %352 = vst.msk [vmem:[#allocation3 + $0x68] sm:$0xff] %vm283, 0.0
        %353 = vst.msk [vmem:[#allocation3 + $0x70] sm:$0x3] %vm286, 0.0
        %354 = vst.msk [vmem:[#allocation3 + $0x78] sm:$0xff] %vm283, 0.0
        %355 = vst.msk [vmem:[#allocation3 + $0x80] sm:$0xff] %vm283, 0.0
        %356 = vst.msk [vmem:[#allocation3 + $0x88] sm:$0x3] %vm286, 0.0
        %357 = vst.msk [vmem:[#allocation3 + $0x90] sm:$0xff] %vm283, 0.0
        %358 = vst.msk [vmem:[#allocation3 + $0x98] sm:$0xff] %vm283, 0.0
        %359 = vst.msk [vmem:[#allocation3 + $0xa0] sm:$0x3] %vm286, 0.0
        %360 = vst.msk [vmem:[#allocation3 + $0xa8] sm:$0xff] %vm283, 0.0
        %361 = vst.msk [vmem:[#allocation3 + $0xb0] sm:$0xff] %vm283, 0.0
        %362 = vst.msk [vmem:[#allocation3 + $0xb8] sm:$0x3] %vm286, 0.0
        %363 = vst.msk [vmem:[#allocation3 + $0xc0] sm:$0xff] %vm283, 0.0
        %364 = vst.msk [vmem:[#allocation3 + $0xc8] sm:$0xff] %vm283, 0.0
        %365 = vst.msk [vmem:[#allocation3 + $0xd0] sm:$0x3] %vm286, 0.0
        %366 = vst.msk [vmem:[#allocation3 + $0xd8] sm:$0xff] %vm283, 0.0
        %367 = vst.msk [vmem:[#allocation3 + $0xe0] sm:$0xff] %vm283, 0.0
        %368 = vst.msk [vmem:[#allocation3 + $0xe8] sm:$0x3] %vm286, 0.0
        %369 = vst.msk [vmem:[#allocation3 + $0xf0] sm:$0xff] %vm283, 0.0
        %370 = vst.msk [vmem:[#allocation3 + $0xf8] sm:$0xff] %vm283, 0.0
        %371 = vst.msk [vmem:[#allocation3 + $0x100] sm:$0x3] %vm286, 0.0
        %372 = vst.msk [vmem:[#allocation3 + $0x108] sm:$0xff] %vm283, 0.0
        %373 = vst.msk [vmem:[#allocation3 + $0x110] sm:$0xff] %vm283, 0.0
        %374 = vst.msk [vmem:[#allocation3 + $0x118] sm:$0x3] %vm286, 0.0
        %375 = vst.msk [vmem:[#allocation3 + $0x120] sm:$0xff] %vm283, 0.0
        %376 = vst.msk [vmem:[#allocation3 + $0x128] sm:$0xff] %vm283, 0.0
        %377 = vst.msk [vmem:[#allocation3 + $0x130] sm:$0x3] %vm286, 0.0
        %378 = vst.msk [vmem:[#allocation3 + $0x138] sm:$0xff] %vm283, 0.0
        %379 = vst.msk [vmem:[#allocation3 + $0x140] sm:$0xff] %vm283, 0.0
        %380 = vst.msk [vmem:[#allocation3 + $0x148] sm:$0x3] %vm286, 0.0
        %381 = vst.msk [vmem:[#allocation3 + $0x150] sm:$0xff] %vm283, 0.0
        %382 = vst.msk [vmem:[#allocation3 + $0x158] sm:$0xff] %vm283, 0.0
        %383 = vst.msk [vmem:[#allocation3 + $0x160] sm:$0x3] %vm286, 0.0
        %384 = vst.msk [vmem:[#allocation3 + $0x168] sm:$0xff] %vm283, 0.0
        %385 = vst.msk [vmem:[#allocation3 + $0x170] sm:$0xff] %vm283, 0.0
        %386 = vst.msk [vmem:[#allocation3 + $0x178] sm:$0x3] %vm286, 0.0
        %387 = vst.msk [vmem:[#allocation3 + $0x180] sm:$0xff] %vm283, 0.0
        %388 = vst.msk [vmem:[#allocation3 + $0x188] sm:$0xff] %vm283, 0.0
        %389 = vst.msk [vmem:[#allocation3 + $0x190] sm:$0x3] %vm286, 0.0
        %390 = vst.msk [vmem:[#allocation3 + $0x198] sm:$0xff] %vm283, 0.0
        %391 = vst.msk [vmem:[#allocation3 + $0x1a0] sm:$0xff] %vm283, 0.0
        %392 = vst.msk [vmem:[#allocation3 + $0x1a8] sm:$0x3] %vm286, 0.0
        %v393 = vld [vmem:[%s266] sm:$0xff]
        %v394 = vld [vmem:[%s266 + $0x8] sm:$0xff]
        %v395 = vld [vmem:[%s266 + $0x10] sm:$0xff]
        %v396 = vld [vmem:[%s266 + $0x18] sm:$0xff]
        %v397 = vld [vmem:[%s266 + $0x20] sm:$0xff]
        %v398 = vld [vmem:[%s266 + $0x28] sm:$0xff]
        %v399 = vld [vmem:[%s266 + $0x30] sm:$0xff]
        %v400 = vld [vmem:[%s266 + $0x38] sm:$0xff]
        %v401 = vld [vmem:[%s266 + $0x40] sm:$0xff]
        %v402 = vld [vmem:[%s266 + $0x48] sm:$0xff]
        %v403 = vld [vmem:[%s266 + $0x50] sm:$0xff]
        %v404 = vld [vmem:[%s266 + $0x58] sm:$0xff]
        %v405 = vld [vmem:[%s266 + $0x60] sm:$0xff]
        %v406 = vld [vmem:[%s266 + $0x68] sm:$0xff]
        %v407 = vld [vmem:[%s266 + $0x70] sm:$0xff]
        %v408 = vld [vmem:[%s266 + $0x78] sm:$0xff]
        %v409 = vld [vmem:[%s266 + $0x80] sm:$0xff]
        %v410 = vld [vmem:[%s266 + $0x88] sm:$0xff]
        %v411 = vld [vmem:[%s266 + $0x90] sm:$0xff]
        %v412 = vld [vmem:[%s266 + $0x98] sm:$0xff]
        %v413 = vld [vmem:[%s266 + $0xa0] sm:$0xff]
        %v414 = vld [vmem:[%s266 + $0xa8] sm:$0xff]
        %v415 = vld [vmem:[%s266 + $0xb0] sm:$0xff]
        %v416 = vld [vmem:[%s266 + $0xb8] sm:$0xff]
        %v417 = vld [vmem:[%s266 + $0xc0] sm:$0xff]
        %v418 = vld [vmem:[%s266 + $0xc8] sm:$0xff]
        %v419 = vld [vmem:[%s266 + $0xd0] sm:$0xff]
        %v420 = vld [vmem:[%s266 + $0xd8] sm:$0xff]
        %v421 = vld [vmem:[%s266 + $0xe0] sm:$0xff]
        %v422 = vld [vmem:[%s266 + $0xe8] sm:$0xff]
        %v423 = vld [vmem:[%s266 + $0xf0] sm:$0xff]
        %v424 = vld [vmem:[%s266 + $0xf8] sm:$0xff]
        %s425 = scalar_lea.vmem [#allocation2], 24
        %426 = vst.msk [vmem:[%s425 + $0x1] sm:$0xff] %vm283, %v393
        %427 = vst.msk [vmem:[%s425 + $0x9] sm:$0xff] %vm283, %v394
        %428 = vst.msk [vmem:[%s425 + $0x19] sm:$0xff] %vm283, %v395
        %429 = vst.msk [vmem:[%s425 + $0x21] sm:$0xff] %vm283, %v396
        %430 = vst.msk [vmem:[%s425 + $0x31] sm:$0xff] %vm283, %v397
        %431 = vst.msk [vmem:[%s425 + $0x39] sm:$0xff] %vm283, %v398
        %432 = vst.msk [vmem:[%s425 + $0x49] sm:$0xff] %vm283, %v399
        %433 = vst.msk [vmem:[%s425 + $0x51] sm:$0xff] %vm283, %v400
        %434 = vst.msk [vmem:[%s425 + $0x61] sm:$0xff] %vm283, %v401
        %435 = vst.msk [vmem:[%s425 + $0x69] sm:$0xff] %vm283, %v402
        %436 = vst.msk [vmem:[%s425 + $0x79] sm:$0xff] %vm283, %v403
        %437 = vst.msk [vmem:[%s425 + $0x81] sm:$0xff] %vm283, %v404
        %438 = vst.msk [vmem:[%s425 + $0x91] sm:$0xff] %vm283, %v405
        %439 = vst.msk [vmem:[%s425 + $0x99] sm:$0xff] %vm283, %v406
        %440 = vst.msk [vmem:[%s425 + $0xa9] sm:$0xff] %vm283, %v407
        %441 = vst.msk [vmem:[%s425 + $0xb1] sm:$0xff] %vm283, %v408
        %442 = vst.msk [vmem:[%s425 + $0xc1] sm:$0xff] %vm283, %v409
        %443 = vst.msk [vmem:[%s425 + $0xc9] sm:$0xff] %vm283, %v410
        %444 = vst.msk [vmem:[%s425 + $0xd9] sm:$0xff] %vm283, %v411
        %445 = vst.msk [vmem:[%s425 + $0xe1] sm:$0xff] %vm283, %v412
        %446 = vst.msk [vmem:[%s425 + $0xf1] sm:$0xff] %vm283, %v413
        %447 = vst.msk [vmem:[%s425 + $0xf9] sm:$0xff] %vm283, %v414
        %448 = vst.msk [vmem:[%s425 + $0x109] sm:$0xff] %vm283, %v415
        %449 = vst.msk [vmem:[%s425 + $0x111] sm:$0xff] %vm283, %v416
        %450 = vst.msk [vmem:[%s425 + $0x121] sm:$0xff] %vm283, %v417
        %451 = vst.msk [vmem:[%s425 + $0x129] sm:$0xff] %vm283, %v418
        %452 = vst.msk [vmem:[%s425 + $0x139] sm:$0xff] %vm283, %v419
        %453 = vst.msk [vmem:[%s425 + $0x141] sm:$0xff] %vm283, %v420
        %454 = vst.msk [vmem:[%s425 + $0x151] sm:$0xff] %vm283, %v421
        %455 = vst.msk [vmem:[%s425 + $0x159] sm:$0xff] %vm283, %v422
        %456 = vst.msk [vmem:[%s425 + $0x169] sm:$0xff] %vm283, %v423
        %457 = vst.msk [vmem:[%s425 + $0x171] sm:$0xff] %vm283, %v424
        %v458 = vld [vmem:[#allocation2] sm:$0xff]
        %v459 = vld [vmem:[#allocation2 + $0x8] sm:$0xff]
        %v460 = vld [vmem:[#allocation2 + $0x18] sm:$0xff]
        %v461 = vld [vmem:[#allocation2 + $0x20] sm:$0xff]
        %v462 = vld [vmem:[#allocation2 + $0x30] sm:$0xff]
        %v463 = vld [vmem:[#allocation2 + $0x38] sm:$0xff]
        %v464 = vld [vmem:[#allocation2 + $0x48] sm:$0xff]
        %v465 = vld [vmem:[#allocation2 + $0x50] sm:$0xff]
        %v466 = vld [vmem:[#allocation2 + $0x60] sm:$0xff]
        %v467 = vld [vmem:[#allocation2 + $0x68] sm:$0xff]
        %v468 = vld [vmem:[#allocation2 + $0x78] sm:$0xff]
        %v469 = vld [vmem:[#allocation2 + $0x80] sm:$0xff]
        %v470 = vld [vmem:[#allocation2 + $0x90] sm:$0xff]
        %v471 = vld [vmem:[#allocation2 + $0x98] sm:$0xff]
        %v472 = vld [vmem:[#allocation2 + $0xa8] sm:$0xff]
        %v473 = vld [vmem:[#allocation2 + $0xb0] sm:$0xff]
        %v474 = vld [vmem:[#allocation2 + $0xc0] sm:$0xff]
        %v475 = vld [vmem:[#allocation2 + $0xc8] sm:$0xff]
        %v476 = vld [vmem:[#allocation2 + $0xd8] sm:$0xff]
        %v477 = vld [vmem:[#allocation2 + $0xe0] sm:$0xff]
        %v478 = vld [vmem:[#allocation2 + $0xf0] sm:$0xff]
        %v479 = vld [vmem:[#allocation2 + $0xf8] sm:$0xff]
        %v480 = vld [vmem:[#allocation2 + $0x108] sm:$0xff]
        %v481 = vld [vmem:[#allocation2 + $0x110] sm:$0xff]
        %v482 = vld [vmem:[#allocation2 + $0x120] sm:$0xff]
        %v483 = vld [vmem:[#allocation2 + $0x128] sm:$0xff]
        %v484 = vld [vmem:[#allocation2 + $0x138] sm:$0xff]
        %v485 = vld [vmem:[#allocation2 + $0x140] sm:$0xff]
        %v486 = vld [vmem:[#allocation2 + $0x150] sm:$0xff]
        %v487 = vld [vmem:[#allocation2 + $0x158] sm:$0xff]
        %v488 = vld [vmem:[#allocation2 + $0x168] sm:$0xff]
        %v489 = vld [vmem:[#allocation2 + $0x170] sm:$0xff]
        %490 = vst.msk [vmem:[#allocation4] sm:$0xff] %vm283, %v458
        %491 = vst.msk [vmem:[#allocation4 + $0x8] sm:$0xff] %vm283, %v459
        %492 = vst.msk [vmem:[#allocation4 + $0x10] sm:$0xff] %vm283, %v460
        %493 = vst.msk [vmem:[#allocation4 + $0x18] sm:$0xff] %vm283, %v461
        %494 = vst.msk [vmem:[#allocation4 + $0x20] sm:$0xff] %vm283, %v462
        %495 = vst.msk [vmem:[#allocation4 + $0x28] sm:$0xff] %vm283, %v463
        %496 = vst.msk [vmem:[#allocation4 + $0x30] sm:$0xff] %vm283, %v464
        %497 = vst.msk [vmem:[#allocation4 + $0x38] sm:$0xff] %vm283, %v465
        %498 = vst.msk [vmem:[#allocation4 + $0x40] sm:$0xff] %vm283, %v466
        %499 = vst.msk [vmem:[#allocation4 + $0x48] sm:$0xff] %vm283, %v467
        %500 = vst.msk [vmem:[#allocation4 + $0x50] sm:$0xff] %vm283, %v468
        %501 = vst.msk [vmem:[#allocation4 + $0x58] sm:$0xff] %vm283, %v469
        %502 = vst.msk [vmem:[#allocation4 + $0x60] sm:$0xff] %vm283, %v470
        %503 = vst.msk [vmem:[#allocation4 + $0x68] sm:$0xff] %vm283, %v471
        %504 = vst.msk [vmem:[#allocation4 + $0x70] sm:$0xff] %vm283, %v472
        %505 = vst.msk [vmem:[#allocation4 + $0x78] sm:$0xff] %vm283, %v473
        %506 = vst.msk [vmem:[#allocation4 + $0x80] sm:$0xff] %vm283, %v474
        %507 = vst.msk [vmem:[#allocation4 + $0x88] sm:$0xff] %vm283, %v475
        %508 = vst.msk [vmem:[#allocation4 + $0x90] sm:$0xff] %vm283, %v476
        %509 = vst.msk [vmem:[#allocation4 + $0x98] sm:$0xff] %vm283, %v477
        %510 = vst.msk [vmem:[#allocation4 + $0xa0] sm:$0xff] %vm283, %v478
        %511 = vst.msk [vmem:[#allocation4 + $0xa8] sm:$0xff] %vm283, %v479
        %512 = vst.msk [vmem:[#allocation4 + $0xb0] sm:$0xff] %vm283, %v480
        %513 = vst.msk [vmem:[#allocation4 + $0xb8] sm:$0xff] %vm283, %v481
        %514 = vst.msk [vmem:[#allocation4 + $0xc0] sm:$0xff] %vm283, %v482
        %515 = vst.msk [vmem:[#allocation4 + $0xc8] sm:$0xff] %vm283, %v483
        %516 = vst.msk [vmem:[#allocation4 + $0xd0] sm:$0xff] %vm283, %v484
        %517 = vst.msk [vmem:[#allocation4 + $0xd8] sm:$0xff] %vm283, %v485
        %518 = vst.msk [vmem:[#allocation4 + $0xe0] sm:$0xff] %vm283, %v486
        %519 = vst.msk [vmem:[#allocation4 + $0xe8] sm:$0xff] %vm283, %v487
        %520 = vst.msk [vmem:[#allocation4 + $0xf0] sm:$0xff] %vm283, %v488
        %521 = vst.msk [vmem:[#allocation4 + $0xf8] sm:$0xff] %vm283, %v489
        %v522 = vld [vmem:[#allocation2 + $0x1] sm:$0xff]
        %v523 = vld [vmem:[#allocation2 + $0x9] sm:$0xff]
        %v524 = vld [vmem:[#allocation2 + $0x19] sm:$0xff]
        %v525 = vld [vmem:[#allocation2 + $0x21] sm:$0xff]
        %v526 = vld [vmem:[#allocation2 + $0x31] sm:$0xff]
        %v527 = vld [vmem:[#allocation2 + $0x39] sm:$0xff]
        %v528 = vld [vmem:[#allocation2 + $0x49] sm:$0xff]
        %v529 = vld [vmem:[#allocation2 + $0x51] sm:$0xff]
        %v530 = vld [vmem:[#allocation2 + $0x61] sm:$0xff]
        %v531 = vld [vmem:[#allocation2 + $0x69] sm:$0xff]
        %v532 = vld [vmem:[#allocation2 + $0x79] sm:$0xff]
        %v533 = vld [vmem:[#allocation2 + $0x81] sm:$0xff]
        %v534 = vld [vmem:[#allocation2 + $0x91] sm:$0xff]
        %v535 = vld [vmem:[#allocation2 + $0x99] sm:$0xff]
        %v536 = vld [vmem:[#allocation2 + $0xa9] sm:$0xff]
        %v537 = vld [vmem:[#allocation2 + $0xb1] sm:$0xff]
        %v538 = vld [vmem:[#allocation2 + $0xc1] sm:$0xff]
        %v539 = vld [vmem:[#allocation2 + $0xc9] sm:$0xff]
        %v540 = vld [vmem:[#allocation2 + $0xd9] sm:$0xff]
        %v541 = vld [vmem:[#allocation2 + $0xe1] sm:$0xff]
        %v542 = vld [vmem:[#allocation2 + $0xf1] sm:$0xff]
        %v543 = vld [vmem:[#allocation2 + $0xf9] sm:$0xff]
        %v544 = vld [vmem:[#allocation2 + $0x109] sm:$0xff]
        %v545 = vld [vmem:[#allocation2 + $0x111] sm:$0xff]
        %v546 = vld [vmem:[#allocation2 + $0x121] sm:$0xff]
        %v547 = vld [vmem:[#allocation2 + $0x129] sm:$0xff]
        %v548 = vld [vmem:[#allocation2 + $0x139] sm:$0xff]
        %v549 = vld [vmem:[#allocation2 + $0x141] sm:$0xff]
        %v550 = vld [vmem:[#allocation2 + $0x151] sm:$0xff]
        %v551 = vld [vmem:[#allocation2 + $0x159] sm:$0xff]
        %v552 = vld [vmem:[#allocation2 + $0x169] sm:$0xff]
        %v553 = vld [vmem:[#allocation2 + $0x171] sm:$0xff]
        %586 = vrot.lane.b32.xlu0 %v522, 4
        %v587 = vpop.permute.xlu0 %586
        %588 = vrot.lane.b32.xlu0 %v523, 4
        %v589 = vpop.permute.xlu0 %588
        %590 = vrot.lane.b32.xlu0 %v524, 4
        %v591 = vpop.permute.xlu0 %590
        %592 = vrot.lane.b32.xlu0 %v525, 4
        %v593 = vpop.permute.xlu0 %592
        %594 = vrot.lane.b32.xlu0 %v526, 4
        %v595 = vpop.permute.xlu0 %594
        %596 = vrot.lane.b32.xlu0 %v527, 4
        %v597 = vpop.permute.xlu0 %596
        %598 = vrot.lane.b32.xlu0 %v528, 4
        %v599 = vpop.permute.xlu0 %598
        %600 = vrot.lane.b32.xlu0 %v529, 4
        %v601 = vpop.permute.xlu0 %600
        %602 = vrot.lane.b32.xlu0 %v530, 4
        %v603 = vpop.permute.xlu0 %602
        %604 = vrot.lane.b32.xlu0 %v531, 4
        %v605 = vpop.permute.xlu0 %604
        %606 = vrot.lane.b32.xlu0 %v532, 4
        %v607 = vpop.permute.xlu0 %606
        %608 = vrot.lane.b32.xlu0 %v533, 4
        %v609 = vpop.permute.xlu0 %608
        %610 = vrot.lane.b32.xlu0 %v534, 4
        %v611 = vpop.permute.xlu0 %610
        %612 = vrot.lane.b32.xlu0 %v535, 4
        %v613 = vpop.permute.xlu0 %612
        %614 = vrot.lane.b32.xlu0 %v536, 4
        %v615 = vpop.permute.xlu0 %614
        %616 = vrot.lane.b32.xlu0 %v537, 4
        %v617 = vpop.permute.xlu0 %616
        %618 = vrot.lane.b32.xlu0 %v538, 4
        %v619 = vpop.permute.xlu0 %618
        %620 = vrot.lane.b32.xlu0 %v539, 4
        %v621 = vpop.permute.xlu0 %620
        %622 = vrot.lane.b32.xlu0 %v540, 4
        %v623 = vpop.permute.xlu0 %622
        %624 = vrot.lane.b32.xlu0 %v541, 4
        %v625 = vpop.permute.xlu0 %624
        %626 = vrot.lane.b32.xlu0 %v542, 4
        %v627 = vpop.permute.xlu0 %626
        %628 = vrot.lane.b32.xlu0 %v543, 4
        %v629 = vpop.permute.xlu0 %628
        %630 = vrot.lane.b32.xlu0 %v544, 4
        %v631 = vpop.permute.xlu0 %630
        %632 = vrot.lane.b32.xlu0 %v545, 4
        %v633 = vpop.permute.xlu0 %632
        %634 = vrot.lane.b32.xlu0 %v546, 4
        %v635 = vpop.permute.xlu0 %634
        %636 = vrot.lane.b32.xlu0 %v547, 4
        %v637 = vpop.permute.xlu0 %636
        %638 = vrot.lane.b32.xlu0 %v548, 4
        %v639 = vpop.permute.xlu0 %638
        %640 = vrot.lane.b32.xlu0 %v549, 4
        %v641 = vpop.permute.xlu0 %640
        %642 = vrot.lane.b32.xlu0 %v550, 4
        %v643 = vpop.permute.xlu0 %642
        %644 = vrot.lane.b32.xlu0 %v551, 4
        %v645 = vpop.permute.xlu0 %644
        %646 = vrot.lane.b32.xlu0 %v552, 4
        %v647 = vpop.permute.xlu0 %646
        %648 = vrot.lane.b32.xlu0 %v553, 4
        %v649 = vpop.permute.xlu0 %648
        %vm682 = vcmask 64544
        %683 = vst.msk [vmem:[#allocation4] sm:$0xff] %vm682, %v587
        %684 = vst.msk [vmem:[#allocation4 + $0x8] sm:$0xff] %vm682, %v589
        %685 = vst.msk [vmem:[#allocation4 + $0x10] sm:$0xff] %vm682, %v591
        %686 = vst.msk [vmem:[#allocation4 + $0x18] sm:$0xff] %vm682, %v593
        %687 = vst.msk [vmem:[#allocation4 + $0x20] sm:$0xff] %vm682, %v595
        %688 = vst.msk [vmem:[#allocation4 + $0x28] sm:$0xff] %vm682, %v597
        %689 = vst.msk [vmem:[#allocation4 + $0x30] sm:$0xff] %vm682, %v599
        %690 = vst.msk [vmem:[#allocation4 + $0x38] sm:$0xff] %vm682, %v601
        %691 = vst.msk [vmem:[#allocation4 + $0x40] sm:$0xff] %vm682, %v603
        %692 = vst.msk [vmem:[#allocation4 + $0x48] sm:$0xff] %vm682, %v605
        %693 = vst.msk [vmem:[#allocation4 + $0x50] sm:$0xff] %vm682, %v607
        %694 = vst.msk [vmem:[#allocation4 + $0x58] sm:$0xff] %vm682, %v609
        %695 = vst.msk [vmem:[#allocation4 + $0x60] sm:$0xff] %vm682, %v611
        %696 = vst.msk [vmem:[#allocation4 + $0x68] sm:$0xff] %vm682, %v613
        %697 = vst.msk [vmem:[#allocation4 + $0x70] sm:$0xff] %vm682, %v615
        %698 = vst.msk [vmem:[#allocation4 + $0x78] sm:$0xff] %vm682, %v617
        %699 = vst.msk [vmem:[#allocation4 + $0x80] sm:$0xff] %vm682, %v619
        %700 = vst.msk [vmem:[#allocation4 + $0x88] sm:$0xff] %vm682, %v621
        %701 = vst.msk [vmem:[#allocation4 + $0x90] sm:$0xff] %vm682, %v623
        %702 = vst.msk [vmem:[#allocation4 + $0x98] sm:$0xff] %vm682, %v625
        %703 = vst.msk [vmem:[#allocation4 + $0xa0] sm:$0xff] %vm682, %v627
        %704 = vst.msk [vmem:[#allocation4 + $0xa8] sm:$0xff] %vm682, %v629
        %705 = vst.msk [vmem:[#allocation4 + $0xb0] sm:$0xff] %vm682, %v631
        %706 = vst.msk [vmem:[#allocation4 + $0xb8] sm:$0xff] %vm682, %v633
        %707 = vst.msk [vmem:[#allocation4 + $0xc0] sm:$0xff] %vm682, %v635
        %708 = vst.msk [vmem:[#allocation4 + $0xc8] sm:$0xff] %vm682, %v637
        %709 = vst.msk [vmem:[#allocation4 + $0xd0] sm:$0xff] %vm682, %v639
        %710 = vst.msk [vmem:[#allocation4 + $0xd8] sm:$0xff] %vm682, %v641
        %711 = vst.msk [vmem:[#allocation4 + $0xe0] sm:$0xff] %vm682, %v643
        %712 = vst.msk [vmem:[#allocation4 + $0xe8] sm:$0xff] %vm682, %v645
        %713 = vst.msk [vmem:[#allocation4 + $0xf0] sm:$0xff] %vm682, %v647
        %714 = vst.msk [vmem:[#allocation4 + $0xf8] sm:$0xff] %vm682, %v649
        %v715 = vld [vmem:[#allocation2 + $0x2] sm:$0xff]
        %v716 = vld [vmem:[#allocation2 + $0xa] sm:$0xff]
        %v717 = vld [vmem:[#allocation2 + $0x1a] sm:$0xff]
        %v718 = vld [vmem:[#allocation2 + $0x22] sm:$0xff]
        %v719 = vld [vmem:[#allocation2 + $0x32] sm:$0xff]
        %v720 = vld [vmem:[#allocation2 + $0x3a] sm:$0xff]
        %v721 = vld [vmem:[#allocation2 + $0x4a] sm:$0xff]
        %v722 = vld [vmem:[#allocation2 + $0x52] sm:$0xff]
        %v723 = vld [vmem:[#allocation2 + $0x62] sm:$0xff]
        %v724 = vld [vmem:[#allocation2 + $0x6a] sm:$0xff]
        %v725 = vld [vmem:[#allocation2 + $0x7a] sm:$0xff]
        %v726 = vld [vmem:[#allocation2 + $0x82] sm:$0xff]
        %v727 = vld [vmem:[#allocation2 + $0x92] sm:$0xff]
        %v728 = vld [vmem:[#allocation2 + $0x9a] sm:$0xff]
        %v729 = vld [vmem:[#allocation2 + $0xaa] sm:$0xff]
        %v730 = vld [vmem:[#allocation2 + $0xb2] sm:$0xff]
        %v731 = vld [vmem:[#allocation2 + $0xc2] sm:$0xff]
        %v732 = vld [vmem:[#allocation2 + $0xca] sm:$0xff]
        %v733 = vld [vmem:[#allocation2 + $0xda] sm:$0xff]
        %v734 = vld [vmem:[#allocation2 + $0xe2] sm:$0xff]
        %v735 = vld [vmem:[#allocation2 + $0xf2] sm:$0xff]
        %v736 = vld [vmem:[#allocation2 + $0xfa] sm:$0xff]
        %v737 = vld [vmem:[#allocation2 + $0x10a] sm:$0xff]
        %v738 = vld [vmem:[#allocation2 + $0x112] sm:$0xff]
        %v739 = vld [vmem:[#allocation2 + $0x122] sm:$0xff]
        %v740 = vld [vmem:[#allocation2 + $0x12a] sm:$0xff]
        %v741 = vld [vmem:[#allocation2 + $0x13a] sm:$0xff]
        %v742 = vld [vmem:[#allocation2 + $0x142] sm:$0xff]
        %v743 = vld [vmem:[#allocation2 + $0x152] sm:$0xff]
        %v744 = vld [vmem:[#allocation2 + $0x15a] sm:$0xff]
        %v745 = vld [vmem:[#allocation2 + $0x16a] sm:$0xff]
        %v746 = vld [vmem:[#allocation2 + $0x172] sm:$0xff]
        %779 = vrot.lane.b32.xlu0 %v715, 8
        %v780 = vpop.permute.xlu0 %779
        %781 = vrot.lane.b32.xlu0 %v716, 8
        %v782 = vpop.permute.xlu0 %781
        %783 = vrot.lane.b32.xlu0 %v717, 8
        %v784 = vpop.permute.xlu0 %783
        %785 = vrot.lane.b32.xlu0 %v718, 8
        %v786 = vpop.permute.xlu0 %785
        %787 = vrot.lane.b32.xlu0 %v719, 8
        %v788 = vpop.permute.xlu0 %787
        %789 = vrot.lane.b32.xlu0 %v720, 8
        %v790 = vpop.permute.xlu0 %789
        %791 = vrot.lane.b32.xlu0 %v721, 8
        %v792 = vpop.permute.xlu0 %791
        %793 = vrot.lane.b32.xlu0 %v722, 8
        %v794 = vpop.permute.xlu0 %793
        %795 = vrot.lane.b32.xlu0 %v723, 8
        %v796 = vpop.permute.xlu0 %795
        %797 = vrot.lane.b32.xlu0 %v724, 8
        %v798 = vpop.permute.xlu0 %797
        %799 = vrot.lane.b32.xlu0 %v725, 8
        %v800 = vpop.permute.xlu0 %799
        %801 = vrot.lane.b32.xlu0 %v726, 8
        %v802 = vpop.permute.xlu0 %801
        %803 = vrot.lane.b32.xlu0 %v727, 8
        %v804 = vpop.permute.xlu0 %803
        %805 = vrot.lane.b32.xlu0 %v728, 8
        %v806 = vpop.permute.xlu0 %805
        %807 = vrot.lane.b32.xlu0 %v729, 8
        %v808 = vpop.permute.xlu0 %807
        %809 = vrot.lane.b32.xlu0 %v730, 8
        %v810 = vpop.permute.xlu0 %809
        %811 = vrot.lane.b32.xlu0 %v731, 8
        %v812 = vpop.permute.xlu0 %811
        %813 = vrot.lane.b32.xlu0 %v732, 8
        %v814 = vpop.permute.xlu0 %813
        %815 = vrot.lane.b32.xlu0 %v733, 8
        %v816 = vpop.permute.xlu0 %815
        %817 = vrot.lane.b32.xlu0 %v734, 8
        %v818 = vpop.permute.xlu0 %817
        %819 = vrot.lane.b32.xlu0 %v735, 8
        %v820 = vpop.permute.xlu0 %819
        %821 = vrot.lane.b32.xlu0 %v736, 8
        %v822 = vpop.permute.xlu0 %821
        %823 = vrot.lane.b32.xlu0 %v737, 8
        %v824 = vpop.permute.xlu0 %823
        %825 = vrot.lane.b32.xlu0 %v738, 8
        %v826 = vpop.permute.xlu0 %825
        %827 = vrot.lane.b32.xlu0 %v739, 8
        %v828 = vpop.permute.xlu0 %827
        %829 = vrot.lane.b32.xlu0 %v740, 8
        %v830 = vpop.permute.xlu0 %829
        %831 = vrot.lane.b32.xlu0 %v741, 8
        %v832 = vpop.permute.xlu0 %831
        %833 = vrot.lane.b32.xlu0 %v742, 8
        %v834 = vpop.permute.xlu0 %833
        %835 = vrot.lane.b32.xlu0 %v743, 8
        %v836 = vpop.permute.xlu0 %835
        %837 = vrot.lane.b32.xlu0 %v744, 8
        %v838 = vpop.permute.xlu0 %837
        %839 = vrot.lane.b32.xlu0 %v745, 8
        %v840 = vpop.permute.xlu0 %839
        %841 = vrot.lane.b32.xlu0 %v746, 8
        %v842 = vpop.permute.xlu0 %841
        %vm875 = vcmask 97344
        %876 = vst.msk [vmem:[#allocation4] sm:$0xff] %vm875, %v780
        %877 = vst.msk [vmem:[#allocation4 + $0x8] sm:$0xff] %vm875, %v782
        %878 = vst.msk [vmem:[#allocation4 + $0x10] sm:$0xff] %vm875, %v784
        %879 = vst.msk [vmem:[#allocation4 + $0x18] sm:$0xff] %vm875, %v786
        %880 = vst.msk [vmem:[#allocation4 + $0x20] sm:$0xff] %vm875, %v788
        %881 = vst.msk [vmem:[#allocation4 + $0x28] sm:$0xff] %vm875, %v790
        %882 = vst.msk [vmem:[#allocation4 + $0x30] sm:$0xff] %vm875, %v792
        %883 = vst.msk [vmem:[#allocation4 + $0x38] sm:$0xff] %vm875, %v794
        %884 = vst.msk [vmem:[#allocation4 + $0x40] sm:$0xff] %vm875, %v796
        %885 = vst.msk [vmem:[#allocation4 + $0x48] sm:$0xff] %vm875, %v798
        %886 = vst.msk [vmem:[#allocation4 + $0x50] sm:$0xff] %vm875, %v800
        %887 = vst.msk [vmem:[#allocation4 + $0x58] sm:$0xff] %vm875, %v802
        %888 = vst.msk [vmem:[#allocation4 + $0x60] sm:$0xff] %vm875, %v804
        %889 = vst.msk [vmem:[#allocation4 + $0x68] sm:$0xff] %vm875, %v806
        %890 = vst.msk [vmem:[#allocation4 + $0x70] sm:$0xff] %vm875, %v808
        %891 = vst.msk [vmem:[#allocation4 + $0x78] sm:$0xff] %vm875, %v810
        %892 = vst.msk [vmem:[#allocation4 + $0x80] sm:$0xff] %vm875, %v812
        %893 = vst.msk [vmem:[#allocation4 + $0x88] sm:$0xff] %vm875, %v814
        %894 = vst.msk [vmem:[#allocation4 + $0x90] sm:$0xff] %vm875, %v816
        %895 = vst.msk [vmem:[#allocation4 + $0x98] sm:$0xff] %vm875, %v818
        %896 = vst.msk [vmem:[#allocation4 + $0xa0] sm:$0xff] %vm875, %v820
        %897 = vst.msk [vmem:[#allocation4 + $0xa8] sm:$0xff] %vm875, %v822
        %898 = vst.msk [vmem:[#allocation4 + $0xb0] sm:$0xff] %vm875, %v824
        %899 = vst.msk [vmem:[#allocation4 + $0xb8] sm:$0xff] %vm875, %v826
        %900 = vst.msk [vmem:[#allocation4 + $0xc0] sm:$0xff] %vm875, %v828
        %901 = vst.msk [vmem:[#allocation4 + $0xc8] sm:$0xff] %vm875, %v830
        %902 = vst.msk [vmem:[#allocation4 + $0xd0] sm:$0xff] %vm875, %v832
        %903 = vst.msk [vmem:[#allocation4 + $0xd8] sm:$0xff] %vm875, %v834
        %904 = vst.msk [vmem:[#allocation4 + $0xe0] sm:$0xff] %vm875, %v836
        %905 = vst.msk [vmem:[#allocation4 + $0xe8] sm:$0xff] %vm875, %v838
        %906 = vst.msk [vmem:[#allocation4 + $0xf0] sm:$0xff] %vm875, %v840
        %907 = vst.msk [vmem:[#allocation4 + $0xf8] sm:$0xff] %vm875, %v842
        %v908 = vld [vmem:[%s425] sm:$0xff]
        %v909 = vld [vmem:[%s425 + $0x8] sm:$0xff]
        %v910 = vld [vmem:[%s425 + $0x18] sm:$0xff]
        %v911 = vld [vmem:[%s425 + $0x20] sm:$0xff]
        %v912 = vld [vmem:[%s425 + $0x30] sm:$0xff]
        %v913 = vld [vmem:[%s425 + $0x38] sm:$0xff]
        %v914 = vld [vmem:[%s425 + $0x48] sm:$0xff]
        %v915 = vld [vmem:[%s425 + $0x50] sm:$0xff]
        %v916 = vld [vmem:[%s425 + $0x60] sm:$0xff]
        %v917 = vld [vmem:[%s425 + $0x68] sm:$0xff]
        %v918 = vld [vmem:[%s425 + $0x78] sm:$0xff]
        %v919 = vld [vmem:[%s425 + $0x80] sm:$0xff]
        %v920 = vld [vmem:[%s425 + $0x90] sm:$0xff]
        %v921 = vld [vmem:[%s425 + $0x98] sm:$0xff]
        %v922 = vld [vmem:[%s425 + $0xa8] sm:$0xff]
        %v923 = vld [vmem:[%s425 + $0xb0] sm:$0xff]
        %v924 = vld [vmem:[%s425 + $0xc0] sm:$0xff]
        %v925 = vld [vmem:[%s425 + $0xc8] sm:$0xff]
        %v926 = vld [vmem:[%s425 + $0xd8] sm:$0xff]
        %v927 = vld [vmem:[%s425 + $0xe0] sm:$0xff]
        %v928 = vld [vmem:[%s425 + $0xf0] sm:$0xff]
        %v929 = vld [vmem:[%s425 + $0xf8] sm:$0xff]
        %v930 = vld [vmem:[%s425 + $0x108] sm:$0xff]
        %v931 = vld [vmem:[%s425 + $0x110] sm:$0xff]
        %v932 = vld [vmem:[%s425 + $0x120] sm:$0xff]
        %v933 = vld [vmem:[%s425 + $0x128] sm:$0xff]
        %v934 = vld [vmem:[%s425 + $0x138] sm:$0xff]
        %v935 = vld [vmem:[%s425 + $0x140] sm:$0xff]
        %v936 = vld [vmem:[%s425 + $0x150] sm:$0xff]
        %v937 = vld [vmem:[%s425 + $0x158] sm:$0xff]
        %v938 = vld [vmem:[%s425 + $0x168] sm:$0xff]
        %v939 = vld [vmem:[%s425 + $0x170] sm:$0xff]
        %972 = vrot.lane.b32.xlu0 %v908, 12
        %v973 = vpop.permute.xlu0 %972
        %974 = vrot.lane.b32.xlu0 %v909, 12
        %v975 = vpop.permute.xlu0 %974
        %976 = vrot.lane.b32.xlu0 %v910, 12
        %v977 = vpop.permute.xlu0 %976
        %978 = vrot.lane.b32.xlu0 %v911, 12
        %v979 = vpop.permute.xlu0 %978
        %980 = vrot.lane.b32.xlu0 %v912, 12
        %v981 = vpop.permute.xlu0 %980
        %982 = vrot.lane.b32.xlu0 %v913, 12
        %v983 = vpop.permute.xlu0 %982
        %984 = vrot.lane.b32.xlu0 %v914, 12
        %v985 = vpop.permute.xlu0 %984
        %986 = vrot.lane.b32.xlu0 %v915, 12
        %v987 = vpop.permute.xlu0 %986
        %988 = vrot.lane.b32.xlu0 %v916, 12
        %v989 = vpop.permute.xlu0 %988
        %990 = vrot.lane.b32.xlu0 %v917, 12
        %v991 = vpop.permute.xlu0 %990
        %992 = vrot.lane.b32.xlu0 %v918, 12
        %v993 = vpop.permute.xlu0 %992
        %994 = vrot.lane.b32.xlu0 %v919, 12
        %v995 = vpop.permute.xlu0 %994
        %996 = vrot.lane.b32.xlu0 %v920, 12
        %v997 = vpop.permute.xlu0 %996
        %998 = vrot.lane.b32.xlu0 %v921, 12
        %v999 = vpop.permute.xlu0 %998
        %1000 = vrot.lane.b32.xlu0 %v922, 12
        %v1001 = vpop.permute.xlu0 %1000
        %1002 = vrot.lane.b32.xlu0 %v923, 12
        %v1003 = vpop.permute.xlu0 %1002
        %1004 = vrot.lane.b32.xlu0 %v924, 12
        %v1005 = vpop.permute.xlu0 %1004
        %1006 = vrot.lane.b32.xlu0 %v925, 12
        %v1007 = vpop.permute.xlu0 %1006
        %1008 = vrot.lane.b32.xlu0 %v926, 12
        %v1009 = vpop.permute.xlu0 %1008
        %1010 = vrot.lane.b32.xlu0 %v927, 12
        %v1011 = vpop.permute.xlu0 %1010
        %1012 = vrot.lane.b32.xlu0 %v928, 12
        %v1013 = vpop.permute.xlu0 %1012
        %1014 = vrot.lane.b32.xlu0 %v929, 12
        %v1015 = vpop.permute.xlu0 %1014
        %1016 = vrot.lane.b32.xlu0 %v930, 12
        %v1017 = vpop.permute.xlu0 %1016
        %1018 = vrot.lane.b32.xlu0 %v931, 12
        %v1019 = vpop.permute.xlu0 %1018
        %1020 = vrot.lane.b32.xlu0 %v932, 12
        %v1021 = vpop.permute.xlu0 %1020
        %1022 = vrot.lane.b32.xlu0 %v933, 12
        %v1023 = vpop.permute.xlu0 %1022
        %1024 = vrot.lane.b32.xlu0 %v934, 12
        %v1025 = vpop.permute.xlu0 %1024
        %1026 = vrot.lane.b32.xlu0 %v935, 12
        %v1027 = vpop.permute.xlu0 %1026
        %1028 = vrot.lane.b32.xlu0 %v936, 12
        %v1029 = vpop.permute.xlu0 %1028
        %1030 = vrot.lane.b32.xlu0 %v937, 12
        %v1031 = vpop.permute.xlu0 %1030
        %1032 = vrot.lane.b32.xlu0 %v938, 12
        %v1033 = vpop.permute.xlu0 %1032
        %1034 = vrot.lane.b32.xlu0 %v939, 12
        %v1035 = vpop.permute.xlu0 %1034
        %vm1068 = vcmask 130144
        %1069 = vst.msk [vmem:[#allocation4] sm:$0xff] %vm1068, %v973
        %1070 = vst.msk [vmem:[#allocation4 + $0x8] sm:$0xff] %vm1068, %v975
        %1071 = vst.msk [vmem:[#allocation4 + $0x10] sm:$0xff] %vm1068, %v977
        %1072 = vst.msk [vmem:[#allocation4 + $0x18] sm:$0xff] %vm1068, %v979
        %1073 = vst.msk [vmem:[#allocation4 + $0x20] sm:$0xff] %vm1068, %v981
        %1074 = vst.msk [vmem:[#allocation4 + $0x28] sm:$0xff] %vm1068, %v983
        %1075 = vst.msk [vmem:[#allocation4 + $0x30] sm:$0xff] %vm1068, %v985
        %1076 = vst.msk [vmem:[#allocation4 + $0x38] sm:$0xff] %vm1068, %v987
        %1077 = vst.msk [vmem:[#allocation4 + $0x40] sm:$0xff] %vm1068, %v989
        %1078 = vst.msk [vmem:[#allocation4 + $0x48] sm:$0xff] %vm1068, %v991
        %1079 = vst.msk [vmem:[#allocation4 + $0x50] sm:$0xff] %vm1068, %v993
        %1080 = vst.msk [vmem:[#allocation4 + $0x58] sm:$0xff] %vm1068, %v995
        %1081 = vst.msk [vmem:[#allocation4 + $0x60] sm:$0xff] %vm1068, %v997
        %1082 = vst.msk [vmem:[#allocation4 + $0x68] sm:$0xff] %vm1068, %v999
        %1083 = vst.msk [vmem:[#allocation4 + $0x70] sm:$0xff] %vm1068, %v1001
        %1084 = vst.msk [vmem:[#allocation4 + $0x78] sm:$0xff] %vm1068, %v1003
        %1085 = vst.msk [vmem:[#allocation4 + $0x80] sm:$0xff] %vm1068, %v1005
        %1086 = vst.msk [vmem:[#allocation4 + $0x88] sm:$0xff] %vm1068, %v1007
        %1087 = vst.msk [vmem:[#allocation4 + $0x90] sm:$0xff] %vm1068, %v1009
        %1088 = vst.msk [vmem:[#allocation4 + $0x98] sm:$0xff] %vm1068, %v1011
        %1089 = vst.msk [vmem:[#allocation4 + $0xa0] sm:$0xff] %vm1068, %v1013
        %1090 = vst.msk [vmem:[#allocation4 + $0xa8] sm:$0xff] %vm1068, %v1015
        %1091 = vst.msk [vmem:[#allocation4 + $0xb0] sm:$0xff] %vm1068, %v1017
        %1092 = vst.msk [vmem:[#allocation4 + $0xb8] sm:$0xff] %vm1068, %v1019
        %1093 = vst.msk [vmem:[#allocation4 + $0xc0] sm:$0xff] %vm1068, %v1021
        %1094 = vst.msk [vmem:[#allocation4 + $0xc8] sm:$0xff] %vm1068, %v1023
        %1095 = vst.msk [vmem:[#allocation4 + $0xd0] sm:$0xff] %vm1068, %v1025
        %1096 = vst.msk [vmem:[#allocation4 + $0xd8] sm:$0xff] %vm1068, %v1027
        %1097 = vst.msk [vmem:[#allocation4 + $0xe0] sm:$0xff] %vm1068, %v1029
        %1098 = vst.msk [vmem:[#allocation4 + $0xe8] sm:$0xff] %vm1068, %v1031
        %1099 = vst.msk [vmem:[#allocation4 + $0xf0] sm:$0xff] %vm1068, %v1033
        %1100 = vst.msk [vmem:[#allocation4 + $0xf8] sm:$0xff] %vm1068, %v1035
        %v1101 = vld [vmem:[%s425 + $0x1] sm:$0xff]
        %v1102 = vld [vmem:[%s425 + $0x9] sm:$0xff]
        %v1103 = vld [vmem:[%s425 + $0x19] sm:$0xff]
        %v1104 = vld [vmem:[%s425 + $0x21] sm:$0xff]
        %v1105 = vld [vmem:[%s425 + $0x31] sm:$0xff]
        %v1106 = vld [vmem:[%s425 + $0x39] sm:$0xff]
        %v1107 = vld [vmem:[%s425 + $0x49] sm:$0xff]
        %v1108 = vld [vmem:[%s425 + $0x51] sm:$0xff]
        %v1109 = vld [vmem:[%s425 + $0x61] sm:$0xff]
        %v1110 = vld [vmem:[%s425 + $0x69] sm:$0xff]
        %v1111 = vld [vmem:[%s425 + $0x79] sm:$0xff]
        %v1112 = vld [vmem:[%s425 + $0x81] sm:$0xff]
        %v1113 = vld [vmem:[%s425 + $0x91] sm:$0xff]
        %v1114 = vld [vmem:[%s425 + $0x99] sm:$0xff]
        %v1115 = vld [vmem:[%s425 + $0xa9] sm:$0xff]
        %v1116 = vld [vmem:[%s425 + $0xb1] sm:$0xff]
        %v1117 = vld [vmem:[%s425 + $0xc1] sm:$0xff]
        %v1118 = vld [vmem:[%s425 + $0xc9] sm:$0xff]
        %v1119 = vld [vmem:[%s425 + $0xd9] sm:$0xff]
        %v1120 = vld [vmem:[%s425 + $0xe1] sm:$0xff]
        %v1121 = vld [vmem:[%s425 + $0xf1] sm:$0xff]
        %v1122 = vld [vmem:[%s425 + $0xf9] sm:$0xff]
        %v1123 = vld [vmem:[%s425 + $0x109] sm:$0xff]
        %v1124 = vld [vmem:[%s425 + $0x111] sm:$0xff]
        %v1125 = vld [vmem:[%s425 + $0x121] sm:$0xff]
        %v1126 = vld [vmem:[%s425 + $0x129] sm:$0xff]
        %v1127 = vld [vmem:[%s425 + $0x139] sm:$0xff]
        %v1128 = vld [vmem:[%s425 + $0x141] sm:$0xff]
        %v1129 = vld [vmem:[%s425 + $0x151] sm:$0xff]
        %v1130 = vld [vmem:[%s425 + $0x159] sm:$0xff]
        %v1131 = vld [vmem:[%s425 + $0x169] sm:$0xff]
        %v1132 = vld [vmem:[%s425 + $0x171] sm:$0xff]
        %1165 = vrot.lane.b32.xlu0 %v1101, 16
        %v1166 = vpop.permute.xlu0 %1165
        %1167 = vrot.lane.b32.xlu0 %v1102, 16
        %v1168 = vpop.permute.xlu0 %1167
        %1169 = vrot.lane.b32.xlu0 %v1103, 16
        %v1170 = vpop.permute.xlu0 %1169
        %1171 = vrot.lane.b32.xlu0 %v1104, 16
        %v1172 = vpop.permute.xlu0 %1171
        %1173 = vrot.lane.b32.xlu0 %v1105, 16
        %v1174 = vpop.permute.xlu0 %1173
        %1175 = vrot.lane.b32.xlu0 %v1106, 16
        %v1176 = vpop.permute.xlu0 %1175
        %1177 = vrot.lane.b32.xlu0 %v1107, 16
        %v1178 = vpop.permute.xlu0 %1177
        %1179 = vrot.lane.b32.xlu0 %v1108, 16
        %v1180 = vpop.permute.xlu0 %1179
        %1181 = vrot.lane.b32.xlu0 %v1109, 16
        %v1182 = vpop.permute.xlu0 %1181
        %1183 = vrot.lane.b32.xlu0 %v1110, 16
        %v1184 = vpop.permute.xlu0 %1183
        %1185 = vrot.lane.b32.xlu0 %v1111, 16
        %v1186 = vpop.permute.xlu0 %1185
        %1187 = vrot.lane.b32.xlu0 %v1112, 16
        %v1188 = vpop.permute.xlu0 %1187
        %1189 = vrot.lane.b32.xlu0 %v1113, 16
        %v1190 = vpop.permute.xlu0 %1189
        %1191 = vrot.lane.b32.xlu0 %v1114, 16
        %v1192 = vpop.permute.xlu0 %1191
        %1193 = vrot.lane.b32.xlu0 %v1115, 16
        %v1194 = vpop.permute.xlu0 %1193
        %1195 = vrot.lane.b32.xlu0 %v1116, 16
        %v1196 = vpop.permute.xlu0 %1195
        %1197 = vrot.lane.b32.xlu0 %v1117, 16
        %v1198 = vpop.permute.xlu0 %1197
        %1199 = vrot.lane.b32.xlu0 %v1118, 16
        %v1200 = vpop.permute.xlu0 %1199
        %1201 = vrot.lane.b32.xlu0 %v1119, 16
        %v1202 = vpop.permute.xlu0 %1201
        %1203 = vrot.lane.b32.xlu0 %v1120, 16
        %v1204 = vpop.permute.xlu0 %1203
        %1205 = vrot.lane.b32.xlu0 %v1121, 16
        %v1206 = vpop.permute.xlu0 %1205
        %1207 = vrot.lane.b32.xlu0 %v1122, 16
        %v1208 = vpop.permute.xlu0 %1207
        %1209 = vrot.lane.b32.xlu0 %v1123, 16
        %v1210 = vpop.permute.xlu0 %1209
        %1211 = vrot.lane.b32.xlu0 %v1124, 16
        %v1212 = vpop.permute.xlu0 %1211
        %1213 = vrot.lane.b32.xlu0 %v1125, 16
        %v1214 = vpop.permute.xlu0 %1213
        %1215 = vrot.lane.b32.xlu0 %v1126, 16
        %v1216 = vpop.permute.xlu0 %1215
        %1217 = vrot.lane.b32.xlu0 %v1127, 16
        %v1218 = vpop.permute.xlu0 %1217
        %1219 = vrot.lane.b32.xlu0 %v1128, 16
        %v1220 = vpop.permute.xlu0 %1219
        %1221 = vrot.lane.b32.xlu0 %v1129, 16
        %v1222 = vpop.permute.xlu0 %1221
        %1223 = vrot.lane.b32.xlu0 %v1130, 16
        %v1224 = vpop.permute.xlu0 %1223
        %1225 = vrot.lane.b32.xlu0 %v1131, 16
        %v1226 = vpop.permute.xlu0 %1225
        %1227 = vrot.lane.b32.xlu0 %v1132, 16
        %v1228 = vpop.permute.xlu0 %1227
        %vm1261 = vcmask 162944
        %1262 = vst.msk [vmem:[#allocation4] sm:$0xff] %vm1261, %v1166
        %1263 = vst.msk [vmem:[#allocation4 + $0x8] sm:$0xff] %vm1261, %v1168
        %1264 = vst.msk [vmem:[#allocation4 + $0x10] sm:$0xff] %vm1261, %v1170
        %1265 = vst.msk [vmem:[#allocation4 + $0x18] sm:$0xff] %vm1261, %v1172
        %1266 = vst.msk [vmem:[#allocation4 + $0x20] sm:$0xff] %vm1261, %v1174
        %1267 = vst.msk [vmem:[#allocation4 + $0x28] sm:$0xff] %vm1261, %v1176
        %1268 = vst.msk [vmem:[#allocation4 + $0x30] sm:$0xff] %vm1261, %v1178
        %1269 = vst.msk [vmem:[#allocation4 + $0x38] sm:$0xff] %vm1261, %v1180
        %1270 = vst.msk [vmem:[#allocation4 + $0x40] sm:$0xff] %vm1261, %v1182
        %1271 = vst.msk [vmem:[#allocation4 + $0x48] sm:$0xff] %vm1261, %v1184
        %1272 = vst.msk [vmem:[#allocation4 + $0x50] sm:$0xff] %vm1261, %v1186
        %1273 = vst.msk [vmem:[#allocation4 + $0x58] sm:$0xff] %vm1261, %v1188
        %1274 = vst.msk [vmem:[#allocation4 + $0x60] sm:$0xff] %vm1261, %v1190
        %1275 = vst.msk [vmem:[#allocation4 + $0x68] sm:$0xff] %vm1261, %v1192
        %1276 = vst.msk [vmem:[#allocation4 + $0x70] sm:$0xff] %vm1261, %v1194
        %1277 = vst.msk [vmem:[#allocation4 + $0x78] sm:$0xff] %vm1261, %v1196
        %1278 = vst.msk [vmem:[#allocation4 + $0x80] sm:$0xff] %vm1261, %v1198
        %1279 = vst.msk [vmem:[#allocation4 + $0x88] sm:$0xff] %vm1261, %v1200
        %1280 = vst.msk [vmem:[#allocation4 + $0x90] sm:$0xff] %vm1261, %v1202
        %1281 = vst.msk [vmem:[#allocation4 + $0x98] sm:$0xff] %vm1261, %v1204
        %1282 = vst.msk [vmem:[#allocation4 + $0xa0] sm:$0xff] %vm1261, %v1206
        %1283 = vst.msk [vmem:[#allocation4 + $0xa8] sm:$0xff] %vm1261, %v1208
        %1284 = vst.msk [vmem:[#allocation4 + $0xb0] sm:$0xff] %vm1261, %v1210
        %1285 = vst.msk [vmem:[#allocation4 + $0xb8] sm:$0xff] %vm1261, %v1212
        %1286 = vst.msk [vmem:[#allocation4 + $0xc0] sm:$0xff] %vm1261, %v1214
        %1287 = vst.msk [vmem:[#allocation4 + $0xc8] sm:$0xff] %vm1261, %v1216
        %1288 = vst.msk [vmem:[#allocation4 + $0xd0] sm:$0xff] %vm1261, %v1218
        %1289 = vst.msk [vmem:[#allocation4 + $0xd8] sm:$0xff] %vm1261, %v1220
        %1290 = vst.msk [vmem:[#allocation4 + $0xe0] sm:$0xff] %vm1261, %v1222
        %1291 = vst.msk [vmem:[#allocation4 + $0xe8] sm:$0xff] %vm1261, %v1224
        %1292 = vst.msk [vmem:[#allocation4 + $0xf0] sm:$0xff] %vm1261, %v1226
        %1293 = vst.msk [vmem:[#allocation4 + $0xf8] sm:$0xff] %vm1261, %v1228
        %v1294 = vld [vmem:[%s425 + $0x2] sm:$0xff]
        %v1295 = vld [vmem:[%s425 + $0xa] sm:$0xff]
        %v1296 = vld [vmem:[%s425 + $0x1a] sm:$0xff]
        %v1297 = vld [vmem:[%s425 + $0x22] sm:$0xff]
        %v1298 = vld [vmem:[%s425 + $0x32] sm:$0xff]
        %v1299 = vld [vmem:[%s425 + $0x3a] sm:$0xff]
        %v1300 = vld [vmem:[%s425 + $0x4a] sm:$0xff]
        %v1301 = vld [vmem:[%s425 + $0x52] sm:$0xff]
        %v1302 = vld [vmem:[%s425 + $0x62] sm:$0xff]
        %v1303 = vld [vmem:[%s425 + $0x6a] sm:$0xff]
        %v1304 = vld [vmem:[%s425 + $0x7a] sm:$0xff]
        %v1305 = vld [vmem:[%s425 + $0x82] sm:$0xff]
        %v1306 = vld [vmem:[%s425 + $0x92] sm:$0xff]
        %v1307 = vld [vmem:[%s425 + $0x9a] sm:$0xff]
        %v1308 = vld [vmem:[%s425 + $0xaa] sm:$0xff]
        %v1309 = vld [vmem:[%s425 + $0xb2] sm:$0xff]
        %v1310 = vld [vmem:[%s425 + $0xc2] sm:$0xff]
        %v1311 = vld [vmem:[%s425 + $0xca] sm:$0xff]
        %v1312 = vld [vmem:[%s425 + $0xda] sm:$0xff]
        %v1313 = vld [vmem:[%s425 + $0xe2] sm:$0xff]
        %v1314 = vld [vmem:[%s425 + $0xf2] sm:$0xff]
        %v1315 = vld [vmem:[%s425 + $0xfa] sm:$0xff]
        %v1316 = vld [vmem:[%s425 + $0x10a] sm:$0xff]
        %v1317 = vld [vmem:[%s425 + $0x112] sm:$0xff]
        %v1318 = vld [vmem:[%s425 + $0x122] sm:$0xff]
        %v1319 = vld [vmem:[%s425 + $0x12a] sm:$0xff]
        %v1320 = vld [vmem:[%s425 + $0x13a] sm:$0xff]
        %v1321 = vld [vmem:[%s425 + $0x142] sm:$0xff]
        %v1322 = vld [vmem:[%s425 + $0x152] sm:$0xff]
        %v1323 = vld [vmem:[%s425 + $0x15a] sm:$0xff]
        %v1324 = vld [vmem:[%s425 + $0x16a] sm:$0xff]
        %v1325 = vld [vmem:[%s425 + $0x172] sm:$0xff]
        %1358 = vrot.lane.b32.xlu0 %v1294, 20
        %v1359 = vpop.permute.xlu0 %1358
        %1360 = vrot.lane.b32.xlu0 %v1295, 20
        %v1361 = vpop.permute.xlu0 %1360
        %1362 = vrot.lane.b32.xlu0 %v1296, 20
        %v1363 = vpop.permute.xlu0 %1362
        %1364 = vrot.lane.b32.xlu0 %v1297, 20
        %v1365 = vpop.permute.xlu0 %1364
        %1366 = vrot.lane.b32.xlu0 %v1298, 20
        %v1367 = vpop.permute.xlu0 %1366
        %1368 = vrot.lane.b32.xlu0 %v1299, 20
        %v1369 = vpop.permute.xlu0 %1368
        %1370 = vrot.lane.b32.xlu0 %v1300, 20
        %v1371 = vpop.permute.xlu0 %1370
        %1372 = vrot.lane.b32.xlu0 %v1301, 20
        %v1373 = vpop.permute.xlu0 %1372
        %1374 = vrot.lane.b32.xlu0 %v1302, 20
        %v1375 = vpop.permute.xlu0 %1374
        %1376 = vrot.lane.b32.xlu0 %v1303, 20
        %v1377 = vpop.permute.xlu0 %1376
        %1378 = vrot.lane.b32.xlu0 %v1304, 20
        %v1379 = vpop.permute.xlu0 %1378
        %1380 = vrot.lane.b32.xlu0 %v1305, 20
        %v1381 = vpop.permute.xlu0 %1380
        %1382 = vrot.lane.b32.xlu0 %v1306, 20
        %v1383 = vpop.permute.xlu0 %1382
        %1384 = vrot.lane.b32.xlu0 %v1307, 20
        %v1385 = vpop.permute.xlu0 %1384
        %1386 = vrot.lane.b32.xlu0 %v1308, 20
        %v1387 = vpop.permute.xlu0 %1386
        %1388 = vrot.lane.b32.xlu0 %v1309, 20
        %v1389 = vpop.permute.xlu0 %1388
        %1390 = vrot.lane.b32.xlu0 %v1310, 20
        %v1391 = vpop.permute.xlu0 %1390
        %1392 = vrot.lane.b32.xlu0 %v1311, 20
        %v1393 = vpop.permute.xlu0 %1392
        %1394 = vrot.lane.b32.xlu0 %v1312, 20
        %v1395 = vpop.permute.xlu0 %1394
        %1396 = vrot.lane.b32.xlu0 %v1313, 20
        %v1397 = vpop.permute.xlu0 %1396
        %1398 = vrot.lane.b32.xlu0 %v1314, 20
        %v1399 = vpop.permute.xlu0 %1398
        %1400 = vrot.lane.b32.xlu0 %v1315, 20
        %v1401 = vpop.permute.xlu0 %1400
        %1402 = vrot.lane.b32.xlu0 %v1316, 20
        %v1403 = vpop.permute.xlu0 %1402
        %1404 = vrot.lane.b32.xlu0 %v1317, 20
        %v1405 = vpop.permute.xlu0 %1404
        %1406 = vrot.lane.b32.xlu0 %v1318, 20
        %v1407 = vpop.permute.xlu0 %1406
        %1408 = vrot.lane.b32.xlu0 %v1319, 20
        %v1409 = vpop.permute.xlu0 %1408
        %1410 = vrot.lane.b32.xlu0 %v1320, 20
        %v1411 = vpop.permute.xlu0 %1410
        %1412 = vrot.lane.b32.xlu0 %v1321, 20
        %v1413 = vpop.permute.xlu0 %1412
        %1414 = vrot.lane.b32.xlu0 %v1322, 20
        %v1415 = vpop.permute.xlu0 %1414
        %1416 = vrot.lane.b32.xlu0 %v1323, 20
        %v1417 = vpop.permute.xlu0 %1416
        %1418 = vrot.lane.b32.xlu0 %v1324, 20
        %v1419 = vpop.permute.xlu0 %1418
        %1420 = vrot.lane.b32.xlu0 %v1325, 20
        %v1421 = vpop.permute.xlu0 %1420
        %vm1454 = vcmask 195744
        %1455 = vst.msk [vmem:[#allocation4] sm:$0xff] %vm1454, %v1359
        %1456 = vst.msk [vmem:[#allocation4 + $0x8] sm:$0xff] %vm1454, %v1361
        %1457 = vst.msk [vmem:[#allocation4 + $0x10] sm:$0xff] %vm1454, %v1363
        %1458 = vst.msk [vmem:[#allocation4 + $0x18] sm:$0xff] %vm1454, %v1365
        %1459 = vst.msk [vmem:[#allocation4 + $0x20] sm:$0xff] %vm1454, %v1367
        %1460 = vst.msk [vmem:[#allocation4 + $0x28] sm:$0xff] %vm1454, %v1369
        %1461 = vst.msk [vmem:[#allocation4 + $0x30] sm:$0xff] %vm1454, %v1371
        %1462 = vst.msk [vmem:[#allocation4 + $0x38] sm:$0xff] %vm1454, %v1373
        %1463 = vst.msk [vmem:[#allocation4 + $0x40] sm:$0xff] %vm1454, %v1375
        %1464 = vst.msk [vmem:[#allocation4 + $0x48] sm:$0xff] %vm1454, %v1377
        %1465 = vst.msk [vmem:[#allocation4 + $0x50] sm:$0xff] %vm1454, %v1379
        %1466 = vst.msk [vmem:[#allocation4 + $0x58] sm:$0xff] %vm1454, %v1381
        %1467 = vst.msk [vmem:[#allocation4 + $0x60] sm:$0xff] %vm1454, %v1383
        %1468 = vst.msk [vmem:[#allocation4 + $0x68] sm:$0xff] %vm1454, %v1385
        %1469 = vst.msk [vmem:[#allocation4 + $0x70] sm:$0xff] %vm1454, %v1387
        %1470 = vst.msk [vmem:[#allocation4 + $0x78] sm:$0xff] %vm1454, %v1389
        %1471 = vst.msk [vmem:[#allocation4 + $0x80] sm:$0xff] %vm1454, %v1391
        %1472 = vst.msk [vmem:[#allocation4 + $0x88] sm:$0xff] %vm1454, %v1393
        %1473 = vst.msk [vmem:[#allocation4 + $0x90] sm:$0xff] %vm1454, %v1395
        %1474 = vst.msk [vmem:[#allocation4 + $0x98] sm:$0xff] %vm1454, %v1397
        %1475 = vst.msk [vmem:[#allocation4 + $0xa0] sm:$0xff] %vm1454, %v1399
        %1476 = vst.msk [vmem:[#allocation4 + $0xa8] sm:$0xff] %vm1454, %v1401
        %1477 = vst.msk [vmem:[#allocation4 + $0xb0] sm:$0xff] %vm1454, %v1403
        %1478 = vst.msk [vmem:[#allocation4 + $0xb8] sm:$0xff] %vm1454, %v1405
        %1479 = vst.msk [vmem:[#allocation4 + $0xc0] sm:$0xff] %vm1454, %v1407
        %1480 = vst.msk [vmem:[#allocation4 + $0xc8] sm:$0xff] %vm1454, %v1409
        %1481 = vst.msk [vmem:[#allocation4 + $0xd0] sm:$0xff] %vm1454, %v1411
        %1482 = vst.msk [vmem:[#allocation4 + $0xd8] sm:$0xff] %vm1454, %v1413
        %1483 = vst.msk [vmem:[#allocation4 + $0xe0] sm:$0xff] %vm1454, %v1415
        %1484 = vst.msk [vmem:[#allocation4 + $0xe8] sm:$0xff] %vm1454, %v1417
        %1485 = vst.msk [vmem:[#allocation4 + $0xf0] sm:$0xff] %vm1454, %v1419
        %1486 = vst.msk [vmem:[#allocation4 + $0xf8] sm:$0xff] %vm1454, %v1421
        %s1487 = scalar_lea.vmem [#allocation2], 48
        %v1488 = vld [vmem:[%s1487] sm:$0xff]
        %v1489 = vld [vmem:[%s1487 + $0x8] sm:$0xff]
        %v1490 = vld [vmem:[%s1487 + $0x18] sm:$0xff]
        %v1491 = vld [vmem:[%s1487 + $0x20] sm:$0xff]
        %v1492 = vld [vmem:[%s1487 + $0x30] sm:$0xff]
        %v1493 = vld [vmem:[%s1487 + $0x38] sm:$0xff]
        %v1494 = vld [vmem:[%s1487 + $0x48] sm:$0xff]
        %v1495 = vld [vmem:[%s1487 + $0x50] sm:$0xff]
        %v1496 = vld [vmem:[%s1487 + $0x60] sm:$0xff]
        %v1497 = vld [vmem:[%s1487 + $0x68] sm:$0xff]
        %v1498 = vld [vmem:[%s1487 + $0x78] sm:$0xff]
        %v1499 = vld [vmem:[%s1487 + $0x80] sm:$0xff]
        %v1500 = vld [vmem:[%s1487 + $0x90] sm:$0xff]
        %v1501 = vld [vmem:[%s1487 + $0x98] sm:$0xff]
        %v1502 = vld [vmem:[%s1487 + $0xa8] sm:$0xff]
        %v1503 = vld [vmem:[%s1487 + $0xb0] sm:$0xff]
        %v1504 = vld [vmem:[%s1487 + $0xc0] sm:$0xff]
        %v1505 = vld [vmem:[%s1487 + $0xc8] sm:$0xff]
        %v1506 = vld [vmem:[%s1487 + $0xd8] sm:$0xff]
        %v1507 = vld [vmem:[%s1487 + $0xe0] sm:$0xff]
        %v1508 = vld [vmem:[%s1487 + $0xf0] sm:$0xff]
        %v1509 = vld [vmem:[%s1487 + $0xf8] sm:$0xff]
        %v1510 = vld [vmem:[%s1487 + $0x108] sm:$0xff]
        %v1511 = vld [vmem:[%s1487 + $0x110] sm:$0xff]
        %v1512 = vld [vmem:[%s1487 + $0x120] sm:$0xff]
        %v1513 = vld [vmem:[%s1487 + $0x128] sm:$0xff]
        %v1514 = vld [vmem:[%s1487 + $0x138] sm:$0xff]
        %v1515 = vld [vmem:[%s1487 + $0x140] sm:$0xff]
        %v1516 = vld [vmem:[%s1487 + $0x150] sm:$0xff]
        %v1517 = vld [vmem:[%s1487 + $0x158] sm:$0xff]
        %v1518 = vld [vmem:[%s1487 + $0x168] sm:$0xff]
        %v1519 = vld [vmem:[%s1487 + $0x170] sm:$0xff]
        %1552 = vrot.lane.b32.xlu0 %v1488, 24
        %v1553 = vpop.permute.xlu0 %1552
        %1554 = vrot.lane.b32.xlu0 %v1489, 24
        %v1555 = vpop.permute.xlu0 %1554
        %1556 = vrot.lane.b32.xlu0 %v1490, 24
        %v1557 = vpop.permute.xlu0 %1556
        %1558 = vrot.lane.b32.xlu0 %v1491, 24
        %v1559 = vpop.permute.xlu0 %1558
        %1560 = vrot.lane.b32.xlu0 %v1492, 24
        %v1561 = vpop.permute.xlu0 %1560
        %1562 = vrot.lane.b32.xlu0 %v1493, 24
        %v1563 = vpop.permute.xlu0 %1562
        %1564 = vrot.lane.b32.xlu0 %v1494, 24
        %v1565 = vpop.permute.xlu0 %1564
        %1566 = vrot.lane.b32.xlu0 %v1495, 24
        %v1567 = vpop.permute.xlu0 %1566
        %1568 = vrot.lane.b32.xlu0 %v1496, 24
        %v1569 = vpop.permute.xlu0 %1568
        %1570 = vrot.lane.b32.xlu0 %v1497, 24
        %v1571 = vpop.permute.xlu0 %1570
        %1572 = vrot.lane.b32.xlu0 %v1498, 24
        %v1573 = vpop.permute.xlu0 %1572
        %1574 = vrot.lane.b32.xlu0 %v1499, 24
        %v1575 = vpop.permute.xlu0 %1574
        %1576 = vrot.lane.b32.xlu0 %v1500, 24
        %v1577 = vpop.permute.xlu0 %1576
        %1578 = vrot.lane.b32.xlu0 %v1501, 24
        %v1579 = vpop.permute.xlu0 %1578
        %1580 = vrot.lane.b32.xlu0 %v1502, 24
        %v1581 = vpop.permute.xlu0 %1580
        %1582 = vrot.lane.b32.xlu0 %v1503, 24
        %v1583 = vpop.permute.xlu0 %1582
        %1584 = vrot.lane.b32.xlu0 %v1504, 24
        %v1585 = vpop.permute.xlu0 %1584
        %1586 = vrot.lane.b32.xlu0 %v1505, 24
        %v1587 = vpop.permute.xlu0 %1586
        %1588 = vrot.lane.b32.xlu0 %v1506, 24
        %v1589 = vpop.permute.xlu0 %1588
        %1590 = vrot.lane.b32.xlu0 %v1507, 24
        %v1591 = vpop.permute.xlu0 %1590
        %1592 = vrot.lane.b32.xlu0 %v1508, 24
        %v1593 = vpop.permute.xlu0 %1592
        %1594 = vrot.lane.b32.xlu0 %v1509, 24
        %v1595 = vpop.permute.xlu0 %1594
        %1596 = vrot.lane.b32.xlu0 %v1510, 24
        %v1597 = vpop.permute.xlu0 %1596
        %1598 = vrot.lane.b32.xlu0 %v1511, 24
        %v1599 = vpop.permute.xlu0 %1598
        %1600 = vrot.lane.b32.xlu0 %v1512, 24
        %v1601 = vpop.permute.xlu0 %1600
        %1602 = vrot.lane.b32.xlu0 %v1513, 24
        %v1603 = vpop.permute.xlu0 %1602
        %1604 = vrot.lane.b32.xlu0 %v1514, 24
        %v1605 = vpop.permute.xlu0 %1604
        %1606 = vrot.lane.b32.xlu0 %v1515, 24
        %v1607 = vpop.permute.xlu0 %1606
        %1608 = vrot.lane.b32.xlu0 %v1516, 24
        %v1609 = vpop.permute.xlu0 %1608
        %1610 = vrot.lane.b32.xlu0 %v1517, 24
        %v1611 = vpop.permute.xlu0 %1610
        %1612 = vrot.lane.b32.xlu0 %v1518, 24
        %v1613 = vpop.permute.xlu0 %1612
        %1614 = vrot.lane.b32.xlu0 %v1519, 24
        %v1615 = vpop.permute.xlu0 %1614
        %vm1648 = vcmask 228544
        %1649 = vst.msk [vmem:[#allocation4] sm:$0xff] %vm1648, %v1553
        %1650 = vst.msk [vmem:[#allocation4 + $0x8] sm:$0xff] %vm1648, %v1555
        %1651 = vst.msk [vmem:[#allocation4 + $0x10] sm:$0xff] %vm1648, %v1557
        %1652 = vst.msk [vmem:[#allocation4 + $0x18] sm:$0xff] %vm1648, %v1559
        %1653 = vst.msk [vmem:[#allocation4 + $0x20] sm:$0xff] %vm1648, %v1561
        %1654 = vst.msk [vmem:[#allocation4 + $0x28] sm:$0xff] %vm1648, %v1563
        %1655 = vst.msk [vmem:[#allocation4 + $0x30] sm:$0xff] %vm1648, %v1565
        %1656 = vst.msk [vmem:[#allocation4 + $0x38] sm:$0xff] %vm1648, %v1567
        %1657 = vst.msk [vmem:[#allocation4 + $0x40] sm:$0xff] %vm1648, %v1569
        %1658 = vst.msk [vmem:[#allocation4 + $0x48] sm:$0xff] %vm1648, %v1571
        %1659 = vst.msk [vmem:[#allocation4 + $0x50] sm:$0xff] %vm1648, %v1573
        %1660 = vst.msk [vmem:[#allocation4 + $0x58] sm:$0xff] %vm1648, %v1575
        %1661 = vst.msk [vmem:[#allocation4 + $0x60] sm:$0xff] %vm1648, %v1577
        %1662 = vst.msk [vmem:[#allocation4 + $0x68] sm:$0xff] %vm1648, %v1579
        %1663 = vst.msk [vmem:[#allocation4 + $0x70] sm:$0xff] %vm1648, %v1581
        %1664 = vst.msk [vmem:[#allocation4 + $0x78] sm:$0xff] %vm1648, %v1583
        %1665 = vst.msk [vmem:[#allocation4 + $0x80] sm:$0xff] %vm1648, %v1585
        %1666 = vst.msk [vmem:[#allocation4 + $0x88] sm:$0xff] %vm1648, %v1587
        %1667 = vst.msk [vmem:[#allocation4 + $0x90] sm:$0xff] %vm1648, %v1589
        %1668 = vst.msk [vmem:[#allocation4 + $0x98] sm:$0xff] %vm1648, %v1591
        %1669 = vst.msk [vmem:[#allocation4 + $0xa0] sm:$0xff] %vm1648, %v1593
        %1670 = vst.msk [vmem:[#allocation4 + $0xa8] sm:$0xff] %vm1648, %v1595
        %1671 = vst.msk [vmem:[#allocation4 + $0xb0] sm:$0xff] %vm1648, %v1597
        %1672 = vst.msk [vmem:[#allocation4 + $0xb8] sm:$0xff] %vm1648, %v1599
        %1673 = vst.msk [vmem:[#allocation4 + $0xc0] sm:$0xff] %vm1648, %v1601
        %1674 = vst.msk [vmem:[#allocation4 + $0xc8] sm:$0xff] %vm1648, %v1603
        %1675 = vst.msk [vmem:[#allocation4 + $0xd0] sm:$0xff] %vm1648, %v1605
        %1676 = vst.msk [vmem:[#allocation4 + $0xd8] sm:$0xff] %vm1648, %v1607
        %1677 = vst.msk [vmem:[#allocation4 + $0xe0] sm:$0xff] %vm1648, %v1609
        %1678 = vst.msk [vmem:[#allocation4 + $0xe8] sm:$0xff] %vm1648, %v1611
        %1679 = vst.msk [vmem:[#allocation4 + $0xf0] sm:$0xff] %vm1648, %v1613
        %1680 = vst.msk [vmem:[#allocation4 + $0xf8] sm:$0xff] %vm1648, %v1615
        %v1681 = vld [vmem:[%s1487 + $0x1] sm:$0xff]
        %v1682 = vld [vmem:[%s1487 + $0x9] sm:$0xff]
        %v1683 = vld [vmem:[%s1487 + $0x19] sm:$0xff]
        %v1684 = vld [vmem:[%s1487 + $0x21] sm:$0xff]
        %v1685 = vld [vmem:[%s1487 + $0x31] sm:$0xff]
        %v1686 = vld [vmem:[%s1487 + $0x39] sm:$0xff]
        %v1687 = vld [vmem:[%s1487 + $0x49] sm:$0xff]
        %v1688 = vld [vmem:[%s1487 + $0x51] sm:$0xff]
        %v1689 = vld [vmem:[%s1487 + $0x61] sm:$0xff]
        %v1690 = vld [vmem:[%s1487 + $0x69] sm:$0xff]
        %v1691 = vld [vmem:[%s1487 + $0x79] sm:$0xff]
        %v1692 = vld [vmem:[%s1487 + $0x81] sm:$0xff]
        %v1693 = vld [vmem:[%s1487 + $0x91] sm:$0xff]
        %v1694 = vld [vmem:[%s1487 + $0x99] sm:$0xff]
        %v1695 = vld [vmem:[%s1487 + $0xa9] sm:$0xff]
        %v1696 = vld [vmem:[%s1487 + $0xb1] sm:$0xff]
        %v1697 = vld [vmem:[%s1487 + $0xc1] sm:$0xff]
        %v1698 = vld [vmem:[%s1487 + $0xc9] sm:$0xff]
        %v1699 = vld [vmem:[%s1487 + $0xd9] sm:$0xff]
        %v1700 = vld [vmem:[%s1487 + $0xe1] sm:$0xff]
        %v1701 = vld [vmem:[%s1487 + $0xf1] sm:$0xff]
        %v1702 = vld [vmem:[%s1487 + $0xf9] sm:$0xff]
        %v1703 = vld [vmem:[%s1487 + $0x109] sm:$0xff]
        %v1704 = vld [vmem:[%s1487 + $0x111] sm:$0xff]
        %v1705 = vld [vmem:[%s1487 + $0x121] sm:$0xff]
        %v1706 = vld [vmem:[%s1487 + $0x129] sm:$0xff]
        %v1707 = vld [vmem:[%s1487 + $0x139] sm:$0xff]
        %v1708 = vld [vmem:[%s1487 + $0x141] sm:$0xff]
        %v1709 = vld [vmem:[%s1487 + $0x151] sm:$0xff]
        %v1710 = vld [vmem:[%s1487 + $0x159] sm:$0xff]
        %v1711 = vld [vmem:[%s1487 + $0x169] sm:$0xff]
        %v1712 = vld [vmem:[%s1487 + $0x171] sm:$0xff]
        %1745 = vrot.lane.b32.xlu0 %v1681, 28
        %v1746 = vpop.permute.xlu0 %1745
        %1747 = vrot.lane.b32.xlu0 %v1682, 28
        %v1748 = vpop.permute.xlu0 %1747
        %1749 = vrot.lane.b32.xlu0 %v1683, 28
        %v1750 = vpop.permute.xlu0 %1749
        %1751 = vrot.lane.b32.xlu0 %v1684, 28
        %v1752 = vpop.permute.xlu0 %1751
        %1753 = vrot.lane.b32.xlu0 %v1685, 28
        %v1754 = vpop.permute.xlu0 %1753
        %1755 = vrot.lane.b32.xlu0 %v1686, 28
        %v1756 = vpop.permute.xlu0 %1755
        %1757 = vrot.lane.b32.xlu0 %v1687, 28
        %v1758 = vpop.permute.xlu0 %1757
        %1759 = vrot.lane.b32.xlu0 %v1688, 28
        %v1760 = vpop.permute.xlu0 %1759
        %1761 = vrot.lane.b32.xlu0 %v1689, 28
        %v1762 = vpop.permute.xlu0 %1761
        %1763 = vrot.lane.b32.xlu0 %v1690, 28
        %v1764 = vpop.permute.xlu0 %1763
        %1765 = vrot.lane.b32.xlu0 %v1691, 28
        %v1766 = vpop.permute.xlu0 %1765
        %1767 = vrot.lane.b32.xlu0 %v1692, 28
        %v1768 = vpop.permute.xlu0 %1767
        %1769 = vrot.lane.b32.xlu0 %v1693, 28
        %v1770 = vpop.permute.xlu0 %1769
        %1771 = vrot.lane.b32.xlu0 %v1694, 28
        %v1772 = vpop.permute.xlu0 %1771
        %1773 = vrot.lane.b32.xlu0 %v1695, 28
        %v1774 = vpop.permute.xlu0 %1773
        %1775 = vrot.lane.b32.xlu0 %v1696, 28
        %v1776 = vpop.permute.xlu0 %1775
        %1777 = vrot.lane.b32.xlu0 %v1697, 28
        %v1778 = vpop.permute.xlu0 %1777
        %1779 = vrot.lane.b32.xlu0 %v1698, 28
        %v1780 = vpop.permute.xlu0 %1779
        %1781 = vrot.lane.b32.xlu0 %v1699, 28
        %v1782 = vpop.permute.xlu0 %1781
        %1783 = vrot.lane.b32.xlu0 %v1700, 28
        %v1784 = vpop.permute.xlu0 %1783
        %1785 = vrot.lane.b32.xlu0 %v1701, 28
        %v1786 = vpop.permute.xlu0 %1785
        %1787 = vrot.lane.b32.xlu0 %v1702, 28
        %v1788 = vpop.permute.xlu0 %1787
        %1789 = vrot.lane.b32.xlu0 %v1703, 28
        %v1790 = vpop.permute.xlu0 %1789
        %1791 = vrot.lane.b32.xlu0 %v1704, 28
        %v1792 = vpop.permute.xlu0 %1791
        %1793 = vrot.lane.b32.xlu0 %v1705, 28
        %v1794 = vpop.permute.xlu0 %1793
        %1795 = vrot.lane.b32.xlu0 %v1706, 28
        %v1796 = vpop.permute.xlu0 %1795
        %1797 = vrot.lane.b32.xlu0 %v1707, 28
        %v1798 = vpop.permute.xlu0 %1797
        %1799 = vrot.lane.b32.xlu0 %v1708, 28
        %v1800 = vpop.permute.xlu0 %1799
        %1801 = vrot.lane.b32.xlu0 %v1709, 28
        %v1802 = vpop.permute.xlu0 %1801
        %1803 = vrot.lane.b32.xlu0 %v1710, 28
        %v1804 = vpop.permute.xlu0 %1803
        %1805 = vrot.lane.b32.xlu0 %v1711, 28
        %v1806 = vpop.permute.xlu0 %1805
        %1807 = vrot.lane.b32.xlu0 %v1712, 28
        %v1808 = vpop.permute.xlu0 %1807
        %vm1841 = vcmask 261344
        %1842 = vst.msk [vmem:[#allocation4] sm:$0xff] %vm1841, %v1746
        %1843 = vst.msk [vmem:[#allocation4 + $0x8] sm:$0xff] %vm1841, %v1748
        %1844 = vst.msk [vmem:[#allocation4 + $0x10] sm:$0xff] %vm1841, %v1750
        %1845 = vst.msk [vmem:[#allocation4 + $0x18] sm:$0xff] %vm1841, %v1752
        %1846 = vst.msk [vmem:[#allocation4 + $0x20] sm:$0xff] %vm1841, %v1754
        %1847 = vst.msk [vmem:[#allocation4 + $0x28] sm:$0xff] %vm1841, %v1756
        %1848 = vst.msk [vmem:[#allocation4 + $0x30] sm:$0xff] %vm1841, %v1758
        %1849 = vst.msk [vmem:[#allocation4 + $0x38] sm:$0xff] %vm1841, %v1760
        %1850 = vst.msk [vmem:[#allocation4 + $0x40] sm:$0xff] %vm1841, %v1762
        %1851 = vst.msk [vmem:[#allocation4 + $0x48] sm:$0xff] %vm1841, %v1764
        %1852 = vst.msk [vmem:[#allocation4 + $0x50] sm:$0xff] %vm1841, %v1766
        %1853 = vst.msk [vmem:[#allocation4 + $0x58] sm:$0xff] %vm1841, %v1768
        %1854 = vst.msk [vmem:[#allocation4 + $0x60] sm:$0xff] %vm1841, %v1770
        %1855 = vst.msk [vmem:[#allocation4 + $0x68] sm:$0xff] %vm1841, %v1772
        %1856 = vst.msk [vmem:[#allocation4 + $0x70] sm:$0xff] %vm1841, %v1774
        %1857 = vst.msk [vmem:[#allocation4 + $0x78] sm:$0xff] %vm1841, %v1776
        %1858 = vst.msk [vmem:[#allocation4 + $0x80] sm:$0xff] %vm1841, %v1778
        %1859 = vst.msk [vmem:[#allocation4 + $0x88] sm:$0xff] %vm1841, %v1780
        %1860 = vst.msk [vmem:[#allocation4 + $0x90] sm:$0xff] %vm1841, %v1782
        %1861 = vst.msk [vmem:[#allocation4 + $0x98] sm:$0xff] %vm1841, %v1784
        %1862 = vst.msk [vmem:[#allocation4 + $0xa0] sm:$0xff] %vm1841, %v1786
        %1863 = vst.msk [vmem:[#allocation4 + $0xa8] sm:$0xff] %vm1841, %v1788
        %1864 = vst.msk [vmem:[#allocation4 + $0xb0] sm:$0xff] %vm1841, %v1790
        %1865 = vst.msk [vmem:[#allocation4 + $0xb8] sm:$0xff] %vm1841, %v1792
        %1866 = vst.msk [vmem:[#allocation4 + $0xc0] sm:$0xff] %vm1841, %v1794
        %1867 = vst.msk [vmem:[#allocation4 + $0xc8] sm:$0xff] %vm1841, %v1796
        %1868 = vst.msk [vmem:[#allocation4 + $0xd0] sm:$0xff] %vm1841, %v1798
        %1869 = vst.msk [vmem:[#allocation4 + $0xd8] sm:$0xff] %vm1841, %v1800
        %1870 = vst.msk [vmem:[#allocation4 + $0xe0] sm:$0xff] %vm1841, %v1802
        %1871 = vst.msk [vmem:[#allocation4 + $0xe8] sm:$0xff] %vm1841, %v1804
        %1872 = vst.msk [vmem:[#allocation4 + $0xf0] sm:$0xff] %vm1841, %v1806
        %1873 = vst.msk [vmem:[#allocation4 + $0xf8] sm:$0xff] %vm1841, %v1808
        %v1874 = vld [vmem:[%s1487 + $0x2] sm:$0xff]
        %v1875 = vld [vmem:[%s1487 + $0xa] sm:$0xff]
        %v1876 = vld [vmem:[%s1487 + $0x1a] sm:$0xff]
        %v1877 = vld [vmem:[%s1487 + $0x22] sm:$0xff]
        %v1878 = vld [vmem:[%s1487 + $0x32] sm:$0xff]
        %v1879 = vld [vmem:[%s1487 + $0x3a] sm:$0xff]
        %v1880 = vld [vmem:[%s1487 + $0x4a] sm:$0xff]
        %v1881 = vld [vmem:[%s1487 + $0x52] sm:$0xff]
        %v1882 = vld [vmem:[%s1487 + $0x62] sm:$0xff]
        %v1883 = vld [vmem:[%s1487 + $0x6a] sm:$0xff]
        %v1884 = vld [vmem:[%s1487 + $0x7a] sm:$0xff]
        %v1885 = vld [vmem:[%s1487 + $0x82] sm:$0xff]
        %v1886 = vld [vmem:[%s1487 + $0x92] sm:$0xff]
        %v1887 = vld [vmem:[%s1487 + $0x9a] sm:$0xff]
        %v1888 = vld [vmem:[%s1487 + $0xaa] sm:$0xff]
        %v1889 = vld [vmem:[%s1487 + $0xb2] sm:$0xff]
        %v1890 = vld [vmem:[%s1487 + $0xc2] sm:$0xff]
        %v1891 = vld [vmem:[%s1487 + $0xca] sm:$0xff]
        %v1892 = vld [vmem:[%s1487 + $0xda] sm:$0xff]
        %v1893 = vld [vmem:[%s1487 + $0xe2] sm:$0xff]
        %v1894 = vld [vmem:[%s1487 + $0xf2] sm:$0xff]
        %v1895 = vld [vmem:[%s1487 + $0xfa] sm:$0xff]
        %v1896 = vld [vmem:[%s1487 + $0x10a] sm:$0xff]
        %v1897 = vld [vmem:[%s1487 + $0x112] sm:$0xff]
        %v1898 = vld [vmem:[%s1487 + $0x122] sm:$0xff]
        %v1899 = vld [vmem:[%s1487 + $0x12a] sm:$0xff]
        %v1900 = vld [vmem:[%s1487 + $0x13a] sm:$0xff]
        %v1901 = vld [vmem:[%s1487 + $0x142] sm:$0xff]
        %v1902 = vld [vmem:[%s1487 + $0x152] sm:$0xff]
        %v1903 = vld [vmem:[%s1487 + $0x15a] sm:$0xff]
        %v1904 = vld [vmem:[%s1487 + $0x16a] sm:$0xff]
        %v1905 = vld [vmem:[%s1487 + $0x172] sm:$0xff]
        %1938 = vrot.lane.b32.xlu0 %v1874, 32
        %v1939 = vpop.permute.xlu0 %1938
        %1940 = vrot.lane.b32.xlu0 %v1875, 32
        %v1941 = vpop.permute.xlu0 %1940
        %1942 = vrot.lane.b32.xlu0 %v1876, 32
        %v1943 = vpop.permute.xlu0 %1942
        %1944 = vrot.lane.b32.xlu0 %v1877, 32
        %v1945 = vpop.permute.xlu0 %1944
        %1946 = vrot.lane.b32.xlu0 %v1878, 32
        %v1947 = vpop.permute.xlu0 %1946
        %1948 = vrot.lane.b32.xlu0 %v1879, 32
        %v1949 = vpop.permute.xlu0 %1948
        %1950 = vrot.lane.b32.xlu0 %v1880, 32
        %v1951 = vpop.permute.xlu0 %1950
        %1952 = vrot.lane.b32.xlu0 %v1881, 32
        %v1953 = vpop.permute.xlu0 %1952
        %1954 = vrot.lane.b32.xlu0 %v1882, 32
        %v1955 = vpop.permute.xlu0 %1954
        %1956 = vrot.lane.b32.xlu0 %v1883, 32
        %v1957 = vpop.permute.xlu0 %1956
        %1958 = vrot.lane.b32.xlu0 %v1884, 32
        %v1959 = vpop.permute.xlu0 %1958
        %1960 = vrot.lane.b32.xlu0 %v1885, 32
        %v1961 = vpop.permute.xlu0 %1960
        %1962 = vrot.lane.b32.xlu0 %v1886, 32
        %v1963 = vpop.permute.xlu0 %1962
        %1964 = vrot.lane.b32.xlu0 %v1887, 32
        %v1965 = vpop.permute.xlu0 %1964
        %1966 = vrot.lane.b32.xlu0 %v1888, 32
        %v1967 = vpop.permute.xlu0 %1966
        %1968 = vrot.lane.b32.xlu0 %v1889, 32
        %v1969 = vpop.permute.xlu0 %1968
        %1970 = vrot.lane.b32.xlu0 %v1890, 32
        %v1971 = vpop.permute.xlu0 %1970
        %1972 = vrot.lane.b32.xlu0 %v1891, 32
        %v1973 = vpop.permute.xlu0 %1972
        %1974 = vrot.lane.b32.xlu0 %v1892, 32
        %v1975 = vpop.permute.xlu0 %1974
        %1976 = vrot.lane.b32.xlu0 %v1893, 32
        %v1977 = vpop.permute.xlu0 %1976
        %1978 = vrot.lane.b32.xlu0 %v1894, 32
        %v1979 = vpop.permute.xlu0 %1978
        %1980 = vrot.lane.b32.xlu0 %v1895, 32
        %v1981 = vpop.permute.xlu0 %1980
        %1982 = vrot.lane.b32.xlu0 %v1896, 32
        %v1983 = vpop.permute.xlu0 %1982
        %1984 = vrot.lane.b32.xlu0 %v1897, 32
        %v1985 = vpop.permute.xlu0 %1984
        %1986 = vrot.lane.b32.xlu0 %v1898, 32
        %v1987 = vpop.permute.xlu0 %1986
        %1988 = vrot.lane.b32.xlu0 %v1899, 32
        %v1989 = vpop.permute.xlu0 %1988
        %1990 = vrot.lane.b32.xlu0 %v1900, 32
        %v1991 = vpop.permute.xlu0 %1990
        %1992 = vrot.lane.b32.xlu0 %v1901, 32
        %v1993 = vpop.permute.xlu0 %1992
        %1994 = vrot.lane.b32.xlu0 %v1902, 32
        %v1995 = vpop.permute.xlu0 %1994
        %1996 = vrot.lane.b32.xlu0 %v1903, 32
        %v1997 = vpop.permute.xlu0 %1996
        %1998 = vrot.lane.b32.xlu0 %v1904, 32
        %v1999 = vpop.permute.xlu0 %1998
        %2000 = vrot.lane.b32.xlu0 %v1905, 32
        %v2001 = vpop.permute.xlu0 %2000
        %vm2034 = vcmask 294144
        %2035 = vst.msk [vmem:[#allocation4] sm:$0xff] %vm2034, %v1939
        %2036 = vst.msk [vmem:[#allocation4 + $0x8] sm:$0xff] %vm2034, %v1941
        %2037 = vst.msk [vmem:[#allocation4 + $0x10] sm:$0xff] %vm2034, %v1943
        %2038 = vst.msk [vmem:[#allocation4 + $0x18] sm:$0xff] %vm2034, %v1945
        %2039 = vst.msk [vmem:[#allocation4 + $0x20] sm:$0xff] %vm2034, %v1947
        %2040 = vst.msk [vmem:[#allocation4 + $0x28] sm:$0xff] %vm2034, %v1949
        %2041 = vst.msk [vmem:[#allocation4 + $0x30] sm:$0xff] %vm2034, %v1951
        %2042 = vst.msk [vmem:[#allocation4 + $0x38] sm:$0xff] %vm2034, %v1953
        %2043 = vst.msk [vmem:[#allocation4 + $0x40] sm:$0xff] %vm2034, %v1955
        %2044 = vst.msk [vmem:[#allocation4 + $0x48] sm:$0xff] %vm2034, %v1957
        %2045 = vst.msk [vmem:[#allocation4 + $0x50] sm:$0xff] %vm2034, %v1959
        %2046 = vst.msk [vmem:[#allocation4 + $0x58] sm:$0xff] %vm2034, %v1961
        %2047 = vst.msk [vmem:[#allocation4 + $0x60] sm:$0xff] %vm2034, %v1963
        %2048 = vst.msk [vmem:[#allocation4 + $0x68] sm:$0xff] %vm2034, %v1965
        %2049 = vst.msk [vmem:[#allocation4 + $0x70] sm:$0xff] %vm2034, %v1967
        %2050 = vst.msk [vmem:[#allocation4 + $0x78] sm:$0xff] %vm2034, %v1969
        %2051 = vst.msk [vmem:[#allocation4 + $0x80] sm:$0xff] %vm2034, %v1971
        %2052 = vst.msk [vmem:[#allocation4 + $0x88] sm:$0xff] %vm2034, %v1973
        %2053 = vst.msk [vmem:[#allocation4 + $0x90] sm:$0xff] %vm2034, %v1975
        %2054 = vst.msk [vmem:[#allocation4 + $0x98] sm:$0xff] %vm2034, %v1977
        %2055 = vst.msk [vmem:[#allocation4 + $0xa0] sm:$0xff] %vm2034, %v1979
        %2056 = vst.msk [vmem:[#allocation4 + $0xa8] sm:$0xff] %vm2034, %v1981
        %2057 = vst.msk [vmem:[#allocation4 + $0xb0] sm:$0xff] %vm2034, %v1983
        %2058 = vst.msk [vmem:[#allocation4 + $0xb8] sm:$0xff] %vm2034, %v1985
        %2059 = vst.msk [vmem:[#allocation4 + $0xc0] sm:$0xff] %vm2034, %v1987
        %2060 = vst.msk [vmem:[#allocation4 + $0xc8] sm:$0xff] %vm2034, %v1989
        %2061 = vst.msk [vmem:[#allocation4 + $0xd0] sm:$0xff] %vm2034, %v1991
        %2062 = vst.msk [vmem:[#allocation4 + $0xd8] sm:$0xff] %vm2034, %v1993
        %2063 = vst.msk [vmem:[#allocation4 + $0xe0] sm:$0xff] %vm2034, %v1995
        %2064 = vst.msk [vmem:[#allocation4 + $0xe8] sm:$0xff] %vm2034, %v1997
        %2065 = vst.msk [vmem:[#allocation4 + $0xf0] sm:$0xff] %vm2034, %v1999
        %2066 = vst.msk [vmem:[#allocation4 + $0xf8] sm:$0xff] %vm2034, %v2001
        %v2067 = vld [vmem:[#allocation4] sm:$0xff]
        %v2068 = vld [vmem:[#allocation4 + $0x8] sm:$0xff]
        %v2069 = vld [vmem:[#allocation4 + $0x10] sm:$0xff]
        %v2070 = vld [vmem:[#allocation4 + $0x18] sm:$0xff]
        %v2071 = vld [vmem:[#allocation4 + $0x20] sm:$0xff]
        %v2072 = vld [vmem:[#allocation4 + $0x28] sm:$0xff]
        %v2073 = vld [vmem:[#allocation4 + $0x30] sm:$0xff]
        %v2074 = vld [vmem:[#allocation4 + $0x38] sm:$0xff]
        %v2075 = vld [vmem:[#allocation4 + $0x40] sm:$0xff]
        %v2076 = vld [vmem:[#allocation4 + $0x48] sm:$0xff]
        %v2077 = vld [vmem:[#allocation4 + $0x50] sm:$0xff]
        %v2078 = vld [vmem:[#allocation4 + $0x58] sm:$0xff]
        %v2079 = vld [vmem:[#allocation4 + $0x60] sm:$0xff]
        %v2080 = vld [vmem:[#allocation4 + $0x68] sm:$0xff]
        %v2081 = vld [vmem:[#allocation4 + $0x70] sm:$0xff]
        %v2082 = vld [vmem:[#allocation4 + $0x78] sm:$0xff]
        %v2083 = vld [vmem:[#allocation4 + $0x80] sm:$0xff]
        %v2084 = vld [vmem:[#allocation4 + $0x88] sm:$0xff]
        %v2085 = vld [vmem:[#allocation4 + $0x90] sm:$0xff]
        %v2086 = vld [vmem:[#allocation4 + $0x98] sm:$0xff]
        %v2087 = vld [vmem:[#allocation4 + $0xa0] sm:$0xff]
        %v2088 = vld [vmem:[#allocation4 + $0xa8] sm:$0xff]
        %v2089 = vld [vmem:[#allocation4 + $0xb0] sm:$0xff]
        %v2090 = vld [vmem:[#allocation4 + $0xb8] sm:$0xff]
        %v2091 = vld [vmem:[#allocation4 + $0xc0] sm:$0xff]
        %v2092 = vld [vmem:[#allocation4 + $0xc8] sm:$0xff]
        %v2093 = vld [vmem:[#allocation4 + $0xd0] sm:$0xff]
        %v2094 = vld [vmem:[#allocation4 + $0xd8] sm:$0xff]
        %v2095 = vld [vmem:[#allocation4 + $0xe0] sm:$0xff]
        %v2096 = vld [vmem:[#allocation4 + $0xe8] sm:$0xff]
        %v2097 = vld [vmem:[#allocation4 + $0xf0] sm:$0xff]
        %v2098 = vld [vmem:[#allocation4 + $0xf8] sm:$0xff]
        %v2099 = vld [vmem:[%s1] sm:$0xff]
        %v2100 = vld [vmem:[%s1 + $0x8] sm:$0xff]
        %v2101 = vld [vmem:[%s1 + $0x10] sm:$0xff]
        %v2102 = vld [vmem:[%s1 + $0x18] sm:$0xff]
        %v2103 = vld [vmem:[%s1 + $0x20] sm:$0xf]
        %v2104 = vld [vmem:[%s2] sm:$0x1]
        %v2106 = vperm.slane %v2104, 0
        %vm2108 = vcmask 293888
        %v2110 = vsel %vm2108, %v2067, 0
        %v2113 = vsel %vm2108, %v2068, 0
        %v2116 = vsel %vm2108, %v2069, 0
        %v2119 = vsel %vm2108, %v2070, 0
        %v2122 = vsel %vm2108, %v2071, 0
        %v2125 = vsel %vm2108, %v2072, 0
        %v2128 = vsel %vm2108, %v2073, 0
        %v2131 = vsel %vm2108, %v2074, 0
        %v2134 = vsel %vm2108, %v2075, 0
        %v2137 = vsel %vm2108, %v2076, 0
        %v2140 = vsel %vm2108, %v2077, 0
        %v2143 = vsel %vm2108, %v2078, 0
        %v2146 = vsel %vm2108, %v2079, 0
        %v2149 = vsel %vm2108, %v2080, 0
        %v2152 = vsel %vm2108, %v2081, 0
        %v2155 = vsel %vm2108, %v2082, 0
        %v2158 = vsel %vm2108, %v2083, 0
        %v2161 = vsel %vm2108, %v2084, 0
        %v2164 = vsel %vm2108, %v2085, 0
        %v2167 = vsel %vm2108, %v2086, 0
        %v2170 = vsel %vm2108, %v2087, 0
        %v2173 = vsel %vm2108, %v2088, 0
        %v2176 = vsel %vm2108, %v2089, 0
        %v2179 = vsel %vm2108, %v2090, 0
        %v2182 = vsel %vm2108, %v2091, 0
        %v2185 = vsel %vm2108, %v2092, 0
        %v2188 = vsel %vm2108, %v2093, 0
        %v2191 = vsel %vm2108, %v2094, 0
        %v2194 = vsel %vm2108, %v2095, 0
        %v2197 = vsel %vm2108, %v2096, 0
        %v2200 = vsel %vm2108, %v2097, 0
        %v2203 = vsel %vm2108, %v2098, 0
        %vm2205 = vcmask 1043456
        %v2207 = vsel %vm2205, %v2103, 0
        %2209 = vmatpush.msra.mxu0 0.0
        %2210 = vmatpush.msra.mxu0 0.0
        %2211 = vmatpush.msra.mxu0 0.0
        %2212 = vmatpush.msra.mxu0 0.0
        %2213 = vmatpush.msra.mxu0 0.0
        %2214 = vmatpush.msra.mxu0 0.0
        %2215 = vmatpush.msra.mxu0 0.0
        %2216 = vmatpush.msra.mxu0 0.0
        %2217 = vmatpush.msra.mxu0 0.0
        %2218 = vmatpush.msra.mxu0 0.0
        %2219 = vmatpush.msra.mxu0 0.0
        %2220 = vmatpush.msra.mxu0 %v2207
        %2221 = vmatpush.msra.mxu0 %v2102
        %2222 = vmatpush.msra.mxu0 %v2101
        %2223 = vmatpush.msra.mxu0 %v2100
        %2224 = vmatpush.msra.mxu0 %v2099
        %2225 = vmatmul.f32.gmra.mxu0 %v2110
        %v2226 = vpop.f32.mrf.mxu0
        %v2227 = vadd.f32 %v2106, %v2226
        %2228 = vmatmul.f32.gmra.mxu0 %v2113
        %v2229 = vpop.f32.mrf.mxu0
        %v2230 = vadd.f32 %v2106, %v2229
        %2231 = vmatmul.f32.gmra.mxu0 %v2116
        %v2232 = vpop.f32.mrf.mxu0
        %v2233 = vadd.f32 %v2106, %v2232
        %2234 = vmatmul.f32.gmra.mxu0 %v2119
        %v2235 = vpop.f32.mrf.mxu0
        %v2236 = vadd.f32 %v2106, %v2235
        %2237 = vmatmul.f32.gmra.mxu0 %v2122
        %v2238 = vpop.f32.mrf.mxu0
        %v2239 = vadd.f32 %v2106, %v2238
        %2240 = vmatmul.f32.gmra.mxu0 %v2125
        %v2241 = vpop.f32.mrf.mxu0
        %v2242 = vadd.f32 %v2106, %v2241
        %2243 = vmatmul.f32.gmra.mxu0 %v2128
        %v2244 = vpop.f32.mrf.mxu0
        %v2245 = vadd.f32 %v2106, %v2244
        %2246 = vmatmul.f32.gmra.mxu0 %v2131
        %v2247 = vpop.f32.mrf.mxu0
        %v2248 = vadd.f32 %v2106, %v2247
        %2249 = vmatmul.f32.gmra.mxu0 %v2134
        %v2250 = vpop.f32.mrf.mxu0
        %v2251 = vadd.f32 %v2106, %v2250
        %2252 = vmatmul.f32.gmra.mxu0 %v2137
        %v2253 = vpop.f32.mrf.mxu0
        %v2254 = vadd.f32 %v2106, %v2253
        %2255 = vmatmul.f32.gmra.mxu0 %v2140
        %v2256 = vpop.f32.mrf.mxu0
        %v2257 = vadd.f32 %v2106, %v2256
        %2258 = vmatmul.f32.gmra.mxu0 %v2143
        %v2259 = vpop.f32.mrf.mxu0
        %v2260 = vadd.f32 %v2106, %v2259
        %2261 = vmatmul.f32.gmra.mxu0 %v2146
        %v2262 = vpop.f32.mrf.mxu0
        %v2263 = vadd.f32 %v2106, %v2262
        %2264 = vmatmul.f32.gmra.mxu0 %v2149
        %v2265 = vpop.f32.mrf.mxu0
        %v2266 = vadd.f32 %v2106, %v2265
        %2267 = vmatmul.f32.gmra.mxu0 %v2152
        %v2268 = vpop.f32.mrf.mxu0
        %v2269 = vadd.f32 %v2106, %v2268
        %2270 = vmatmul.f32.gmra.mxu0 %v2155
        %v2271 = vpop.f32.mrf.mxu0
        %v2272 = vadd.f32 %v2106, %v2271
        %2273 = vmatmul.f32.gmra.mxu0 %v2158
        %v2274 = vpop.f32.mrf.mxu0
        %v2275 = vadd.f32 %v2106, %v2274
        %2276 = vmatmul.f32.gmra.mxu0 %v2161
        %v2277 = vpop.f32.mrf.mxu0
        %v2278 = vadd.f32 %v2106, %v2277
        %2279 = vmatmul.f32.gmra.mxu0 %v2164
        %v2280 = vpop.f32.mrf.mxu0
        %v2281 = vadd.f32 %v2106, %v2280
        %2282 = vmatmul.f32.gmra.mxu0 %v2167
        %v2283 = vpop.f32.mrf.mxu0
        %v2284 = vadd.f32 %v2106, %v2283
        %2285 = vmatmul.f32.gmra.mxu0 %v2170
        %v2286 = vpop.f32.mrf.mxu0
        %v2287 = vadd.f32 %v2106, %v2286
        %2288 = vmatmul.f32.gmra.mxu0 %v2173
        %v2289 = vpop.f32.mrf.mxu0
        %v2290 = vadd.f32 %v2106, %v2289
        %2291 = vmatmul.f32.gmra.mxu0 %v2176
        %v2292 = vpop.f32.mrf.mxu0
        %v2293 = vadd.f32 %v2106, %v2292
        %2294 = vmatmul.f32.gmra.mxu0 %v2179
        %v2295 = vpop.f32.mrf.mxu0
        %v2296 = vadd.f32 %v2106, %v2295
        %2297 = vmatmul.f32.gmra.mxu0 %v2182
        %v2298 = vpop.f32.mrf.mxu0
        %v2299 = vadd.f32 %v2106, %v2298
        %2300 = vmatmul.f32.gmra.mxu0 %v2185
        %v2301 = vpop.f32.mrf.mxu0
        %v2302 = vadd.f32 %v2106, %v2301
        %2303 = vmatmul.f32.gmra.mxu0 %v2188
        %v2304 = vpop.f32.mrf.mxu0
        %v2305 = vadd.f32 %v2106, %v2304
        %2306 = vmatmul.f32.gmra.mxu0 %v2191
        %v2307 = vpop.f32.mrf.mxu0
        %v2308 = vadd.f32 %v2106, %v2307
        %2309 = vmatmul.f32.gmra.mxu0 %v2194
        %v2310 = vpop.f32.mrf.mxu0
        %v2311 = vadd.f32 %v2106, %v2310
        %2312 = vmatmul.f32.gmra.mxu0 %v2197
        %v2313 = vpop.f32.mrf.mxu0
        %v2314 = vadd.f32 %v2106, %v2313
        %2315 = vmatmul.f32.gmra.mxu0 %v2200
        %v2316 = vpop.f32.mrf.mxu0
        %v2317 = vadd.f32 %v2106, %v2316
        %2318 = vmatmul.f32.gmra.mxu0 %v2203
        %v2319 = vpop.f32.mrf.mxu0
        %v2320 = vadd.f32 %v2106, %v2319
        %2321 = vdwg.mxu0
        %v2322 = vmax.f32 %v2227, 0.0
        %v2323 = vmax.f32 %v2230, 0.0
        %v2324 = vmax.f32 %v2233, 0.0
        %v2325 = vmax.f32 %v2236, 0.0
        %v2326 = vmax.f32 %v2239, 0.0
        %v2327 = vmax.f32 %v2242, 0.0
        %v2328 = vmax.f32 %v2245, 0.0
        %v2329 = vmax.f32 %v2248, 0.0
        %v2330 = vmax.f32 %v2251, 0.0
        %v2331 = vmax.f32 %v2254, 0.0
        %v2332 = vmax.f32 %v2257, 0.0
        %v2333 = vmax.f32 %v2260, 0.0
        %v2334 = vmax.f32 %v2263, 0.0
        %v2335 = vmax.f32 %v2266, 0.0
        %v2336 = vmax.f32 %v2269, 0.0
        %v2337 = vmax.f32 %v2272, 0.0
        %v2338 = vmax.f32 %v2275, 0.0
        %v2339 = vmax.f32 %v2278, 0.0
        %v2340 = vmax.f32 %v2281, 0.0
        %v2341 = vmax.f32 %v2284, 0.0
        %v2342 = vmax.f32 %v2287, 0.0
        %v2343 = vmax.f32 %v2290, 0.0
        %v2344 = vmax.f32 %v2293, 0.0
        %v2345 = vmax.f32 %v2296, 0.0
        %v2346 = vmax.f32 %v2299, 0.0
        %v2347 = vmax.f32 %v2302, 0.0
        %v2348 = vmax.f32 %v2305, 0.0
        %v2349 = vmax.f32 %v2308, 0.0
        %v2350 = vmax.f32 %v2311, 0.0
        %v2351 = vmax.f32 %v2314, 0.0
        %v2352 = vmax.f32 %v2317, 0.0
        %v2353 = vmax.f32 %v2320, 0.0
        %s2354 = scalar_lea.vmem [#allocation3], 24
        %2355 = vst.msk [vmem:[%s2354 + $0x1] sm:$0xff] %vm283, %v2322
        %2356 = vst.msk [vmem:[%s2354 + $0x9] sm:$0xff] %vm283, %v2323
        %2357 = vst.msk [vmem:[%s2354 + $0x19] sm:$0xff] %vm283, %v2324
        %2358 = vst.msk [vmem:[%s2354 + $0x21] sm:$0xff] %vm283, %v2325
        %2359 = vst.msk [vmem:[%s2354 + $0x31] sm:$0xff] %vm283, %v2326
        %2360 = vst.msk [vmem:[%s2354 + $0x39] sm:$0xff] %vm283, %v2327
        %2361 = vst.msk [vmem:[%s2354 + $0x49] sm:$0xff] %vm283, %v2328
        %2362 = vst.msk [vmem:[%s2354 + $0x51] sm:$0xff] %vm283, %v2329
        %2363 = vst.msk [vmem:[%s2354 + $0x61] sm:$0xff] %vm283, %v2330
        %2364 = vst.msk [vmem:[%s2354 + $0x69] sm:$0xff] %vm283, %v2331
        %2365 = vst.msk [vmem:[%s2354 + $0x79] sm:$0xff] %vm283, %v2332
        %2366 = vst.msk [vmem:[%s2354 + $0x81] sm:$0xff] %vm283, %v2333
        %2367 = vst.msk [vmem:[%s2354 + $0x91] sm:$0xff] %vm283, %v2334
        %2368 = vst.msk [vmem:[%s2354 + $0x99] sm:$0xff] %vm283, %v2335
        %2369 = vst.msk [vmem:[%s2354 + $0xa9] sm:$0xff] %vm283, %v2336
        %2370 = vst.msk [vmem:[%s2354 + $0xb1] sm:$0xff] %vm283, %v2337
        %2371 = vst.msk [vmem:[%s2354 + $0xc1] sm:$0xff] %vm283, %v2338
        %2372 = vst.msk [vmem:[%s2354 + $0xc9] sm:$0xff] %vm283, %v2339
        %2373 = vst.msk [vmem:[%s2354 + $0xd9] sm:$0xff] %vm283, %v2340
        %2374 = vst.msk [vmem:[%s2354 + $0xe1] sm:$0xff] %vm283, %v2341
        %2375 = vst.msk [vmem:[%s2354 + $0xf1] sm:$0xff] %vm283, %v2342
        %2376 = vst.msk [vmem:[%s2354 + $0xf9] sm:$0xff] %vm283, %v2343
        %2377 = vst.msk [vmem:[%s2354 + $0x109] sm:$0xff] %vm283, %v2344
        %2378 = vst.msk [vmem:[%s2354 + $0x111] sm:$0xff] %vm283, %v2345
        %2379 = vst.msk [vmem:[%s2354 + $0x121] sm:$0xff] %vm283, %v2346
        %2380 = vst.msk [vmem:[%s2354 + $0x129] sm:$0xff] %vm283, %v2347
        %2381 = vst.msk [vmem:[%s2354 + $0x139] sm:$0xff] %vm283, %v2348
        %2382 = vst.msk [vmem:[%s2354 + $0x141] sm:$0xff] %vm283, %v2349
        %2383 = vst.msk [vmem:[%s2354 + $0x151] sm:$0xff] %vm283, %v2350
        %2384 = vst.msk [vmem:[%s2354 + $0x159] sm:$0xff] %vm283, %v2351
        %2385 = vst.msk [vmem:[%s2354 + $0x169] sm:$0xff] %vm283, %v2352
        %2386 = vst.msk [vmem:[%s2354 + $0x171] sm:$0xff] %vm283, %v2353
      $region48: #{tpu_custom_call.1} parent=43 // pred_fallthru
        _
      %s2387 = smul.u32 %s278, 24
      %s2388 = scalar_lea.vmem [#allocation3], %s2387
      %v2389 = vld [vmem:[%s2388] sm:$0xff]
      %v2390 = vld [vmem:[%s2388 + $0x8] sm:$0xff]
      %v2391 = vld [vmem:[%s2388 + $0x18] sm:$0xff]
      %v2392 = vld [vmem:[%s2388 + $0x20] sm:$0xff]
      %v2393 = vld [vmem:[%s2388 + $0x30] sm:$0xff]
      %v2394 = vld [vmem:[%s2388 + $0x38] sm:$0xff]
      %v2395 = vld [vmem:[%s2388 + $0x48] sm:$0xff]
      %v2396 = vld [vmem:[%s2388 + $0x50] sm:$0xff]
      %v2397 = vld [vmem:[%s2388 + $0x60] sm:$0xff]
      %v2398 = vld [vmem:[%s2388 + $0x68] sm:$0xff]
      %v2399 = vld [vmem:[%s2388 + $0x78] sm:$0xff]
      %v2400 = vld [vmem:[%s2388 + $0x80] sm:$0xff]
      %v2401 = vld [vmem:[%s2388 + $0x90] sm:$0xff]
      %v2402 = vld [vmem:[%s2388 + $0x98] sm:$0xff]
      %v2403 = vld [vmem:[%s2388 + $0xa8] sm:$0xff]
      %v2404 = vld [vmem:[%s2388 + $0xb0] sm:$0xff]
      %vm2405 = vcmask 31744
      %2406 = vst.msk [vmem:[#allocation5] sm:$0xff] %vm2405, %v2389
      %2407 = vst.msk [vmem:[#allocation5 + $0x8] sm:$0xff] %vm2405, %v2390
      %2408 = vst.msk [vmem:[#allocation5 + $0x10] sm:$0xff] %vm2405, %v2391
      %2409 = vst.msk [vmem:[#allocation5 + $0x18] sm:$0xff] %vm2405, %v2392
      %2410 = vst.msk [vmem:[#allocation5 + $0x20] sm:$0xff] %vm2405, %v2393
      %2411 = vst.msk [vmem:[#allocation5 + $0x28] sm:$0xff] %vm2405, %v2394
      %2412 = vst.msk [vmem:[#allocation5 + $0x30] sm:$0xff] %vm2405, %v2395
      %2413 = vst.msk [vmem:[#allocation5 + $0x38] sm:$0xff] %vm2405, %v2396
      %2414 = vst.msk [vmem:[#allocation5 + $0x40] sm:$0xff] %vm2405, %v2397
      %2415 = vst.msk [vmem:[#allocation5 + $0x48] sm:$0xff] %vm2405, %v2398
      %2416 = vst.msk [vmem:[#allocation5 + $0x50] sm:$0xff] %vm2405, %v2399
      %2417 = vst.msk [vmem:[#allocation5 + $0x58] sm:$0xff] %vm2405, %v2400
      %2418 = vst.msk [vmem:[#allocation5 + $0x60] sm:$0xff] %vm2405, %v2401
      %2419 = vst.msk [vmem:[#allocation5 + $0x68] sm:$0xff] %vm2405, %v2402
      %2420 = vst.msk [vmem:[#allocation5 + $0x70] sm:$0xff] %vm2405, %v2403
      %2421 = vst.msk [vmem:[#allocation5 + $0x78] sm:$0xff] %vm2405, %v2404
      %v2422 = vld [vmem:[%s2388 + $0x1] sm:$0xff]
      %v2423 = vld [vmem:[%s2388 + $0x9] sm:$0xff]
      %v2424 = vld [vmem:[%s2388 + $0x19] sm:$0xff]
      %v2425 = vld [vmem:[%s2388 + $0x21] sm:$0xff]
      %v2426 = vld [vmem:[%s2388 + $0x31] sm:$0xff]
      %v2427 = vld [vmem:[%s2388 + $0x39] sm:$0xff]
      %v2428 = vld [vmem:[%s2388 + $0x49] sm:$0xff]
      %v2429 = vld [vmem:[%s2388 + $0x51] sm:$0xff]
      %v2430 = vld [vmem:[%s2388 + $0x61] sm:$0xff]
      %v2431 = vld [vmem:[%s2388 + $0x69] sm:$0xff]
      %v2432 = vld [vmem:[%s2388 + $0x79] sm:$0xff]
      %v2433 = vld [vmem:[%s2388 + $0x81] sm:$0xff]
      %v2434 = vld [vmem:[%s2388 + $0x91] sm:$0xff]
      %v2435 = vld [vmem:[%s2388 + $0x99] sm:$0xff]
      %v2436 = vld [vmem:[%s2388 + $0xa9] sm:$0xff]
      %v2437 = vld [vmem:[%s2388 + $0xb1] sm:$0xff]
      %2454 = vrot.lane.b32.xlu0 %v2422, 4
      %v2455 = vpop.permute.xlu0 %2454
      %2456 = vrot.lane.b32.xlu0 %v2423, 4
      %v2457 = vpop.permute.xlu0 %2456
      %2458 = vrot.lane.b32.xlu0 %v2424, 4
      %v2459 = vpop.permute.xlu0 %2458
      %2460 = vrot.lane.b32.xlu0 %v2425, 4
      %v2461 = vpop.permute.xlu0 %2460
      %2462 = vrot.lane.b32.xlu0 %v2426, 4
      %v2463 = vpop.permute.xlu0 %2462
      %2464 = vrot.lane.b32.xlu0 %v2427, 4
      %v2465 = vpop.permute.xlu0 %2464
      %2466 = vrot.lane.b32.xlu0 %v2428, 4
      %v2467 = vpop.permute.xlu0 %2466
      %2468 = vrot.lane.b32.xlu0 %v2429, 4
      %v2469 = vpop.permute.xlu0 %2468
      %2470 = vrot.lane.b32.xlu0 %v2430, 4
      %v2471 = vpop.permute.xlu0 %2470
      %2472 = vrot.lane.b32.xlu0 %v2431, 4
      %v2473 = vpop.permute.xlu0 %2472
      %2474 = vrot.lane.b32.xlu0 %v2432, 4
      %v2475 = vpop.permute.xlu0 %2474
      %2476 = vrot.lane.b32.xlu0 %v2433, 4
      %v2477 = vpop.permute.xlu0 %2476
      %2478 = vrot.lane.b32.xlu0 %v2434, 4
      %v2479 = vpop.permute.xlu0 %2478
      %2480 = vrot.lane.b32.xlu0 %v2435, 4
      %v2481 = vpop.permute.xlu0 %2480
      %2482 = vrot.lane.b32.xlu0 %v2436, 4
      %v2483 = vpop.permute.xlu0 %2482
      %2484 = vrot.lane.b32.xlu0 %v2437, 4
      %v2485 = vpop.permute.xlu0 %2484
      %vm2502 = vcmask 64544
      %2503 = vst.msk [vmem:[#allocation5] sm:$0xff] %vm2502, %v2455
      %2504 = vst.msk [vmem:[#allocation5 + $0x8] sm:$0xff] %vm2502, %v2457
      %2505 = vst.msk [vmem:[#allocation5 + $0x10] sm:$0xff] %vm2502, %v2459
      %2506 = vst.msk [vmem:[#allocation5 + $0x18] sm:$0xff] %vm2502, %v2461
      %2507 = vst.msk [vmem:[#allocation5 + $0x20] sm:$0xff] %vm2502, %v2463
      %2508 = vst.msk [vmem:[#allocation5 + $0x28] sm:$0xff] %vm2502, %v2465
      %2509 = vst.msk [vmem:[#allocation5 + $0x30] sm:$0xff] %vm2502, %v2467
      %2510 = vst.msk [vmem:[#allocation5 + $0x38] sm:$0xff] %vm2502, %v2469
      %2511 = vst.msk [vmem:[#allocation5 + $0x40] sm:$0xff] %vm2502, %v2471
      %2512 = vst.msk [vmem:[#allocation5 + $0x48] sm:$0xff] %vm2502, %v2473
      %2513 = vst.msk [vmem:[#allocation5 + $0x50] sm:$0xff] %vm2502, %v2475
      %2514 = vst.msk [vmem:[#allocation5 + $0x58] sm:$0xff] %vm2502, %v2477
      %2515 = vst.msk [vmem:[#allocation5 + $0x60] sm:$0xff] %vm2502, %v2479
      %2516 = vst.msk [vmem:[#allocation5 + $0x68] sm:$0xff] %vm2502, %v2481
      %2517 = vst.msk [vmem:[#allocation5 + $0x70] sm:$0xff] %vm2502, %v2483
      %2518 = vst.msk [vmem:[#allocation5 + $0x78] sm:$0xff] %vm2502, %v2485
      %v2519 = vld [vmem:[%s2388 + $0x2] sm:$0xff]
      %v2520 = vld [vmem:[%s2388 + $0xa] sm:$0xff]
      %v2521 = vld [vmem:[%s2388 + $0x1a] sm:$0xff]
      %v2522 = vld [vmem:[%s2388 + $0x22] sm:$0xff]
      %v2523 = vld [vmem:[%s2388 + $0x32] sm:$0xff]
      %v2524 = vld [vmem:[%s2388 + $0x3a] sm:$0xff]
      %v2525 = vld [vmem:[%s2388 + $0x4a] sm:$0xff]
      %v2526 = vld [vmem:[%s2388 + $0x52] sm:$0xff]
      %v2527 = vld [vmem:[%s2388 + $0x62] sm:$0xff]
      %v2528 = vld [vmem:[%s2388 + $0x6a] sm:$0xff]
      %v2529 = vld [vmem:[%s2388 + $0x7a] sm:$0xff]
      %v2530 = vld [vmem:[%s2388 + $0x82] sm:$0xff]
      %v2531 = vld [vmem:[%s2388 + $0x92] sm:$0xff]
      %v2532 = vld [vmem:[%s2388 + $0x9a] sm:$0xff]
      %v2533 = vld [vmem:[%s2388 + $0xaa] sm:$0xff]
      %v2534 = vld [vmem:[%s2388 + $0xb2] sm:$0xff]
      %2551 = vrot.lane.b32.xlu0 %v2519, 8
      %v2552 = vpop.permute.xlu0 %2551
      %2553 = vrot.lane.b32.xlu0 %v2520, 8
      %v2554 = vpop.permute.xlu0 %2553
      %2555 = vrot.lane.b32.xlu0 %v2521, 8
      %v2556 = vpop.permute.xlu0 %2555
      %2557 = vrot.lane.b32.xlu0 %v2522, 8
      %v2558 = vpop.permute.xlu0 %2557
      %2559 = vrot.lane.b32.xlu0 %v2523, 8
      %v2560 = vpop.permute.xlu0 %2559
      %2561 = vrot.lane.b32.xlu0 %v2524, 8
      %v2562 = vpop.permute.xlu0 %2561
      %2563 = vrot.lane.b32.xlu0 %v2525, 8
      %v2564 = vpop.permute.xlu0 %2563
      %2565 = vrot.lane.b32.xlu0 %v2526, 8
      %v2566 = vpop.permute.xlu0 %2565
      %2567 = vrot.lane.b32.xlu0 %v2527, 8
      %v2568 = vpop.permute.xlu0 %2567
      %2569 = vrot.lane.b32.xlu0 %v2528, 8
      %v2570 = vpop.permute.xlu0 %2569
      %2571 = vrot.lane.b32.xlu0 %v2529, 8
      %v2572 = vpop.permute.xlu0 %2571
      %2573 = vrot.lane.b32.xlu0 %v2530, 8
      %v2574 = vpop.permute.xlu0 %2573
      %2575 = vrot.lane.b32.xlu0 %v2531, 8
      %v2576 = vpop.permute.xlu0 %2575
      %2577 = vrot.lane.b32.xlu0 %v2532, 8
      %v2578 = vpop.permute.xlu0 %2577
      %2579 = vrot.lane.b32.xlu0 %v2533, 8
      %v2580 = vpop.permute.xlu0 %2579
      %2581 = vrot.lane.b32.xlu0 %v2534, 8
      %v2582 = vpop.permute.xlu0 %2581
      %vm2599 = vcmask 97344
      %2600 = vst.msk [vmem:[#allocation5] sm:$0xff] %vm2599, %v2552
      %2601 = vst.msk [vmem:[#allocation5 + $0x8] sm:$0xff] %vm2599, %v2554
      %2602 = vst.msk [vmem:[#allocation5 + $0x10] sm:$0xff] %vm2599, %v2556
      %2603 = vst.msk [vmem:[#allocation5 + $0x18] sm:$0xff] %vm2599, %v2558
      %2604 = vst.msk [vmem:[#allocation5 + $0x20] sm:$0xff] %vm2599, %v2560
      %2605 = vst.msk [vmem:[#allocation5 + $0x28] sm:$0xff] %vm2599, %v2562
      %2606 = vst.msk [vmem:[#allocation5 + $0x30] sm:$0xff] %vm2599, %v2564
      %2607 = vst.msk [vmem:[#allocation5 + $0x38] sm:$0xff] %vm2599, %v2566
      %2608 = vst.msk [vmem:[#allocation5 + $0x40] sm:$0xff] %vm2599, %v2568
      %2609 = vst.msk [vmem:[#allocation5 + $0x48] sm:$0xff] %vm2599, %v2570
      %2610 = vst.msk [vmem:[#allocation5 + $0x50] sm:$0xff] %vm2599, %v2572
      %2611 = vst.msk [vmem:[#allocation5 + $0x58] sm:$0xff] %vm2599, %v2574
      %2612 = vst.msk [vmem:[#allocation5 + $0x60] sm:$0xff] %vm2599, %v2576
      %2613 = vst.msk [vmem:[#allocation5 + $0x68] sm:$0xff] %vm2599, %v2578
      %2614 = vst.msk [vmem:[#allocation5 + $0x70] sm:$0xff] %vm2599, %v2580
      %2615 = vst.msk [vmem:[#allocation5 + $0x78] sm:$0xff] %vm2599, %v2582
      %s2616 = sadd.s32 %s278, 1
      %s2617 = smul.u32 %s2616, 24
      %s2618 = scalar_lea.vmem [#allocation3], %s2617
      %v2619 = vld [vmem:[%s2618] sm:$0xff]
      %v2620 = vld [vmem:[%s2618 + $0x8] sm:$0xff]
      %v2621 = vld [vmem:[%s2618 + $0x18] sm:$0xff]
      %v2622 = vld [vmem:[%s2618 + $0x20] sm:$0xff]
      %v2623 = vld [vmem:[%s2618 + $0x30] sm:$0xff]
      %v2624 = vld [vmem:[%s2618 + $0x38] sm:$0xff]
      %v2625 = vld [vmem:[%s2618 + $0x48] sm:$0xff]
      %v2626 = vld [vmem:[%s2618 + $0x50] sm:$0xff]
      %v2627 = vld [vmem:[%s2618 + $0x60] sm:$0xff]
      %v2628 = vld [vmem:[%s2618 + $0x68] sm:$0xff]
      %v2629 = vld [vmem:[%s2618 + $0x78] sm:$0xff]
      %v2630 = vld [vmem:[%s2618 + $0x80] sm:$0xff]
      %v2631 = vld [vmem:[%s2618 + $0x90] sm:$0xff]
      %v2632 = vld [vmem:[%s2618 + $0x98] sm:$0xff]
      %v2633 = vld [vmem:[%s2618 + $0xa8] sm:$0xff]
      %v2634 = vld [vmem:[%s2618 + $0xb0] sm:$0xff]
      %2651 = vrot.lane.b32.xlu0 %v2619, 12
      %v2652 = vpop.permute.xlu0 %2651
      %2653 = vrot.lane.b32.xlu0 %v2620, 12
      %v2654 = vpop.permute.xlu0 %2653
      %2655 = vrot.lane.b32.xlu0 %v2621, 12
      %v2656 = vpop.permute.xlu0 %2655
      %2657 = vrot.lane.b32.xlu0 %v2622, 12
      %v2658 = vpop.permute.xlu0 %2657
      %2659 = vrot.lane.b32.xlu0 %v2623, 12
      %v2660 = vpop.permute.xlu0 %2659
      %2661 = vrot.lane.b32.xlu0 %v2624, 12
      %v2662 = vpop.permute.xlu0 %2661
      %2663 = vrot.lane.b32.xlu0 %v2625, 12
      %v2664 = vpop.permute.xlu0 %2663
      %2665 = vrot.lane.b32.xlu0 %v2626, 12
      %v2666 = vpop.permute.xlu0 %2665
      %2667 = vrot.lane.b32.xlu0 %v2627, 12
      %v2668 = vpop.permute.xlu0 %2667
      %2669 = vrot.lane.b32.xlu0 %v2628, 12
      %v2670 = vpop.permute.xlu0 %2669
      %2671 = vrot.lane.b32.xlu0 %v2629, 12
      %v2672 = vpop.permute.xlu0 %2671
      %2673 = vrot.lane.b32.xlu0 %v2630, 12
      %v2674 = vpop.permute.xlu0 %2673
      %2675 = vrot.lane.b32.xlu0 %v2631, 12
      %v2676 = vpop.permute.xlu0 %2675
      %2677 = vrot.lane.b32.xlu0 %v2632, 12
      %v2678 = vpop.permute.xlu0 %2677
      %2679 = vrot.lane.b32.xlu0 %v2633, 12
      %v2680 = vpop.permute.xlu0 %2679
      %2681 = vrot.lane.b32.xlu0 %v2634, 12
      %v2682 = vpop.permute.xlu0 %2681
      %vm2699 = vcmask 130144
      %2700 = vst.msk [vmem:[#allocation5] sm:$0xff] %vm2699, %v2652
      %2701 = vst.msk [vmem:[#allocation5 + $0x8] sm:$0xff] %vm2699, %v2654
      %2702 = vst.msk [vmem:[#allocation5 + $0x10] sm:$0xff] %vm2699, %v2656
      %2703 = vst.msk [vmem:[#allocation5 + $0x18] sm:$0xff] %vm2699, %v2658
      %2704 = vst.msk [vmem:[#allocation5 + $0x20] sm:$0xff] %vm2699, %v2660
      %2705 = vst.msk [vmem:[#allocation5 + $0x28] sm:$0xff] %vm2699, %v2662
      %2706 = vst.msk [vmem:[#allocation5 + $0x30] sm:$0xff] %vm2699, %v2664
      %2707 = vst.msk [vmem:[#allocation5 + $0x38] sm:$0xff] %vm2699, %v2666
      %2708 = vst.msk [vmem:[#allocation5 + $0x40] sm:$0xff] %vm2699, %v2668
      %2709 = vst.msk [vmem:[#allocation5 + $0x48] sm:$0xff] %vm2699, %v2670
      %2710 = vst.msk [vmem:[#allocation5 + $0x50] sm:$0xff] %vm2699, %v2672
      %2711 = vst.msk [vmem:[#allocation5 + $0x58] sm:$0xff] %vm2699, %v2674
      %2712 = vst.msk [vmem:[#allocation5 + $0x60] sm:$0xff] %vm2699, %v2676
      %2713 = vst.msk [vmem:[#allocation5 + $0x68] sm:$0xff] %vm2699, %v2678
      %2714 = vst.msk [vmem:[#allocation5 + $0x70] sm:$0xff] %vm2699, %v2680
      %2715 = vst.msk [vmem:[#allocation5 + $0x78] sm:$0xff] %vm2699, %v2682
      %v2716 = vld [vmem:[%s2618 + $0x1] sm:$0xff]
      %v2717 = vld [vmem:[%s2618 + $0x9] sm:$0xff]
      %v2718 = vld [vmem:[%s2618 + $0x19] sm:$0xff]
      %v2719 = vld [vmem:[%s2618 + $0x21] sm:$0xff]
      %v2720 = vld [vmem:[%s2618 + $0x31] sm:$0xff]
      %v2721 = vld [vmem:[%s2618 + $0x39] sm:$0xff]
      %v2722 = vld [vmem:[%s2618 + $0x49] sm:$0xff]
      %v2723 = vld [vmem:[%s2618 + $0x51] sm:$0xff]
      %v2724 = vld [vmem:[%s2618 + $0x61] sm:$0xff]
      %v2725 = vld [vmem:[%s2618 + $0x69] sm:$0xff]
      %v2726 = vld [vmem:[%s2618 + $0x79] sm:$0xff]
      %v2727 = vld [vmem:[%s2618 + $0x81] sm:$0xff]
      %v2728 = vld [vmem:[%s2618 + $0x91] sm:$0xff]
      %v2729 = vld [vmem:[%s2618 + $0x99] sm:$0xff]
      %v2730 = vld [vmem:[%s2618 + $0xa9] sm:$0xff]
      %v2731 = vld [vmem:[%s2618 + $0xb1] sm:$0xff]
      %2748 = vrot.lane.b32.xlu0 %v2716, 16
      %v2749 = vpop.permute.xlu0 %2748
      %2750 = vrot.lane.b32.xlu0 %v2717, 16
      %v2751 = vpop.permute.xlu0 %2750
      %2752 = vrot.lane.b32.xlu0 %v2718, 16
      %v2753 = vpop.permute.xlu0 %2752
      %2754 = vrot.lane.b32.xlu0 %v2719, 16
      %v2755 = vpop.permute.xlu0 %2754
      %2756 = vrot.lane.b32.xlu0 %v2720, 16
      %v2757 = vpop.permute.xlu0 %2756
      %2758 = vrot.lane.b32.xlu0 %v2721, 16
      %v2759 = vpop.permute.xlu0 %2758
      %2760 = vrot.lane.b32.xlu0 %v2722, 16
      %v2761 = vpop.permute.xlu0 %2760
      %2762 = vrot.lane.b32.xlu0 %v2723, 16
      %v2763 = vpop.permute.xlu0 %2762
      %2764 = vrot.lane.b32.xlu0 %v2724, 16
      %v2765 = vpop.permute.xlu0 %2764
      %2766 = vrot.lane.b32.xlu0 %v2725, 16
      %v2767 = vpop.permute.xlu0 %2766
      %2768 = vrot.lane.b32.xlu0 %v2726, 16
      %v2769 = vpop.permute.xlu0 %2768
      %2770 = vrot.lane.b32.xlu0 %v2727, 16
      %v2771 = vpop.permute.xlu0 %2770
      %2772 = vrot.lane.b32.xlu0 %v2728, 16
      %v2773 = vpop.permute.xlu0 %2772
      %2774 = vrot.lane.b32.xlu0 %v2729, 16
      %v2775 = vpop.permute.xlu0 %2774
      %2776 = vrot.lane.b32.xlu0 %v2730, 16
      %v2777 = vpop.permute.xlu0 %2776
      %2778 = vrot.lane.b32.xlu0 %v2731, 16
      %v2779 = vpop.permute.xlu0 %2778
      %vm2796 = vcmask 162944
      %2797 = vst.msk [vmem:[#allocation5] sm:$0xff] %vm2796, %v2749
      %2798 = vst.msk [vmem:[#allocation5 + $0x8] sm:$0xff] %vm2796, %v2751
      %2799 = vst.msk [vmem:[#allocation5 + $0x10] sm:$0xff] %vm2796, %v2753
      %2800 = vst.msk [vmem:[#allocation5 + $0x18] sm:$0xff] %vm2796, %v2755
      %2801 = vst.msk [vmem:[#allocation5 + $0x20] sm:$0xff] %vm2796, %v2757
      %2802 = vst.msk [vmem:[#allocation5 + $0x28] sm:$0xff] %vm2796, %v2759
      %2803 = vst.msk [vmem:[#allocation5 + $0x30] sm:$0xff] %vm2796, %v2761
      %2804 = vst.msk [vmem:[#allocation5 + $0x38] sm:$0xff] %vm2796, %v2763
      %2805 = vst.msk [vmem:[#allocation5 + $0x40] sm:$0xff] %vm2796, %v2765
      %2806 = vst.msk [vmem:[#allocation5 + $0x48] sm:$0xff] %vm2796, %v2767
      %2807 = vst.msk [vmem:[#allocation5 + $0x50] sm:$0xff] %vm2796, %v2769
      %2808 = vst.msk [vmem:[#allocation5 + $0x58] sm:$0xff] %vm2796, %v2771
      %2809 = vst.msk [vmem:[#allocation5 + $0x60] sm:$0xff] %vm2796, %v2773
      %2810 = vst.msk [vmem:[#allocation5 + $0x68] sm:$0xff] %vm2796, %v2775
      %2811 = vst.msk [vmem:[#allocation5 + $0x70] sm:$0xff] %vm2796, %v2777
      %2812 = vst.msk [vmem:[#allocation5 + $0x78] sm:$0xff] %vm2796, %v2779
      %v2813 = vld [vmem:[%s2618 + $0x2] sm:$0xff]
      %v2814 = vld [vmem:[%s2618 + $0xa] sm:$0xff]
      %v2815 = vld [vmem:[%s2618 + $0x1a] sm:$0xff]
      %v2816 = vld [vmem:[%s2618 + $0x22] sm:$0xff]
      %v2817 = vld [vmem:[%s2618 + $0x32] sm:$0xff]
      %v2818 = vld [vmem:[%s2618 + $0x3a] sm:$0xff]
      %v2819 = vld [vmem:[%s2618 + $0x4a] sm:$0xff]
      %v2820 = vld [vmem:[%s2618 + $0x52] sm:$0xff]
      %v2821 = vld [vmem:[%s2618 + $0x62] sm:$0xff]
      %v2822 = vld [vmem:[%s2618 + $0x6a] sm:$0xff]
      %v2823 = vld [vmem:[%s2618 + $0x7a] sm:$0xff]
      %v2824 = vld [vmem:[%s2618 + $0x82] sm:$0xff]
      %v2825 = vld [vmem:[%s2618 + $0x92] sm:$0xff]
      %v2826 = vld [vmem:[%s2618 + $0x9a] sm:$0xff]
      %v2827 = vld [vmem:[%s2618 + $0xaa] sm:$0xff]
      %v2828 = vld [vmem:[%s2618 + $0xb2] sm:$0xff]
      %2845 = vrot.lane.b32.xlu0 %v2813, 20
      %v2846 = vpop.permute.xlu0 %2845
      %2847 = vrot.lane.b32.xlu0 %v2814, 20
      %v2848 = vpop.permute.xlu0 %2847
      %2849 = vrot.lane.b32.xlu0 %v2815, 20
      %v2850 = vpop.permute.xlu0 %2849
      %2851 = vrot.lane.b32.xlu0 %v2816, 20
      %v2852 = vpop.permute.xlu0 %2851
      %2853 = vrot.lane.b32.xlu0 %v2817, 20
      %v2854 = vpop.permute.xlu0 %2853
      %2855 = vrot.lane.b32.xlu0 %v2818, 20
      %v2856 = vpop.permute.xlu0 %2855
      %2857 = vrot.lane.b32.xlu0 %v2819, 20
      %v2858 = vpop.permute.xlu0 %2857
      %2859 = vrot.lane.b32.xlu0 %v2820, 20
      %v2860 = vpop.permute.xlu0 %2859
      %2861 = vrot.lane.b32.xlu0 %v2821, 20
      %v2862 = vpop.permute.xlu0 %2861
      %2863 = vrot.lane.b32.xlu0 %v2822, 20
      %v2864 = vpop.permute.xlu0 %2863
      %2865 = vrot.lane.b32.xlu0 %v2823, 20
      %v2866 = vpop.permute.xlu0 %2865
      %2867 = vrot.lane.b32.xlu0 %v2824, 20
      %v2868 = vpop.permute.xlu0 %2867
      %2869 = vrot.lane.b32.xlu0 %v2825, 20
      %v2870 = vpop.permute.xlu0 %2869
      %2871 = vrot.lane.b32.xlu0 %v2826, 20
      %v2872 = vpop.permute.xlu0 %2871
      %2873 = vrot.lane.b32.xlu0 %v2827, 20
      %v2874 = vpop.permute.xlu0 %2873
      %2875 = vrot.lane.b32.xlu0 %v2828, 20
      %v2876 = vpop.permute.xlu0 %2875
      %vm2893 = vcmask 195744
      %2894 = vst.msk [vmem:[#allocation5] sm:$0xff] %vm2893, %v2846
      %2895 = vst.msk [vmem:[#allocation5 + $0x8] sm:$0xff] %vm2893, %v2848
      %2896 = vst.msk [vmem:[#allocation5 + $0x10] sm:$0xff] %vm2893, %v2850
      %2897 = vst.msk [vmem:[#allocation5 + $0x18] sm:$0xff] %vm2893, %v2852
      %2898 = vst.msk [vmem:[#allocation5 + $0x20] sm:$0xff] %vm2893, %v2854
      %2899 = vst.msk [vmem:[#allocation5 + $0x28] sm:$0xff] %vm2893, %v2856
      %2900 = vst.msk [vmem:[#allocation5 + $0x30] sm:$0xff] %vm2893, %v2858
      %2901 = vst.msk [vmem:[#allocation5 + $0x38] sm:$0xff] %vm2893, %v2860
      %2902 = vst.msk [vmem:[#allocation5 + $0x40] sm:$0xff] %vm2893, %v2862
      %2903 = vst.msk [vmem:[#allocation5 + $0x48] sm:$0xff] %vm2893, %v2864
      %2904 = vst.msk [vmem:[#allocation5 + $0x50] sm:$0xff] %vm2893, %v2866
      %2905 = vst.msk [vmem:[#allocation5 + $0x58] sm:$0xff] %vm2893, %v2868
      %2906 = vst.msk [vmem:[#allocation5 + $0x60] sm:$0xff] %vm2893, %v2870
      %2907 = vst.msk [vmem:[#allocation5 + $0x68] sm:$0xff] %vm2893, %v2872
      %2908 = vst.msk [vmem:[#allocation5 + $0x70] sm:$0xff] %vm2893, %v2874
      %2909 = vst.msk [vmem:[#allocation5 + $0x78] sm:$0xff] %vm2893, %v2876
      %s2910 = sadd.s32 %s278, 2
      %s2911 = smul.u32 %s2910, 24
      %s2912 = scalar_lea.vmem [#allocation3], %s2911
      %v2913 = vld [vmem:[%s2912] sm:$0xff]
      %v2914 = vld [vmem:[%s2912 + $0x8] sm:$0xff]
      %v2915 = vld [vmem:[%s2912 + $0x18] sm:$0xff]
      %v2916 = vld [vmem:[%s2912 + $0x20] sm:$0xff]
      %v2917 = vld [vmem:[%s2912 + $0x30] sm:$0xff]
      %v2918 = vld [vmem:[%s2912 + $0x38] sm:$0xff]
      %v2919 = vld [vmem:[%s2912 + $0x48] sm:$0xff]
      %v2920 = vld [vmem:[%s2912 + $0x50] sm:$0xff]
      %v2921 = vld [vmem:[%s2912 + $0x60] sm:$0xff]
      %v2922 = vld [vmem:[%s2912 + $0x68] sm:$0xff]
      %v2923 = vld [vmem:[%s2912 + $0x78] sm:$0xff]
      %v2924 = vld [vmem:[%s2912 + $0x80] sm:$0xff]
      %v2925 = vld [vmem:[%s2912 + $0x90] sm:$0xff]
      %v2926 = vld [vmem:[%s2912 + $0x98] sm:$0xff]
      %v2927 = vld [vmem:[%s2912 + $0xa8] sm:$0xff]
      %v2928 = vld [vmem:[%s2912 + $0xb0] sm:$0xff]
      %2945 = vrot.lane.b32.xlu0 %v2913, 24
      %v2946 = vpop.permute.xlu0 %2945
      %2947 = vrot.lane.b32.xlu0 %v2914, 24
      %v2948 = vpop.permute.xlu0 %2947
      %2949 = vrot.lane.b32.xlu0 %v2915, 24
      %v2950 = vpop.permute.xlu0 %2949
      %2951 = vrot.lane.b32.xlu0 %v2916, 24
      %v2952 = vpop.permute.xlu0 %2951
      %2953 = vrot.lane.b32.xlu0 %v2917, 24
      %v2954 = vpop.permute.xlu0 %2953
      %2955 = vrot.lane.b32.xlu0 %v2918, 24
      %v2956 = vpop.permute.xlu0 %2955
      %2957 = vrot.lane.b32.xlu0 %v2919, 24
      %v2958 = vpop.permute.xlu0 %2957
      %2959 = vrot.lane.b32.xlu0 %v2920, 24
      %v2960 = vpop.permute.xlu0 %2959
      %2961 = vrot.lane.b32.xlu0 %v2921, 24
      %v2962 = vpop.permute.xlu0 %2961
      %2963 = vrot.lane.b32.xlu0 %v2922, 24
      %v2964 = vpop.permute.xlu0 %2963
      %2965 = vrot.lane.b32.xlu0 %v2923, 24
      %v2966 = vpop.permute.xlu0 %2965
      %2967 = vrot.lane.b32.xlu0 %v2924, 24
      %v2968 = vpop.permute.xlu0 %2967
      %2969 = vrot.lane.b32.xlu0 %v2925, 24
      %v2970 = vpop.permute.xlu0 %2969
      %2971 = vrot.lane.b32.xlu0 %v2926, 24
      %v2972 = vpop.permute.xlu0 %2971
      %2973 = vrot.lane.b32.xlu0 %v2927, 24
      %v2974 = vpop.permute.xlu0 %2973
      %2975 = vrot.lane.b32.xlu0 %v2928, 24
      %v2976 = vpop.permute.xlu0 %2975
      %vm2993 = vcmask 228544
      %2994 = vst.msk [vmem:[#allocation5] sm:$0xff] %vm2993, %v2946
      %2995 = vst.msk [vmem:[#allocation5 + $0x8] sm:$0xff] %vm2993, %v2948
      %2996 = vst.msk [vmem:[#allocation5 + $0x10] sm:$0xff] %vm2993, %v2950
      %2997 = vst.msk [vmem:[#allocation5 + $0x18] sm:$0xff] %vm2993, %v2952
      %2998 = vst.msk [vmem:[#allocation5 + $0x20] sm:$0xff] %vm2993, %v2954
      %2999 = vst.msk [vmem:[#allocation5 + $0x28] sm:$0xff] %vm2993, %v2956
      %3000 = vst.msk [vmem:[#allocation5 + $0x30] sm:$0xff] %vm2993, %v2958
      %3001 = vst.msk [vmem:[#allocation5 + $0x38] sm:$0xff] %vm2993, %v2960
      %3002 = vst.msk [vmem:[#allocation5 + $0x40] sm:$0xff] %vm2993, %v2962
      %3003 = vst.msk [vmem:[#allocation5 + $0x48] sm:$0xff] %vm2993, %v2964
      %3004 = vst.msk [vmem:[#allocation5 + $0x50] sm:$0xff] %vm2993, %v2966
      %3005 = vst.msk [vmem:[#allocation5 + $0x58] sm:$0xff] %vm2993, %v2968
      %3006 = vst.msk [vmem:[#allocation5 + $0x60] sm:$0xff] %vm2993, %v2970
      %3007 = vst.msk [vmem:[#allocation5 + $0x68] sm:$0xff] %vm2993, %v2972
      %3008 = vst.msk [vmem:[#allocation5 + $0x70] sm:$0xff] %vm2993, %v2974
      %3009 = vst.msk [vmem:[#allocation5 + $0x78] sm:$0xff] %vm2993, %v2976
      %v3010 = vld [vmem:[%s2912 + $0x1] sm:$0xff]
      %v3011 = vld [vmem:[%s2912 + $0x9] sm:$0xff]
      %v3012 = vld [vmem:[%s2912 + $0x19] sm:$0xff]
      %v3013 = vld [vmem:[%s2912 + $0x21] sm:$0xff]
      %v3014 = vld [vmem:[%s2912 + $0x31] sm:$0xff]
      %v3015 = vld [vmem:[%s2912 + $0x39] sm:$0xff]
      %v3016 = vld [vmem:[%s2912 + $0x49] sm:$0xff]
      %v3017 = vld [vmem:[%s2912 + $0x51] sm:$0xff]
      %v3018 = vld [vmem:[%s2912 + $0x61] sm:$0xff]
      %v3019 = vld [vmem:[%s2912 + $0x69] sm:$0xff]
      %v3020 = vld [vmem:[%s2912 + $0x79] sm:$0xff]
      %v3021 = vld [vmem:[%s2912 + $0x81] sm:$0xff]
      %v3022 = vld [vmem:[%s2912 + $0x91] sm:$0xff]
      %v3023 = vld [vmem:[%s2912 + $0x99] sm:$0xff]
      %v3024 = vld [vmem:[%s2912 + $0xa9] sm:$0xff]
      %v3025 = vld [vmem:[%s2912 + $0xb1] sm:$0xff]
      %3042 = vrot.lane.b32.xlu0 %v3010, 28
      %v3043 = vpop.permute.xlu0 %3042
      %3044 = vrot.lane.b32.xlu0 %v3011, 28
      %v3045 = vpop.permute.xlu0 %3044
      %3046 = vrot.lane.b32.xlu0 %v3012, 28
      %v3047 = vpop.permute.xlu0 %3046
      %3048 = vrot.lane.b32.xlu0 %v3013, 28
      %v3049 = vpop.permute.xlu0 %3048
      %3050 = vrot.lane.b32.xlu0 %v3014, 28
      %v3051 = vpop.permute.xlu0 %3050
      %3052 = vrot.lane.b32.xlu0 %v3015, 28
      %v3053 = vpop.permute.xlu0 %3052
      %3054 = vrot.lane.b32.xlu0 %v3016, 28
      %v3055 = vpop.permute.xlu0 %3054
      %3056 = vrot.lane.b32.xlu0 %v3017, 28
      %v3057 = vpop.permute.xlu0 %3056
      %3058 = vrot.lane.b32.xlu0 %v3018, 28
      %v3059 = vpop.permute.xlu0 %3058
      %3060 = vrot.lane.b32.xlu0 %v3019, 28
      %v3061 = vpop.permute.xlu0 %3060
      %3062 = vrot.lane.b32.xlu0 %v3020, 28
      %v3063 = vpop.permute.xlu0 %3062
      %3064 = vrot.lane.b32.xlu0 %v3021, 28
      %v3065 = vpop.permute.xlu0 %3064
      %3066 = vrot.lane.b32.xlu0 %v3022, 28
      %v3067 = vpop.permute.xlu0 %3066
      %3068 = vrot.lane.b32.xlu0 %v3023, 28
      %v3069 = vpop.permute.xlu0 %3068
      %3070 = vrot.lane.b32.xlu0 %v3024, 28
      %v3071 = vpop.permute.xlu0 %3070
      %3072 = vrot.lane.b32.xlu0 %v3025, 28
      %v3073 = vpop.permute.xlu0 %3072
      %vm3090 = vcmask 261344
      %3091 = vst.msk [vmem:[#allocation5] sm:$0xff] %vm3090, %v3043
      %3092 = vst.msk [vmem:[#allocation5 + $0x8] sm:$0xff] %vm3090, %v3045
      %3093 = vst.msk [vmem:[#allocation5 + $0x10] sm:$0xff] %vm3090, %v3047
      %3094 = vst.msk [vmem:[#allocation5 + $0x18] sm:$0xff] %vm3090, %v3049
      %3095 = vst.msk [vmem:[#allocation5 + $0x20] sm:$0xff] %vm3090, %v3051
      %3096 = vst.msk [vmem:[#allocation5 + $0x28] sm:$0xff] %vm3090, %v3053
      %3097 = vst.msk [vmem:[#allocation5 + $0x30] sm:$0xff] %vm3090, %v3055
      %3098 = vst.msk [vmem:[#allocation5 + $0x38] sm:$0xff] %vm3090, %v3057
      %3099 = vst.msk [vmem:[#allocation5 + $0x40] sm:$0xff] %vm3090, %v3059
      %3100 = vst.msk [vmem:[#allocation5 + $0x48] sm:$0xff] %vm3090, %v3061
      %3101 = vst.msk [vmem:[#allocation5 + $0x50] sm:$0xff] %vm3090, %v3063
      %3102 = vst.msk [vmem:[#allocation5 + $0x58] sm:$0xff] %vm3090, %v3065
      %3103 = vst.msk [vmem:[#allocation5 + $0x60] sm:$0xff] %vm3090, %v3067
      %3104 = vst.msk [vmem:[#allocation5 + $0x68] sm:$0xff] %vm3090, %v3069
      %3105 = vst.msk [vmem:[#allocation5 + $0x70] sm:$0xff] %vm3090, %v3071
      %3106 = vst.msk [vmem:[#allocation5 + $0x78] sm:$0xff] %vm3090, %v3073
      %v3107 = vld [vmem:[%s2912 + $0x2] sm:$0xff]
      %v3108 = vld [vmem:[%s2912 + $0xa] sm:$0xff]
      %v3109 = vld [vmem:[%s2912 + $0x1a] sm:$0xff]
      %v3110 = vld [vmem:[%s2912 + $0x22] sm:$0xff]
      %v3111 = vld [vmem:[%s2912 + $0x32] sm:$0xff]
      %v3112 = vld [vmem:[%s2912 + $0x3a] sm:$0xff]
      %v3113 = vld [vmem:[%s2912 + $0x4a] sm:$0xff]
      %v3114 = vld [vmem:[%s2912 + $0x52] sm:$0xff]
      %v3115 = vld [vmem:[%s2912 + $0x62] sm:$0xff]
      %v3116 = vld [vmem:[%s2912 + $0x6a] sm:$0xff]
      %v3117 = vld [vmem:[%s2912 + $0x7a] sm:$0xff]
      %v3118 = vld [vmem:[%s2912 + $0x82] sm:$0xff]
      %v3119 = vld [vmem:[%s2912 + $0x92] sm:$0xff]
      %v3120 = vld [vmem:[%s2912 + $0x9a] sm:$0xff]
      %v3121 = vld [vmem:[%s2912 + $0xaa] sm:$0xff]
      %v3122 = vld [vmem:[%s2912 + $0xb2] sm:$0xff]
      %3139 = vrot.lane.b32.xlu0 %v3107, 32
      %v3140 = vpop.permute.xlu0 %3139
      %3141 = vrot.lane.b32.xlu0 %v3108, 32
      %v3142 = vpop.permute.xlu0 %3141
      %3143 = vrot.lane.b32.xlu0 %v3109, 32
      %v3144 = vpop.permute.xlu0 %3143
      %3145 = vrot.lane.b32.xlu0 %v3110, 32
      %v3146 = vpop.permute.xlu0 %3145
      %3147 = vrot.lane.b32.xlu0 %v3111, 32
      %v3148 = vpop.permute.xlu0 %3147
      %3149 = vrot.lane.b32.xlu0 %v3112, 32
      %v3150 = vpop.permute.xlu0 %3149
      %3151 = vrot.lane.b32.xlu0 %v3113, 32
      %v3152 = vpop.permute.xlu0 %3151
      %3153 = vrot.lane.b32.xlu0 %v3114, 32
      %v3154 = vpop.permute.xlu0 %3153
      %3155 = vrot.lane.b32.xlu0 %v3115, 32
      %v3156 = vpop.permute.xlu0 %3155
      %3157 = vrot.lane.b32.xlu0 %v3116, 32
      %v3158 = vpop.permute.xlu0 %3157
      %3159 = vrot.lane.b32.xlu0 %v3117, 32
      %v3160 = vpop.permute.xlu0 %3159
      %3161 = vrot.lane.b32.xlu0 %v3118, 32
      %v3162 = vpop.permute.xlu0 %3161
      %3163 = vrot.lane.b32.xlu0 %v3119, 32
      %v3164 = vpop.permute.xlu0 %3163
      %3165 = vrot.lane.b32.xlu0 %v3120, 32
      %v3166 = vpop.permute.xlu0 %3165
      %3167 = vrot.lane.b32.xlu0 %v3121, 32
      %v3168 = vpop.permute.xlu0 %3167
      %3169 = vrot.lane.b32.xlu0 %v3122, 32
      %v3170 = vpop.permute.xlu0 %3169
      %vm3187 = vcmask 294144
      %3188 = vst.msk [vmem:[#allocation5] sm:$0xff] %vm3187, %v3140
      %3189 = vst.msk [vmem:[#allocation5 + $0x8] sm:$0xff] %vm3187, %v3142
      %3190 = vst.msk [vmem:[#allocation5 + $0x10] sm:$0xff] %vm3187, %v3144
      %3191 = vst.msk [vmem:[#allocation5 + $0x18] sm:$0xff] %vm3187, %v3146
      %3192 = vst.msk [vmem:[#allocation5 + $0x20] sm:$0xff] %vm3187, %v3148
      %3193 = vst.msk [vmem:[#allocation5 + $0x28] sm:$0xff] %vm3187, %v3150
      %3194 = vst.msk [vmem:[#allocation5 + $0x30] sm:$0xff] %vm3187, %v3152
      %3195 = vst.msk [vmem:[#allocation5 + $0x38] sm:$0xff] %vm3187, %v3154
      %3196 = vst.msk [vmem:[#allocation5 + $0x40] sm:$0xff] %vm3187, %v3156
      %3197 = vst.msk [vmem:[#allocation5 + $0x48] sm:$0xff] %vm3187, %v3158
      %3198 = vst.msk [vmem:[#allocation5 + $0x50] sm:$0xff] %vm3187, %v3160
      %3199 = vst.msk [vmem:[#allocation5 + $0x58] sm:$0xff] %vm3187, %v3162
      %3200 = vst.msk [vmem:[#allocation5 + $0x60] sm:$0xff] %vm3187, %v3164
      %3201 = vst.msk [vmem:[#allocation5 + $0x68] sm:$0xff] %vm3187, %v3166
      %3202 = vst.msk [vmem:[#allocation5 + $0x70] sm:$0xff] %vm3187, %v3168
      %3203 = vst.msk [vmem:[#allocation5 + $0x78] sm:$0xff] %vm3187, %v3170
      %v3204 = vld [vmem:[#allocation5] sm:$0xff]
      %v3205 = vld [vmem:[#allocation5 + $0x8] sm:$0xff]
      %v3206 = vld [vmem:[#allocation5 + $0x10] sm:$0xff]
      %v3207 = vld [vmem:[#allocation5 + $0x18] sm:$0xff]
      %v3208 = vld [vmem:[#allocation5 + $0x20] sm:$0xff]
      %v3209 = vld [vmem:[#allocation5 + $0x28] sm:$0xff]
      %v3210 = vld [vmem:[#allocation5 + $0x30] sm:$0xff]
      %v3211 = vld [vmem:[#allocation5 + $0x38] sm:$0xff]
      %v3212 = vld [vmem:[#allocation5 + $0x40] sm:$0xff]
      %v3213 = vld [vmem:[#allocation5 + $0x48] sm:$0xff]
      %v3214 = vld [vmem:[#allocation5 + $0x50] sm:$0xff]
      %v3215 = vld [vmem:[#allocation5 + $0x58] sm:$0xff]
      %v3216 = vld [vmem:[#allocation5 + $0x60] sm:$0xff]
      %v3217 = vld [vmem:[#allocation5 + $0x68] sm:$0xff]
      %v3218 = vld [vmem:[#allocation5 + $0x70] sm:$0xff]
      %v3219 = vld [vmem:[#allocation5 + $0x78] sm:$0xff]
      %v3220 = vld [vmem:[%s3] sm:$0xff]
      %v3221 = vld [vmem:[%s3 + $0x8] sm:$0xff]
      %v3222 = vld [vmem:[%s3 + $0x10] sm:$0xff]
      %v3223 = vld [vmem:[%s3 + $0x18] sm:$0xff]
      %v3224 = vld [vmem:[%s3 + $0x20] sm:$0xf]
      %v3225 = vld [vmem:[%s4] sm:$0x1]
      %v3227 = vperm.slane %v3225, 0
      %vm3229 = vcmask 293888
      %v3231 = vsel %vm3229, %v3204, 0
      %v3234 = vsel %vm3229, %v3205, 0
      %v3237 = vsel %vm3229, %v3206, 0
      %v3240 = vsel %vm3229, %v3207, 0
      %v3243 = vsel %vm3229, %v3208, 0
      %v3246 = vsel %vm3229, %v3209, 0
      %v3249 = vsel %vm3229, %v3210, 0
      %v3252 = vsel %vm3229, %v3211, 0
      %v3255 = vsel %vm3229, %v3212, 0
      %v3258 = vsel %vm3229, %v3213, 0
      %v3261 = vsel %vm3229, %v3214, 0
      %v3264 = vsel %vm3229, %v3215, 0
      %v3267 = vsel %vm3229, %v3216, 0
      %v3270 = vsel %vm3229, %v3217, 0
      %v3273 = vsel %vm3229, %v3218, 0
      %v3276 = vsel %vm3229, %v3219, 0
      %vm3278 = vcmask 1043456
      %v3280 = vsel %vm3278, %v3224, 0
      %3282 = vmatpush.msra.mxu0 0.0
      %3283 = vmatpush.msra.mxu0 0.0
      %3284 = vmatpush.msra.mxu0 0.0
      %3285 = vmatpush.msra.mxu0 0.0
      %3286 = vmatpush.msra.mxu0 0.0
      %3287 = vmatpush.msra.mxu0 0.0
      %3288 = vmatpush.msra.mxu0 0.0
      %3289 = vmatpush.msra.mxu0 0.0
      %3290 = vmatpush.msra.mxu0 0.0
      %3291 = vmatpush.msra.mxu0 0.0
      %3292 = vmatpush.msra.mxu0 0.0
      %3293 = vmatpush.msra.mxu0 %v3280
      %3294 = vmatpush.msra.mxu0 %v3223
      %3295 = vmatpush.msra.mxu0 %v3222
      %3296 = vmatpush.msra.mxu0 %v3221
      %3297 = vmatpush.msra.mxu0 %v3220
      %3298 = vmatmul.f32.gmra.mxu0 %v3231
      %v3299 = vpop.f32.mrf.mxu0
      %v3300 = vadd.f32 %v3227, %v3299
      %3301 = vmatmul.f32.gmra.mxu0 %v3234
      %v3302 = vpop.f32.mrf.mxu0
      %v3303 = vadd.f32 %v3227, %v3302
      %3304 = vmatmul.f32.gmra.mxu0 %v3237
      %v3305 = vpop.f32.mrf.mxu0
      %v3306 = vadd.f32 %v3227, %v3305
      %3307 = vmatmul.f32.gmra.mxu0 %v3240
      %v3308 = vpop.f32.mrf.mxu0
      %v3309 = vadd.f32 %v3227, %v3308
      %3310 = vmatmul.f32.gmra.mxu0 %v3243
      %v3311 = vpop.f32.mrf.mxu0
      %v3312 = vadd.f32 %v3227, %v3311
      %3313 = vmatmul.f32.gmra.mxu0 %v3246
      %v3314 = vpop.f32.mrf.mxu0
      %v3315 = vadd.f32 %v3227, %v3314
      %3316 = vmatmul.f32.gmra.mxu0 %v3249
      %v3317 = vpop.f32.mrf.mxu0
      %v3318 = vadd.f32 %v3227, %v3317
      %3319 = vmatmul.f32.gmra.mxu0 %v3252
      %v3320 = vpop.f32.mrf.mxu0
      %v3321 = vadd.f32 %v3227, %v3320
      %3322 = vmatmul.f32.gmra.mxu0 %v3255
      %v3323 = vpop.f32.mrf.mxu0
      %v3324 = vadd.f32 %v3227, %v3323
      %3325 = vmatmul.f32.gmra.mxu0 %v3258
      %v3326 = vpop.f32.mrf.mxu0
      %v3327 = vadd.f32 %v3227, %v3326
      %3328 = vmatmul.f32.gmra.mxu0 %v3261
      %v3329 = vpop.f32.mrf.mxu0
      %v3330 = vadd.f32 %v3227, %v3329
      %3331 = vmatmul.f32.gmra.mxu0 %v3264
      %v3332 = vpop.f32.mrf.mxu0
      %v3333 = vadd.f32 %v3227, %v3332
      %3334 = vmatmul.f32.gmra.mxu0 %v3267
      %v3335 = vpop.f32.mrf.mxu0
      %v3336 = vadd.f32 %v3227, %v3335
      %3337 = vmatmul.f32.gmra.mxu0 %v3270
      %v3338 = vpop.f32.mrf.mxu0
      %v3339 = vadd.f32 %v3227, %v3338
      %3340 = vmatmul.f32.gmra.mxu0 %v3273
      %v3341 = vpop.f32.mrf.mxu0
      %v3342 = vadd.f32 %v3227, %v3341
      %3343 = vmatmul.f32.gmra.mxu0 %v3276
      %v3344 = vpop.f32.mrf.mxu0
      %v3345 = vadd.f32 %v3227, %v3344
      %3346 = vdwg.mxu0
      %s3347 = smul.u32 %s278, 16
      %s3348 = scalar_lea.vmem %s266, %s3347
      %v3349 = vld [vmem:[%s3348] sm:$0xff]
      %v3350 = vld [vmem:[%s3348 + $0x8] sm:$0xff]
      %v3351 = vld [vmem:[%s3348 + $0x10] sm:$0xff]
      %v3352 = vld [vmem:[%s3348 + $0x18] sm:$0xff]
      %v3353 = vld [vmem:[%s3348 + $0x20] sm:$0xff]
      %v3354 = vld [vmem:[%s3348 + $0x28] sm:$0xff]
      %v3355 = vld [vmem:[%s3348 + $0x30] sm:$0xff]
      %v3356 = vld [vmem:[%s3348 + $0x38] sm:$0xff]
      %v3357 = vld [vmem:[%s3348 + $0x40] sm:$0xff]
      %v3358 = vld [vmem:[%s3348 + $0x48] sm:$0xff]
      %v3359 = vld [vmem:[%s3348 + $0x50] sm:$0xff]
      %v3360 = vld [vmem:[%s3348 + $0x58] sm:$0xff]
      %v3361 = vld [vmem:[%s3348 + $0x60] sm:$0xff]
      %v3362 = vld [vmem:[%s3348 + $0x68] sm:$0xff]
      %v3363 = vld [vmem:[%s3348 + $0x70] sm:$0xff]
      %v3364 = vld [vmem:[%s3348 + $0x78] sm:$0xff]
      %s3365 = sld [smem:[#allocation6]]
      %v3366 = vstv %s3365
      %v3367 = vmul.f32 %v3300, %v3366
      %v3368 = vmul.f32 %v3303, %v3366
      %v3369 = vmul.f32 %v3306, %v3366
      %v3370 = vmul.f32 %v3309, %v3366
      %v3371 = vmul.f32 %v3312, %v3366
      %v3372 = vmul.f32 %v3315, %v3366
      %v3373 = vmul.f32 %v3318, %v3366
      %v3374 = vmul.f32 %v3321, %v3366
      %v3375 = vmul.f32 %v3324, %v3366
      %v3376 = vmul.f32 %v3327, %v3366
      %v3377 = vmul.f32 %v3330, %v3366
      %v3378 = vmul.f32 %v3333, %v3366
      %v3379 = vmul.f32 %v3336, %v3366
      %v3380 = vmul.f32 %v3339, %v3366
      %v3381 = vmul.f32 %v3342, %v3366
      %v3382 = vmul.f32 %v3345, %v3366
      %v3383 = vadd.f32 %v3349, %v3367
      %v3384 = vadd.f32 %v3350, %v3368
      %v3385 = vadd.f32 %v3351, %v3369
      %v3386 = vadd.f32 %v3352, %v3370
      %v3387 = vadd.f32 %v3353, %v3371
      %v3388 = vadd.f32 %v3354, %v3372
      %v3389 = vadd.f32 %v3355, %v3373
      %v3390 = vadd.f32 %v3356, %v3374
      %v3391 = vadd.f32 %v3357, %v3375
      %v3392 = vadd.f32 %v3358, %v3376
      %v3393 = vadd.f32 %v3359, %v3377
      %v3394 = vadd.f32 %v3360, %v3378
      %v3395 = vadd.f32 %v3361, %v3379
      %v3396 = vadd.f32 %v3362, %v3380
      %v3397 = vadd.f32 %v3363, %v3381
      %v3398 = vadd.f32 %v3364, %v3382
      %3399 = vst.msk [vmem:[%s276] sm:$0xff] %vm2405, %v3383
      %3400 = vst.msk [vmem:[%s276 + $0x8] sm:$0xff] %vm2405, %v3384
      %3401 = vst.msk [vmem:[%s276 + $0x10] sm:$0xff] %vm2405, %v3385
      %3402 = vst.msk [vmem:[%s276 + $0x18] sm:$0xff] %vm2405, %v3386
      %3403 = vst.msk [vmem:[%s276 + $0x20] sm:$0xff] %vm2405, %v3387
      %3404 = vst.msk [vmem:[%s276 + $0x28] sm:$0xff] %vm2405, %v3388
      %3405 = vst.msk [vmem:[%s276 + $0x30] sm:$0xff] %vm2405, %v3389
      %3406 = vst.msk [vmem:[%s276 + $0x38] sm:$0xff] %vm2405, %v3390
      %3407 = vst.msk [vmem:[%s276 + $0x40] sm:$0xff] %vm2405, %v3391
      %3408 = vst.msk [vmem:[%s276 + $0x48] sm:$0xff] %vm2405, %v3392
      %3409 = vst.msk [vmem:[%s276 + $0x50] sm:$0xff] %vm2405, %v3393
      %3410 = vst.msk [vmem:[%s276 + $0x58] sm:$0xff] %vm2405, %v3394
      %3411 = vst.msk [vmem:[%s276 + $0x60] sm:$0xff] %vm2405, %v3395
      %3412 = vst.msk [vmem:[%s276 + $0x68] sm:$0xff] %vm2405, %v3396
      %3413 = vst.msk [vmem:[%s276 + $0x70] sm:$0xff] %vm2405, %v3397
      %3414 = vst.msk [vmem:[%s276 + $0x78] sm:$0xff] %vm2405, %v3398
      %s3415 = smul.u32 8, %s23
      %p3416 = scmp.lt.s32.totalorder %s22, 1
      %s3417 = scalar_select %p3416, %s22, 1
      %p3418 = scmp.lt.s32.totalorder %s3415, 15
      %s3419 = scalar_select %p3418, %s3415, 15
      %s3420 = smul.addr %s3419, 2
      %s3421 = smul.addr %s3417, 32
      %s3422 = sadd.s32 %s3420, %s3421
      %s3423 = smul.addr %s3422, 8
      %s3424 = scalar_lea.vmem %s6, %s3423
      // Predicated region
      $region49: #{tpu_custom_call.1} parent=43 // pred_check
        %p3425 = pneg %p181
      $region50: #{tpu_custom_call.1} parent=43 // pred_check_branch
        %3427 = sbr.rel (%p3425) target = $region52
      $region51: #{tpu_custom_call.1} parent=43 // pred_region
        %s3428 = smul.u32 8, %s23
      $region52: #{tpu_custom_call.1} parent=43 // pred_fallthru
        _
    $region44: #{tpu_custom_call.1} parent=5 // pred_fallthru
      _
    %p3429 = scmp.le.s32.totalorder 2, %s13
    // Predicated region
    $region53: #{tpu_custom_call.1} parent=5 // pred_check
      %p3430 = pneg %p3429
    $region54: #{tpu_custom_call.1} parent=5 // pred_check_branch
      %3432 = sbr.rel (%p3430) target = $region56
    $region55: #{tpu_custom_call.1} parent=5 // pred_region
      %s3433 = ssub.s32 %s13, 2
      // Predicated region
      $region57: #{tpu_custom_call.1} parent=55 // pred_check
        %p3434 = pneg %p187
      $region58: #{tpu_custom_call.1} parent=55 // pred_check_branch
        %3436 = sbr.rel (%p3434) target = $region60
      $region59: #{tpu_custom_call.1} parent=55 // pred_region
        %s3437 = smul.u32 8, %s25
        %p3438 = scmp.lt.s32.totalorder %s24, 1
        %s3439 = scalar_select %p3438, %s24, 1
        %p3440 = scmp.lt.s32.totalorder %s3437, 15
        %s3441 = scalar_select %p3440, %s3437, 15
        %s3442 = smul.addr %s3441, 2
        %s3443 = smul.addr %s3439, 32
        %s3444 = sadd.s32 %s3442, %s3443
        %s3445 = smul.addr %s3444, 8
        %s3446 = scalar_lea.vmem %s6, %s3445
      $region60: #{tpu_custom_call.1} parent=55 // pred_fallthru
        _
    $region56: #{tpu_custom_call.1} parent=5 // pred_fallthru
      _
  $region6: #{tpu_custom_call.1} parent=0 // loop_footer
    %s17 = sadd.s32 1, %s13
  $region7: #{tpu_custom_call.1} parent=0 // loop_footer_branch
    %12 = sbr.rel target = $region3
  $region8: #{tpu_custom_call.1} parent=0 // loop_exit
    _

</llo_original>
